<compile_context>
chip_gen: v7x
topology: tpu7x:2x2x1
jax: 0.10.0
libtpu: 0.0.40
codegen_flags: <defaults>
</compile_context>

<pallas_src>
from functools import partial

import numpy as np
import jax
import jax.numpy as jnp
from jax.experimental import pallas as pl
from jax.experimental.pallas import tpu as pltpu

# ---------------- configuration (mirrors module __init__ arguments) ----------
PHI_LAYERS = [1, 16, 1]          # IncreasingConcaveNet layer widths
LAMB = 0.5
M_LAYERS = 3                     # number of m / phi networks
U_LAYERS = [4, 16, 16]           # PartialInputConcaveNN u-path widths
Z_LAYERS = [1, 16, 16, 1]        # PartialInputConcaveNN z-path widths
B = 8                            # batch
N = 8                            # set size (second dim of y)
DTYPE = jnp.float32

P_LANES = 64                     # packed-parameter lane width (max real cols = 49)
M_HID = 10                       # per-m-net hidden width
M_HID_PAD = 32                   # fused hidden width (3*10=30) zero-padded to 32


def _softplus(x):
    # Numerically stable softplus; equals torch.nn.Softplus(beta=1, threshold=20)
    # within f32 rounding for all x.
    return jnp.log1p(jnp.exp(-jnp.abs(x))) + jnp.maximum(x, 0.0)


# ------------------------------------------------------------------ reference
def reference_forward(x, y, P):
    """Pure-JAX reference on the UNFUSED per-layer params (mirrors PyTorch)."""
    Bq, Nn = y.shape
    yb = y.reshape(Bq * Nn, 1)

    # ---- MonotoneSubmodularNet
    sums = []
    for (W1, b1, W2, b2, W3, b3) in P['m']:
        h = jnp.maximum(yb @ W1 + b1, 0.0)
        h = jnp.maximum(h @ W2 + b2, 0.0)
        h = _softplus(h @ W3 + b3)                       # (B*N, 1)
        sums.append(h.reshape(Bq, Nn).sum(axis=1, keepdims=True))
    ret = sums[0]
    for i in range(1, M_LAYERS):
        t = LAMB * sums[i] + (1.0 - LAMB) * ret
        Wp1, bp1, Wp2, bp2 = P['phi'][i - 1]
        t = jnp.minimum(t @ Wp1 + bp1, 0.0)
        ret = t @ Wp2 + bp2
    y_sub = ret                                          # (B, 1)

    # ---- PartialInputConcaveNN
    u, z = x, y_sub
    n_z = len(P['z'])
    for i, (W_z, W_y, W_zu, b_z, W_yu, b_y, W_u, b_u) in enumerate(P['z']):
        znew = (z * jnp.maximum(u @ W_zu + b_z, 0.0)) @ W_z
        znew = znew + (y_sub * (u @ W_yu + b_y)) @ W_y
        znew = znew + u @ W_u + b_u
        if i < n_z - 1:
            znew = jnp.minimum(znew, 0.0)
            Wu_, bu_ = P['u'][i]
            u = jnp.minimum(u @ Wu_ + bu_, 0.0)
        z = znew
    return z                                             # (B, Z_LAYERS[-1])


# ------------------------------------------------------------ parameter packing
class _Packer:
    """Packs all parameters into one dense (rows, P_LANES) f32 buffer.

    Multi-row tensors start on an 8-row (sublane-tile) boundary at lane 0.
    1-row tensors (biases / row-vectors) are packed densely, one per row,
    after the multi-row region.  offsets[name] = (row, rows, cols).
    """

    def __init__(self):
        self._multi = []
        self._single = []
        self.offsets = {}
        self._buf = None

    def add(self, name, arr):
        a = np.asarray(arr, dtype=np.float32)
        if a.ndim == 1:
            a = a.reshape(1, -1)
        assert a.ndim == 2 and a.shape[1] <= P_LANES, (name, a.shape)
        (self._single if a.shape[0] == 1 else self._multi).append((name, a))

    def buffer(self):
        if self._buf is not None:
            return self._buf
        row = 0
        for name, a in self._multi:
            row = ((row + 7) // 8) * 8           # 8-row alignment for 2D slabs
            self.offsets[name] = (row, a.shape[0], a.shape[1])
            row += a.shape[0]
        row = ((row + 7) // 8) * 8
        for name, a in self._single:             # dense: one row per 1-row tensor
            self.offsets[name] = (row, 1, a.shape[1])
            row += 1
        total = ((row + 7) // 8) * 8
        buf = np.zeros((total, P_LANES), np.float32)
        for name, a in self._multi + self._single:
            r, nr, nc = self.offsets[name]
            buf[r:r + nr, :nc] = a
        self._buf = jnp.asarray(buf)
        return self._buf


def pack_params(P):
    """Fuse params (3 m-nets -> 1; per-z-layer u-projections -> 1) and pack."""
    pk = _Packer()
    A = lambda a: np.asarray(a, np.float32)

    # ---- fused m-networks: concat layer 1, block-diag layer 2, block layer 3.
    # Hidden width zero-padded 30 -> 32; exact since relu(0*w + 0) = 0 flows
    # through the zero-padded rows/cols, and softplus only sees the 3 real lanes.
    W1s, b1s, W2s, b2s, W3s, b3s = (list(t) for t in zip(*P['m']))
    m_W1 = np.zeros((1, M_HID_PAD), np.float32)
    m_b1 = np.zeros((1, M_HID_PAD), np.float32)
    m_b2 = np.zeros((1, M_HID_PAD), np.float32)
    m_W2 = np.zeros((M_HID_PAD, M_HID_PAD), np.float32)
    m_W3 = np.zeros((M_HID_PAD, M_LAYERS), np.float32)
    m_b3 = np.zeros((1, M_LAYERS), np.float32)
    for i in range(M_LAYERS):
        s = i * M_HID
        m_W1[0, s:s + M_HID] = A(W1s[i])[0]
        m_b1[0, s:s + M_HID] = A(b1s[i])[0]
        m_b2[0, s:s + M_HID] = A(b2s[i])[0]
        m_W2[s:s + M_HID, s:s + M_HID] = A(W2s[i])
        m_W3[s:s + M_HID, i] = A(W3s[i])[:, 0]
        m_b3[0, i] = A(b3s[i])[0, 0]
    for name, a in (('m_W1', m_W1), ('m_b1', m_b1), ('m_W2', m_W2),
                    ('m_b2', m_b2), ('m_W3', m_W3), ('m_b3', m_b3)):
        pk.add(name, a)

    # ---- phi (IncreasingConcaveNet) nets 1..M_LAYERS-1 (phi[0] unused in fwd)
    for i, (Wp1, bp1, Wp2, bp2) in enumerate(P['phi'], start=1):
        pk.add(f'phi{i}_W1', A(Wp1))          # (1, 16)  K=1 row
        pk.add(f'phi{i}_b1', A(bp1))
        pk.add(f'phi{i}_W2r', A(Wp2).T)       # (1, 16)  N=1 row
        pk.add(f'phi{i}_b2', A(bp2))

    # ---- PICNN: per z-layer, ALL projections of u fused into one matrix:
    #      [W_zu | W_yu | W_u | u_W(i)]  (udim, idim + 1 + odim [+ u_out])
    n_z = len(Z_LAYERS) - 1
    for i, (W_z, W_y, W_zu, b_z, W_yu, b_y, W_u, b_u) in enumerate(P['z']):
        idim, odim = Z_LAYERS[i], Z_LAYERS[i + 1]
        parts = [A(W_zu), A(W_yu), A(W_u)]                 # (udim, idim/1/odim)
        if i < n_z - 1:
            parts.append(A(P['u'][i][0]))                  # u-path W (udim, u_out)
            pk.add(f'u{i}_b', A(P['u'][i][1]))
        pk.add(f'z{i}_uproj', np.concatenate(parts, axis=1))
        pk.add(f'z{i}_b_z', A(b_z))                        # (1, idim)
        pk.add(f'z{i}_b_y', A(b_y))                        # (1, 1)
        pk.add(f'z{i}_b_u', A(b_u))                        # (1, odim)
        pk.add(f'z{i}_Wy_r', A(W_y))                       # (1, odim)  ydim == 1
        if idim == 1:
            pk.add(f'z{i}_Wz_r', A(W_z))                   # (1, odim)  outer prod
        elif odim == 1:
            pk.add(f'z{i}_Wz_r', A(W_z).T)                 # (1, idim)  rowdot
        else:
            pk.add(f'z{i}_Wz', A(W_z))                     # (idim, odim)  MXU
    return pk


# ------------------------------------------------------------------- kernel
def _kernel(x_ref, yb_ref, p_ref, out_ref, *, offsets, tb, nn):
    def get(name):
        r, nr, nc = offsets[name]
        return p_ref[r:r + nr, 0:nc]             # static slice into packed buffer

    relu = lambda a: jnp.maximum(a, 0.0)
    neg = lambda a: jnp.minimum(a, 0.0)          # torch min(0, x) activation

    def rowdot(v, w_row):
        # (tb,k) x (1,k) -> (tb,1): VPU mul + lane reduce (no MXU round-trip)
        return jnp.sum(v * w_row, axis=-1, keepdims=True)

    def mm(a, b):
        return jnp.dot(a, b, preferred_element_type=jnp.float32)

    x = x_ref[...]                               # (tb, xdim)
    yb = yb_ref[...]                             # (tb*nn, 1)

    # ---------------- MonotoneSubmodularNet: 3 m-nets fused into one ----------
    h = relu(yb * get('m_W1') + get('m_b1'))             # (tb*nn, 32)  K=1 -> VPU
    h = relu(mm(h, get('m_W2')) + get('m_b2'))           # block-diag (32,32) MXU
    h = _softplus(mm(h, get('m_W3')) + get('m_b3'))      # (tb*nn, 3)
    # set-sum over the set dim: (tb*nn,3) -> (tb,nn,3) + sublane reduce.
    # Free (no relayout) when nn % 8 == 0; still correct otherwise.
    sums = h.reshape(tb, nn, M_LAYERS).sum(axis=1)       # (tb, 3)

    ret = sums[:, 0:1]
    for i in range(1, M_LAYERS):                         # IncreasingConcaveNet chain
        t = LAMB * sums[:, i:i + 1] + (1.0 - LAMB) * ret
        t = neg(t * get(f'phi{i}_W1') + get(f'phi{i}_b1'))         # K=1 -> VPU
        ret = rowdot(t, get(f'phi{i}_W2r')) + get(f'phi{i}_b2')    # (tb, 1)
    y_sub = ret                                          # sub(y)

    # -------- PartialInputConcaveNN: one fused u-projection matmul per layer --
    u = x
    z = y_sub
    n_z = len(Z_LAYERS) - 1
    for i in range(n_z):
        idim, odim = Z_LAYERS[i], Z_LAYERS[i + 1]
        last = (i == n_z - 1)
        uo = 0 if last else U_LAYERS[i + 1]
        proj = mm(u, get(f'z{i}_uproj'))                 # (tb, idim+1+odim+uo)
        zu = relu(proj[:, 0:idim] + get(f'z{i}_b_z'))             # W_zu term
        yu = proj[:, idim:idim + 1] + get(f'z{i}_b_y')            # W_yu term
        ut = proj[:, idim + 1:idim + 1 + odim] + get(f'z{i}_b_u')  # W_u term
        gate = z * zu
        if idim == 1:
            znew = gate * get(f'z{i}_Wz_r')              # (tb,1)x(1,odim) outer
        elif odim == 1:
            znew = rowdot(gate, get(f'z{i}_Wz_r'))       # (tb,1)
        else:
            znew = mm(gate, get(f'z{i}_Wz'))             # MXU
        znew = znew + (y_sub * yu) * get(f'z{i}_Wy_r') + ut
        if not last:
            znew = neg(znew)
            c0 = idim + 1 + odim
            u = neg(proj[:, c0:c0 + uo] + get(f'u{i}_b'))          # u-path update
        z = znew
    out_ref[...] = z


# ------------------------------------------------------------------- wrapper
def _parallel_grid_cores():
    """TensorCores a 'parallel' grid axis can shard across on this chip."""
    try:
        kind = jax.devices()[0].device_kind.lower()
    except Exception:
        return 1
    # v4 / v5p megacore and v7x dual-TC chips profit from 2 parallel grid steps;
    # v5e / v6e are single-TC.
    for tag in ("v4", "v5p", "v7", "7x"):
        if tag in kind:
            return 2
    return 1


def _pick_tb(Bq, Nn):
    """Generation-aware batch tile: one fat step on single-TC chips, two
    parallel steps on dual-TC chips; cap the per-step yb slab at ~2048 rows."""
    ncores = _parallel_grid_cores()
    cap = max(8, 2048 // max(Nn, 1))
    want = Bq // 2 if (ncores > 1 and Bq % 16 == 0) else Bq
    want = min(want, cap)
    if want >= Bq:
        return Bq                          # block == full array dims (always legal)
    tb = (want // 8) * 8                   # keep sublane dims tile-aligned
    while tb >= 8 and Bq % tb != 0:
        tb -= 8
    return tb if tb >= 8 else Bq


def pallas_forward(x, y, param_buf, offsets, *, single_buffer_params=True):
    Bq, xdim = x.shape
    _, Nn = y.shape
    yb = y.reshape(Bq * Nn, 1)        # row-major reshape: zero-copy bitcast in XLA

    TB = _pick_tb(Bq, Nn)
    assert Bq % TB == 0
    R, L = param_buf.shape

    kernel = partial(_kernel, offsets=offsets, tb=TB, nn=Nn)

    def build(single_buf):
        if single_buf:
            # constant index_map -> no need to double-buffer the param slab
            param_spec = pl.BlockSpec((R, L), lambda i: (0, 0),
                                      pipeline_mode=pl.Buffered(buffer_count=1))
        else:
            param_spec = pl.BlockSpec((R, L), lambda i: (0, 0))
        return pl.pallas_call(
            kernel,
            out_shape=jax.ShapeDtypeStruct((Bq, Z_LAYERS[-1]), DTYPE),
            grid=(Bq // TB,),
            in_specs=[
                pl.BlockSpec((TB, xdim), lambda i: (i, 0)),
                pl.BlockSpec((TB * Nn, 1), lambda i: (i, 0)),
                param_spec,                                   # one dense param DMA
            ],
            out_specs=pl.BlockSpec((TB, Z_LAYERS[-1]), lambda i: (i, 0)),
            compiler_params=pltpu.CompilerParams(
                dimension_semantics=("parallel",)),
        )

    try:
        return jax.block_until_ready(build(single_buffer_params)(x, yb, param_buf))
    except Exception:
        if not single_buffer_params:
            raise
        # Fallback if Buffered(1) is not supported by this JAX/Pallas version.
        return jax.block_until_ready(build(False)(x, yb, param_buf))


# ---------------------------------------------------------------------- init
def init_params(key):
    """Deterministic params matching the PyTorch module's shapes.

    Everything is stored in math orientation: weights (in, out), biases (1, out).
    """
    keys = iter(jax.random.split(key, 128))
    nk = lambda: next(keys)

    def linear(k, idim, odim):
        k1, k2 = jax.random.split(k)
        bound = 1.0 / np.sqrt(idim)
        W = jax.random.uniform(k1, (idim, odim), DTYPE, -bound, bound)
        b = jax.random.uniform(k2, (1, odim), DTYPE, -bound, bound)
        return W, b

    P = {'m': [], 'phi': [], 'u': [], 'z': []}

    # m networks: Linear(1,10) / Linear(10,10) / Linear(10,1)
    for _ in range(M_LAYERS):
        W1, b1 = linear(nk(), 1, 10)
        W2, b2 = linear(nk(), 10, 10)
        W3, b3 = linear(nk(), 10, 1)
        P['m'].append((W1, b1, W2, b2, W3, b3))

    # phi networks (phi[0] is constructed but never used by forward -> skipped)
    for _ in range(1, M_LAYERS):
        Wp1, bp1 = linear(nk(), PHI_LAYERS[0], PHI_LAYERS[1])
        Wp2, bp2 = linear(nk(), PHI_LAYERS[1], PHI_LAYERS[2])
        P['phi'].append((Wp1, bp1, Wp2, bp2))

    # PICNN u-path: Ws, bs ~ N(0, 1)
    for i in range(len(U_LAYERS) - 1):
        idim, odim = U_LAYERS[i], U_LAYERS[i + 1]
        W = jax.random.normal(nk(), (idim, odim), DTYPE)
        b = jax.random.normal(nk(), (1, odim), DTYPE)
        P['u'].append((W, b))

    # PICNN z-path layers
    def unif(k, shape, fan):
        bnd = 1.0 / np.sqrt(fan)
        return jax.random.uniform(k, shape, DTYPE, -bnd, bnd)

    ydim = Z_LAYERS[0]
    for i in range(len(Z_LAYERS) - 1):
        idim, odim = Z_LAYERS[i], Z_LAYERS[i + 1]
        udim = U_LAYERS[i]
        W_z = unif(nk(), (idim, odim), idim)
        W_y = unif(nk(), (ydim, odim), ydim)
        W_zu = unif(nk(), (udim, idim), udim)
        b_z = unif(nk(), (1, idim), idim)
        W_yu = unif(nk(), (udim, ydim), udim)
        b_y = unif(nk(), (1, ydim), ydim)
        W_u = unif(nk(), (udim, odim), udim)
        b_u = unif(nk(), (1, odim), odim)
        P['z'].append((W_z, W_y, W_zu, b_z, W_yu, b_y, W_u, b_u))
    return P


if __name__ == "__main__":
    key = jax.random.PRNGKey(0)
    kx, ky, kp = jax.random.split(key, 3)
    x = jax.random.normal(kx, (B, U_LAYERS[0]), DTYPE)
    y = jax.random.normal(ky, (B, N), DTYPE)

    P = init_params(kp)
    pack = pack_params(P)
    param_buf = pack.buffer()

    out = pallas_forward(x, y, param_buf, pack.offsets)
    out = jax.block_until_ready(out)

    # sanity check against a pure-JAX reference using the UNFUSED params
    # (also validates the m-net fusion, hidden padding, and u-projection fusion).
    ref = reference_forward(x, y, P)
    assert out.shape == (B, Z_LAYERS[-1]), out.shape
    err = float(np.max(np.abs(np.asarray(out) - np.asarray(ref))))
    assert np.allclose(np.asarray(out), np.asarray(ref), rtol=1e-4, atol=1e-4), err

    print("KERNEL_OK")
</pallas_src>

<mosaic_0001>
module attributes {stable_mosaic.version = 11 : i64} {
  func.func @_kernel(%arg0: i32, %arg1: memref<8x4xf32, #tpu.memory_space<vmem>>, %arg2: memref<64x1xf32, #tpu.memory_space<vmem>>, %arg3: memref<152x64xf32, #tpu.memory_space<vmem>>, %arg4: memref<8x1xf32, #tpu.memory_space<vmem>>) attributes {dimension_semantics = [#tpu.dimension_semantics<parallel>], iteration_bounds = array<i64: 1>, scalar_prefetch = 0 : i64, scratch_operands = 0 : i64, tpu.core_type = #tpu.core_type<tc>, window_params = [{transform_indices = @transform_0, window_bounds = array<i64: 8, 4>}, {transform_indices = @transform_1, window_bounds = array<i64: 64, 1>}, {pipeline_mode = #tpu.pipeline_mode<synchronous>, transform_indices = @transform_2, window_bounds = array<i64: 152, 64>}, {transform_indices = @transform_3, window_bounds = array<i64: 8, 1>}]} {
    %c0 = arith.constant 0 : index
    %c0_0 = arith.constant 0 : index
    %0 = vector.load %arg1[%c0, %c0_0] : memref<8x4xf32, #tpu.memory_space<vmem>>, vector<8x4xf32>
    %c0_1 = arith.constant 0 : index
    %c0_2 = arith.constant 0 : index
    %1 = vector.load %arg2[%c0_1, %c0_2] : memref<64x1xf32, #tpu.memory_space<vmem>>, vector<64x1xf32>
    %c120 = arith.constant 120 : index
    %c0_3 = arith.constant 0 : index
    %2 = vector.load %arg3[%c120, %c0_3] : memref<152x64xf32, #tpu.memory_space<vmem>>, vector<1x32xf32>
    %3 = vector.broadcast %1 : vector<64x1xf32> to vector<64x32xf32>
    %4 = vector.broadcast %2 : vector<1x32xf32> to vector<64x32xf32>
    %5 = arith.mulf %3, %4 : vector<64x32xf32>
    %c121 = arith.constant 121 : index
    %c0_4 = arith.constant 0 : index
    %6 = vector.load %arg3[%c121, %c0_4] : memref<152x64xf32, #tpu.memory_space<vmem>>, vector<1x32xf32>
    %7 = vector.broadcast %6 : vector<1x32xf32> to vector<64x32xf32>
    %8 = arith.addf %5, %7 : vector<64x32xf32>
    %cst = arith.constant 0.000000e+00 : f32
    %9 = vector.broadcast %cst : f32 to vector<64x32xf32>
    %10 = arith.maximumf %8, %9 : vector<64x32xf32>
    %c0_5 = arith.constant 0 : index
    %c0_6 = arith.constant 0 : index
    %11 = vector.load %arg3[%c0_5, %c0_6] : memref<152x64xf32, #tpu.memory_space<vmem>>, vector<32x32xf32>
    %cst_7 = arith.constant dense<0.000000e+00> : vector<64x32xf32>
    %12 = tpu.matmul %10, %11, %cst_7 {dimension_numbers = #tpu.dot_dimension_numbers<[1], [0], [0], [1], [0, 0, 1, 1], [], []>} : vector<64x32xf32>, vector<32x32xf32>, vector<64x32xf32> -> vector<64x32xf32>
    %c122 = arith.constant 122 : index
    %c0_8 = arith.constant 0 : index
    %13 = vector.load %arg3[%c122, %c0_8] : memref<152x64xf32, #tpu.memory_space<vmem>>, vector<1x32xf32>
    %14 = vector.broadcast %13 : vector<1x32xf32> to vector<64x32xf32>
    %15 = arith.addf %12, %14 : vector<64x32xf32>
    %cst_9 = arith.constant 0.000000e+00 : f32
    %16 = vector.broadcast %cst_9 : f32 to vector<64x32xf32>
    %17 = arith.maximumf %15, %16 : vector<64x32xf32>
    %c32 = arith.constant 32 : index
    %c0_10 = arith.constant 0 : index
    %18 = vector.load %arg3[%c32, %c0_10] : memref<152x64xf32, #tpu.memory_space<vmem>>, vector<32x3xf32>
    %cst_11 = arith.constant dense<0.000000e+00> : vector<64x3xf32>
    %19 = tpu.matmul %17, %18, %cst_11 {dimension_numbers = #tpu.dot_dimension_numbers<[1], [0], [0], [1], [0, 0, 1, 1], [], []>} : vector<64x32xf32>, vector<32x3xf32>, vector<64x3xf32> -> vector<64x3xf32>
    %c123 = arith.constant 123 : index
    %c0_12 = arith.constant 0 : index
    %20 = vector.load %arg3[%c123, %c0_12] : memref<152x64xf32, #tpu.memory_space<vmem>>, vector<1x3xf32>
    %21 = vector.broadcast %20 : vector<1x3xf32> to vector<64x3xf32>
    %22 = arith.addf %19, %21 : vector<64x3xf32>
    %23 = math.absf %22 : vector<64x3xf32>
    %cst_13 = arith.constant 0.000000e+00 : f32
    %24 = vector.broadcast %cst_13 : f32 to vector<64x3xf32>
    %25 = arith.subf %24, %23 : vector<64x3xf32>
    %26 = math.exp %25 : vector<64x3xf32>
    %27 = math.log1p %26 : vector<64x3xf32>
    %cst_14 = arith.constant 0.000000e+00 : f32
    %28 = vector.broadcast %cst_14 : f32 to vector<64x3xf32>
    %29 = arith.maximumf %22, %28 : vector<64x3xf32>
    %30 = arith.addf %27, %29 : vector<64x3xf32>
    %31 = vector.shape_cast %30 : vector<64x3xf32> to vector<8x8x3xf32>
    %cst_15 = arith.constant dense<0.000000e+00> : vector<8x3xf32>
    %32 = vector.multi_reduction <add>, %31, %cst_15 [1] : vector<8x8x3xf32> to vector<8x3xf32>
    %33 = vector.extract_strided_slice %32 {offsets = [0, 0], sizes = [8, 1], strides = [1, 1]} : vector<8x3xf32> to vector<8x1xf32>
    %34 = vector.extract_strided_slice %32 {offsets = [0, 1], sizes = [8, 1], strides = [1, 1]} : vector<8x3xf32> to vector<8x1xf32>
    %cst_16 = arith.constant 5.000000e-01 : f32
    %35 = vector.broadcast %cst_16 : f32 to vector<8x1xf32>
    %36 = arith.mulf %35, %34 : vector<8x1xf32>
    %cst_17 = arith.constant 5.000000e-01 : f32
    %37 = vector.broadcast %cst_17 : f32 to vector<8x1xf32>
    %38 = arith.mulf %37, %33 : vector<8x1xf32>
    %39 = arith.addf %36, %38 : vector<8x1xf32>
    %c124 = arith.constant 124 : index
    %c0_18 = arith.constant 0 : index
    %40 = vector.load %arg3[%c124, %c0_18] : memref<152x64xf32, #tpu.memory_space<vmem>>, vector<1x16xf32>
    %41 = vector.broadcast %39 : vector<8x1xf32> to vector<8x16xf32>
    %42 = vector.broadcast %40 : vector<1x16xf32> to vector<8x16xf32>
    %43 = arith.mulf %41, %42 : vector<8x16xf32>
    %c125 = arith.constant 125 : index
    %c0_19 = arith.constant 0 : index
    %44 = vector.load %arg3[%c125, %c0_19] : memref<152x64xf32, #tpu.memory_space<vmem>>, vector<1x16xf32>
    %45 = vector.broadcast %44 : vector<1x16xf32> to vector<8x16xf32>
    %46 = arith.addf %43, %45 : vector<8x16xf32>
    %cst_20 = arith.constant 0.000000e+00 : f32
    %47 = vector.broadcast %cst_20 : f32 to vector<8x16xf32>
    %48 = arith.minimumf %46, %47 : vector<8x16xf32>
    %c126 = arith.constant 126 : index
    %c0_21 = arith.constant 0 : index
    %49 = vector.load %arg3[%c126, %c0_21] : memref<152x64xf32, #tpu.memory_space<vmem>>, vector<1x16xf32>
    %50 = vector.broadcast %49 : vector<1x16xf32> to vector<8x16xf32>
    %51 = arith.mulf %48, %50 : vector<8x16xf32>
    %cst_22 = arith.constant dense<0.000000e+00> : vector<8xf32>
    %52 = vector.multi_reduction <add>, %51, %cst_22 [1] : vector<8x16xf32> to vector<8xf32>
    %53 = vector.shape_cast %52 : vector<8xf32> to vector<8x1xf32>
    %c127 = arith.constant 127 : index
    %c0_23 = arith.constant 0 : index
    %54 = vector.load %arg3[%c127, %c0_23] : memref<152x64xf32, #tpu.memory_space<vmem>>, vector<1x1xf32>
    %55 = vector.broadcast %54 : vector<1x1xf32> to vector<8x1xf32>
    %56 = arith.addf %53, %55 : vector<8x1xf32>
    %57 = vector.extract_strided_slice %32 {offsets = [0, 2], sizes = [8, 1], strides = [1, 1]} : vector<8x3xf32> to vector<8x1xf32>
    %cst_24 = arith.constant 5.000000e-01 : f32
    %58 = vector.broadcast %cst_24 : f32 to vector<8x1xf32>
    %59 = arith.mulf %58, %57 : vector<8x1xf32>
    %cst_25 = arith.constant 5.000000e-01 : f32
    %60 = vector.broadcast %cst_25 : f32 to vector<8x1xf32>
    %61 = arith.mulf %60, %56 : vector<8x1xf32>
    %62 = arith.addf %59, %61 : vector<8x1xf32>
    %c128 = arith.constant 128 : index
    %c0_26 = arith.constant 0 : index
    %63 = vector.load %arg3[%c128, %c0_26] : memref<152x64xf32, #tpu.memory_space<vmem>>, vector<1x16xf32>
    %64 = vector.broadcast %62 : vector<8x1xf32> to vector<8x16xf32>
    %65 = vector.broadcast %63 : vector<1x16xf32> to vector<8x16xf32>
    %66 = arith.mulf %64, %65 : vector<8x16xf32>
    %c129 = arith.constant 129 : index
    %c0_27 = arith.constant 0 : index
    %67 = vector.load %arg3[%c129, %c0_27] : memref<152x64xf32, #tpu.memory_space<vmem>>, vector<1x16xf32>
    %68 = vector.broadcast %67 : vector<1x16xf32> to vector<8x16xf32>
    %69 = arith.addf %66, %68 : vector<8x16xf32>
    %cst_28 = arith.constant 0.000000e+00 : f32
    %70 = vector.broadcast %cst_28 : f32 to vector<8x16xf32>
    %71 = arith.minimumf %69, %70 : vector<8x16xf32>
    %c130 = arith.constant 130 : index
    %c0_29 = arith.constant 0 : index
    %72 = vector.load %arg3[%c130, %c0_29] : memref<152x64xf32, #tpu.memory_space<vmem>>, vector<1x16xf32>
    %73 = vector.broadcast %72 : vector<1x16xf32> to vector<8x16xf32>
    %74 = arith.mulf %71, %73 : vector<8x16xf32>
    %cst_30 = arith.constant dense<0.000000e+00> : vector<8xf32>
    %75 = vector.multi_reduction <add>, %74, %cst_30 [1] : vector<8x16xf32> to vector<8xf32>
    %76 = vector.shape_cast %75 : vector<8xf32> to vector<8x1xf32>
    %c131 = arith.constant 131 : index
    %c0_31 = arith.constant 0 : index
    %77 = vector.load %arg3[%c131, %c0_31] : memref<152x64xf32, #tpu.memory_space<vmem>>, vector<1x1xf32>
    %78 = vector.broadcast %77 : vector<1x1xf32> to vector<8x1xf32>
    %79 = arith.addf %76, %78 : vector<8x1xf32>
    %c64 = arith.constant 64 : index
    %c0_32 = arith.constant 0 : index
    %80 = vector.load %arg3[%c64, %c0_32] : memref<152x64xf32, #tpu.memory_space<vmem>>, vector<4x34xf32>
    %cst_33 = arith.constant dense<0.000000e+00> : vector<8x34xf32>
    %81 = tpu.matmul %0, %80, %cst_33 {dimension_numbers = #tpu.dot_dimension_numbers<[1], [0], [0], [1], [0, 0, 1, 1], [], []>} : vector<8x4xf32>, vector<4x34xf32>, vector<8x34xf32> -> vector<8x34xf32>
    %82 = vector.extract_strided_slice %81 {offsets = [0, 0], sizes = [8, 1], strides = [1, 1]} : vector<8x34xf32> to vector<8x1xf32>
    %c133 = arith.constant 133 : index
    %c0_34 = arith.constant 0 : index
    %83 = vector.load %arg3[%c133, %c0_34] : memref<152x64xf32, #tpu.memory_space<vmem>>, vector<1x1xf32>
    %84 = vector.broadcast %83 : vector<1x1xf32> to vector<8x1xf32>
    %85 = arith.addf %82, %84 : vector<8x1xf32>
    %cst_35 = arith.constant 0.000000e+00 : f32
    %86 = vector.broadcast %cst_35 : f32 to vector<8x1xf32>
    %87 = arith.maximumf %85, %86 : vector<8x1xf32>
    %88 = vector.extract_strided_slice %81 {offsets = [0, 1], sizes = [8, 1], strides = [1, 1]} : vector<8x34xf32> to vector<8x1xf32>
    %c134 = arith.constant 134 : index
    %c0_36 = arith.constant 0 : index
    %89 = vector.load %arg3[%c134, %c0_36] : memref<152x64xf32, #tpu.memory_space<vmem>>, vector<1x1xf32>
    %90 = vector.broadcast %89 : vector<1x1xf32> to vector<8x1xf32>
    %91 = arith.addf %88, %90 : vector<8x1xf32>
    %92 = vector.extract_strided_slice %81 {offsets = [0, 2], sizes = [8, 16], strides = [1, 1]} : vector<8x34xf32> to vector<8x16xf32>
    %c135 = arith.constant 135 : index
    %c0_37 = arith.constant 0 : index
    %93 = vector.load %arg3[%c135, %c0_37] : memref<152x64xf32, #tpu.memory_space<vmem>>, vector<1x16xf32>
    %94 = vector.broadcast %93 : vector<1x16xf32> to vector<8x16xf32>
    %95 = arith.addf %92, %94 : vector<8x16xf32>
    %96 = arith.mulf %79, %87 : vector<8x1xf32>
    %c137 = arith.constant 137 : index
    %c0_38 = arith.constant 0 : index
    %97 = vector.load %arg3[%c137, %c0_38] : memref<152x64xf32, #tpu.memory_space<vmem>>, vector<1x16xf32>
    %98 = vector.broadcast %96 : vector<8x1xf32> to vector<8x16xf32>
    %99 = vector.broadcast %97 : vector<1x16xf32> to vector<8x16xf32>
    %100 = arith.mulf %98, %99 : vector<8x16xf32>
    %101 = arith.mulf %79, %91 : vector<8x1xf32>
    %c136 = arith.constant 136 : index
    %c0_39 = arith.constant 0 : index
    %102 = vector.load %arg3[%c136, %c0_39] : memref<152x64xf32, #tpu.memory_space<vmem>>, vector<1x16xf32>
    %103 = vector.broadcast %101 : vector<8x1xf32> to vector<8x16xf32>
    %104 = vector.broadcast %102 : vector<1x16xf32> to vector<8x16xf32>
    %105 = arith.mulf %103, %104 : vector<8x16xf32>
    %106 = arith.addf %100, %105 : vector<8x16xf32>
    %107 = arith.addf %106, %95 : vector<8x16xf32>
    %cst_40 = arith.constant 0.000000e+00 : f32
    %108 = vector.broadcast %cst_40 : f32 to vector<8x16xf32>
    %109 = arith.minimumf %107, %108 : vector<8x16xf32>
    %110 = vector.extract_strided_slice %81 {offsets = [0, 18], sizes = [8, 16], strides = [1, 1]} : vector<8x34xf32> to vector<8x16xf32>
    %c132 = arith.constant 132 : index
    %c0_41 = arith.constant 0 : index
    %111 = vector.load %arg3[%c132, %c0_41] : memref<152x64xf32, #tpu.memory_space<vmem>>, vector<1x16xf32>
    %112 = vector.broadcast %111 : vector<1x16xf32> to vector<8x16xf32>
    %113 = arith.addf %110, %112 : vector<8x16xf32>
    %cst_42 = arith.constant 0.000000e+00 : f32
    %114 = vector.broadcast %cst_42 : f32 to vector<8x16xf32>
    %115 = arith.minimumf %113, %114 : vector<8x16xf32>
    %c72 = arith.constant 72 : index
    %c0_43 = arith.constant 0 : index
    %116 = vector.load %arg3[%c72, %c0_43] : memref<152x64xf32, #tpu.memory_space<vmem>>, vector<16x49xf32>
    %cst_44 = arith.constant dense<0.000000e+00> : vector<8x49xf32>
    %117 = tpu.matmul %115, %116, %cst_44 {dimension_numbers = #tpu.dot_dimension_numbers<[1], [0], [0], [1], [0, 0, 1, 1], [], []>} : vector<8x16xf32>, vector<16x49xf32>, vector<8x49xf32> -> vector<8x49xf32>
    %118 = vector.extract_strided_slice %117 {offsets = [0, 0], sizes = [8, 16], strides = [1, 1]} : vector<8x49xf32> to vector<8x16xf32>
    %c139 = arith.constant 139 : index
    %c0_45 = arith.constant 0 : index
    %119 = vector.load %arg3[%c139, %c0_45] : memref<152x64xf32, #tpu.memory_space<vmem>>, vector<1x16xf32>
    %120 = vector.broadcast %119 : vector<1x16xf32> to vector<8x16xf32>
    %121 = arith.addf %118, %120 : vector<8x16xf32>
    %cst_46 = arith.constant 0.000000e+00 : f32
    %122 = vector.broadcast %cst_46 : f32 to vector<8x16xf32>
    %123 = arith.maximumf %121, %122 : vector<8x16xf32>
    %124 = vector.extract_strided_slice %117 {offsets = [0, 16], sizes = [8, 1], strides = [1, 1]} : vector<8x49xf32> to vector<8x1xf32>
    %c140 = arith.constant 140 : index
    %c0_47 = arith.constant 0 : index
    %125 = vector.load %arg3[%c140, %c0_47] : memref<152x64xf32, #tpu.memory_space<vmem>>, vector<1x1xf32>
    %126 = vector.broadcast %125 : vector<1x1xf32> to vector<8x1xf32>
    %127 = arith.addf %124, %126 : vector<8x1xf32>
    %128 = vector.extract_strided_slice %117 {offsets = [0, 17], sizes = [8, 16], strides = [1, 1]} : vector<8x49xf32> to vector<8x16xf32>
    %c141 = arith.constant 141 : index
    %c0_48 = arith.constant 0 : index
    %129 = vector.load %arg3[%c141, %c0_48] : memref<152x64xf32, #tpu.memory_space<vmem>>, vector<1x16xf32>
    %130 = vector.broadcast %129 : vector<1x16xf32> to vector<8x16xf32>
    %131 = arith.addf %128, %130 : vector<8x16xf32>
    %132 = arith.mulf %109, %123 : vector<8x16xf32>
    %c88 = arith.constant 88 : index
    %c0_49 = arith.constant 0 : index
    %133 = vector.load %arg3[%c88, %c0_49] : memref<152x64xf32, #tpu.memory_space<vmem>>, vector<16x16xf32>
    %cst_50 = arith.constant dense<0.000000e+00> : vector<8x16xf32>
    %134 = tpu.matmul %132, %133, %cst_50 {dimension_numbers = #tpu.dot_dimension_numbers<[1], [0], [0], [1], [0, 0, 1, 1], [], []>} : vector<8x16xf32>, vector<16x16xf32>, vector<8x16xf32> -> vector<8x16xf32>
    %135 = arith.mulf %79, %127 : vector<8x1xf32>
    %c142 = arith.constant 142 : index
    %c0_51 = arith.constant 0 : index
    %136 = vector.load %arg3[%c142, %c0_51] : memref<152x64xf32, #tpu.memory_space<vmem>>, vector<1x16xf32>
    %137 = vector.broadcast %135 : vector<8x1xf32> to vector<8x16xf32>
    %138 = vector.broadcast %136 : vector<1x16xf32> to vector<8x16xf32>
    %139 = arith.mulf %137, %138 : vector<8x16xf32>
    %140 = arith.addf %134, %139 : vector<8x16xf32>
    %141 = arith.addf %140, %131 : vector<8x16xf32>
    %cst_52 = arith.constant 0.000000e+00 : f32
    %142 = vector.broadcast %cst_52 : f32 to vector<8x16xf32>
    %143 = arith.minimumf %141, %142 : vector<8x16xf32>
    %144 = vector.extract_strided_slice %117 {offsets = [0, 33], sizes = [8, 16], strides = [1, 1]} : vector<8x49xf32> to vector<8x16xf32>
    %c138 = arith.constant 138 : index
    %c0_53 = arith.constant 0 : index
    %145 = vector.load %arg3[%c138, %c0_53] : memref<152x64xf32, #tpu.memory_space<vmem>>, vector<1x16xf32>
    %146 = vector.broadcast %145 : vector<1x16xf32> to vector<8x16xf32>
    %147 = arith.addf %144, %146 : vector<8x16xf32>
    %cst_54 = arith.constant 0.000000e+00 : f32
    %148 = vector.broadcast %cst_54 : f32 to vector<8x16xf32>
    %149 = arith.minimumf %147, %148 : vector<8x16xf32>
    %c104 = arith.constant 104 : index
    %c0_55 = arith.constant 0 : index
    %150 = vector.load %arg3[%c104, %c0_55] : memref<152x64xf32, #tpu.memory_space<vmem>>, vector<16x18xf32>
    %cst_56 = arith.constant dense<0.000000e+00> : vector<8x18xf32>
    %151 = tpu.matmul %149, %150, %cst_56 {dimension_numbers = #tpu.dot_dimension_numbers<[1], [0], [0], [1], [0, 0, 1, 1], [], []>} : vector<8x16xf32>, vector<16x18xf32>, vector<8x18xf32> -> vector<8x18xf32>
    %152 = vector.extract_strided_slice %151 {offsets = [0, 0], sizes = [8, 16], strides = [1, 1]} : vector<8x18xf32> to vector<8x16xf32>
    %c143 = arith.constant 143 : index
    %c0_57 = arith.constant 0 : index
    %153 = vector.load %arg3[%c143, %c0_57] : memref<152x64xf32, #tpu.memory_space<vmem>>, vector<1x16xf32>
    %154 = vector.broadcast %153 : vector<1x16xf32> to vector<8x16xf32>
    %155 = arith.addf %152, %154 : vector<8x16xf32>
    %cst_58 = arith.constant 0.000000e+00 : f32
    %156 = vector.broadcast %cst_58 : f32 to vector<8x16xf32>
    %157 = arith.maximumf %155, %156 : vector<8x16xf32>
    %158 = vector.extract_strided_slice %151 {offsets = [0, 16], sizes = [8, 1], strides = [1, 1]} : vector<8x18xf32> to vector<8x1xf32>
    %c144 = arith.constant 144 : index
    %c0_59 = arith.constant 0 : index
    %159 = vector.load %arg3[%c144, %c0_59] : memref<152x64xf32, #tpu.memory_space<vmem>>, vector<1x1xf32>
    %160 = vector.broadcast %159 : vector<1x1xf32> to vector<8x1xf32>
    %161 = arith.addf %158, %160 : vector<8x1xf32>
    %162 = vector.extract_strided_slice %151 {offsets = [0, 17], sizes = [8, 1], strides = [1, 1]} : vector<8x18xf32> to vector<8x1xf32>
    %c145 = arith.constant 145 : index
    %c0_60 = arith.constant 0 : index
    %163 = vector.load %arg3[%c145, %c0_60] : memref<152x64xf32, #tpu.memory_space<vmem>>, vector<1x1xf32>
    %164 = vector.broadcast %163 : vector<1x1xf32> to vector<8x1xf32>
    %165 = arith.addf %162, %164 : vector<8x1xf32>
    %166 = arith.mulf %143, %157 : vector<8x16xf32>
    %c147 = arith.constant 147 : index
    %c0_61 = arith.constant 0 : index
    %167 = vector.load %arg3[%c147, %c0_61] : memref<152x64xf32, #tpu.memory_space<vmem>>, vector<1x16xf32>
    %168 = vector.broadcast %167 : vector<1x16xf32> to vector<8x16xf32>
    %169 = arith.mulf %166, %168 : vector<8x16xf32>
    %cst_62 = arith.constant dense<0.000000e+00> : vector<8xf32>
    %170 = vector.multi_reduction <add>, %169, %cst_62 [1] : vector<8x16xf32> to vector<8xf32>
    %171 = vector.shape_cast %170 : vector<8xf32> to vector<8x1xf32>
    %172 = arith.mulf %79, %161 : vector<8x1xf32>
    %c146 = arith.constant 146 : index
    %c0_63 = arith.constant 0 : index
    %173 = vector.load %arg3[%c146, %c0_63] : memref<152x64xf32, #tpu.memory_space<vmem>>, vector<1x1xf32>
    %174 = vector.broadcast %173 : vector<1x1xf32> to vector<8x1xf32>
    %175 = arith.mulf %172, %174 : vector<8x1xf32>
    %176 = arith.addf %171, %175 : vector<8x1xf32>
    %177 = arith.addf %176, %165 : vector<8x1xf32>
    %c0_64 = arith.constant 0 : index
    %c0_65 = arith.constant 0 : index
    %178 = vector.load %arg4[%c0_64, %c0_65] : memref<8x1xf32, #tpu.memory_space<vmem>>, vector<8x1xf32>
    tpu.vector_store %arg4[%c0_64, %c0_65], %177 {strides = array<i32>} : memref<8x1xf32, #tpu.memory_space<vmem>>, vector<8x1xf32>,
    return
  }
  func.func @transform_0(%arg0: i32) -> (i32, i32) {
    %c0_i32 = arith.constant 0 : i32
    %c0_i32_0 = arith.constant 0 : i32
    return %arg0, %c0_i32 : i32, i32
  }
  func.func @transform_1(%arg0: i32) -> (i32, i32) {
    %c0_i32 = arith.constant 0 : i32
    %c0_i32_0 = arith.constant 0 : i32
    return %arg0, %c0_i32 : i32, i32
  }
  func.func @transform_2(%arg0: i32) -> (i32, i32) {
    %c0_i32 = arith.constant 0 : i32
    %c0_i32_0 = arith.constant 0 : i32
    %c0_i32_1 = arith.constant 0 : i32
    return %c0_i32, %c0_i32_0 : i32, i32
  }
  func.func @transform_3(%arg0: i32) -> (i32, i32) {
    %c0_i32 = arith.constant 0 : i32
    %c0_i32_0 = arith.constant 0 : i32
    return %arg0, %c0_i32 : i32, i32
  }
}

module attributes {stable_mosaic.version = 11 : i64} {
  func.func @_kernel(%arg0: i32, %arg1: memref<8x4xf32, #tpu.memory_space<vmem>>, %arg2: memref<64x1xf32, #tpu.memory_space<vmem>>, %arg3: memref<152x64xf32, #tpu.memory_space<vmem>>, %arg4: memref<8x1xf32, #tpu.memory_space<vmem>>) attributes {dimension_semantics = [#tpu.dimension_semantics<parallel>], iteration_bounds = array<i64: 1>, scalar_prefetch = 0 : i64, scratch_operands = 0 : i64, tpu.core_type = #tpu.core_type<tc>, window_params = [{transform_indices = @transform_0, window_bounds = array<i64: 8, 4>}, {transform_indices = @transform_1, window_bounds = array<i64: 64, 1>}, {pipeline_mode = #tpu.pipeline_mode<synchronous>, transform_indices = @transform_2, window_bounds = array<i64: 152, 64>}, {transform_indices = @transform_3, window_bounds = array<i64: 8, 1>}]} {
    %c0 = arith.constant 0 : index
    %c0_0 = arith.constant 0 : index
    %0 = vector.load %arg1[%c0, %c0_0] : memref<8x4xf32, #tpu.memory_space<vmem>>, vector<8x4xf32>
    %c0_1 = arith.constant 0 : index
    %c0_2 = arith.constant 0 : index
    %1 = vector.load %arg2[%c0_1, %c0_2] : memref<64x1xf32, #tpu.memory_space<vmem>>, vector<64x1xf32>
    %c120 = arith.constant 120 : index
    %c0_3 = arith.constant 0 : index
    %2 = vector.load %arg3[%c120, %c0_3] : memref<152x64xf32, #tpu.memory_space<vmem>>, vector<1x32xf32>
    %3 = vector.broadcast %1 : vector<64x1xf32> to vector<64x32xf32>
    %4 = vector.broadcast %2 : vector<1x32xf32> to vector<64x32xf32>
    %5 = arith.mulf %3, %4 : vector<64x32xf32>
    %c121 = arith.constant 121 : index
    %c0_4 = arith.constant 0 : index
    %6 = vector.load %arg3[%c121, %c0_4] : memref<152x64xf32, #tpu.memory_space<vmem>>, vector<1x32xf32>
    %7 = vector.broadcast %6 : vector<1x32xf32> to vector<64x32xf32>
    %8 = arith.addf %5, %7 : vector<64x32xf32>
    %cst = arith.constant 0.000000e+00 : f32
    %9 = vector.broadcast %cst : f32 to vector<64x32xf32>
    %10 = arith.maximumf %8, %9 : vector<64x32xf32>
    %c0_5 = arith.constant 0 : index
    %c0_6 = arith.constant 0 : index
    %11 = vector.load %arg3[%c0_5, %c0_6] : memref<152x64xf32, #tpu.memory_space<vmem>>, vector<32x32xf32>
    %cst_7 = arith.constant dense<0.000000e+00> : vector<64x32xf32>
    %12 = tpu.matmul %10, %11, %cst_7 {dimension_numbers = #tpu.dot_dimension_numbers<[1], [0], [0], [1], [0, 0, 1, 1], [], []>} : vector<64x32xf32>, vector<32x32xf32>, vector<64x32xf32> -> vector<64x32xf32>
    %c122 = arith.constant 122 : index
    %c0_8 = arith.constant 0 : index
    %13 = vector.load %arg3[%c122, %c0_8] : memref<152x64xf32, #tpu.memory_space<vmem>>, vector<1x32xf32>
    %14 = vector.broadcast %13 : vector<1x32xf32> to vector<64x32xf32>
    %15 = arith.addf %12, %14 : vector<64x32xf32>
    %cst_9 = arith.constant 0.000000e+00 : f32
    %16 = vector.broadcast %cst_9 : f32 to vector<64x32xf32>
    %17 = arith.maximumf %15, %16 : vector<64x32xf32>
    %c32 = arith.constant 32 : index
    %c0_10 = arith.constant 0 : index
    %18 = vector.load %arg3[%c32, %c0_10] : memref<152x64xf32, #tpu.memory_space<vmem>>, vector<32x3xf32>
    %cst_11 = arith.constant dense<0.000000e+00> : vector<64x3xf32>
    %19 = tpu.matmul %17, %18, %cst_11 {dimension_numbers = #tpu.dot_dimension_numbers<[1], [0], [0], [1], [0, 0, 1, 1], [], []>} : vector<64x32xf32>, vector<32x3xf32>, vector<64x3xf32> -> vector<64x3xf32>
    %c123 = arith.constant 123 : index
    %c0_12 = arith.constant 0 : index
    %20 = vector.load %arg3[%c123, %c0_12] : memref<152x64xf32, #tpu.memory_space<vmem>>, vector<1x3xf32>
    %21 = vector.broadcast %20 : vector<1x3xf32> to vector<64x3xf32>
    %22 = arith.addf %19, %21 : vector<64x3xf32>
    %23 = math.absf %22 : vector<64x3xf32>
    %cst_13 = arith.constant 0.000000e+00 : f32
    %24 = vector.broadcast %cst_13 : f32 to vector<64x3xf32>
    %25 = arith.subf %24, %23 : vector<64x3xf32>
    %26 = math.exp %25 : vector<64x3xf32>
    %27 = math.log1p %26 : vector<64x3xf32>
    %cst_14 = arith.constant 0.000000e+00 : f32
    %28 = vector.broadcast %cst_14 : f32 to vector<64x3xf32>
    %29 = arith.maximumf %22, %28 : vector<64x3xf32>
    %30 = arith.addf %27, %29 : vector<64x3xf32>
    %31 = vector.shape_cast %30 : vector<64x3xf32> to vector<8x8x3xf32>
    %cst_15 = arith.constant dense<0.000000e+00> : vector<8x3xf32>
    %32 = vector.multi_reduction <add>, %31, %cst_15 [1] : vector<8x8x3xf32> to vector<8x3xf32>
    %33 = vector.extract_strided_slice %32 {offsets = [0, 0], sizes = [8, 1], strides = [1, 1]} : vector<8x3xf32> to vector<8x1xf32>
    %34 = vector.extract_strided_slice %32 {offsets = [0, 1], sizes = [8, 1], strides = [1, 1]} : vector<8x3xf32> to vector<8x1xf32>
    %cst_16 = arith.constant 5.000000e-01 : f32
    %35 = vector.broadcast %cst_16 : f32 to vector<8x1xf32>
    %36 = arith.mulf %35, %34 : vector<8x1xf32>
    %cst_17 = arith.constant 5.000000e-01 : f32
    %37 = vector.broadcast %cst_17 : f32 to vector<8x1xf32>
    %38 = arith.mulf %37, %33 : vector<8x1xf32>
    %39 = arith.addf %36, %38 : vector<8x1xf32>
    %c124 = arith.constant 124 : index
    %c0_18 = arith.constant 0 : index
    %40 = vector.load %arg3[%c124, %c0_18] : memref<152x64xf32, #tpu.memory_space<vmem>>, vector<1x16xf32>
    %41 = vector.broadcast %39 : vector<8x1xf32> to vector<8x16xf32>
    %42 = vector.broadcast %40 : vector<1x16xf32> to vector<8x16xf32>
    %43 = arith.mulf %41, %42 : vector<8x16xf32>
    %c125 = arith.constant 125 : index
    %c0_19 = arith.constant 0 : index
    %44 = vector.load %arg3[%c125, %c0_19] : memref<152x64xf32, #tpu.memory_space<vmem>>, vector<1x16xf32>
    %45 = vector.broadcast %44 : vector<1x16xf32> to vector<8x16xf32>
    %46 = arith.addf %43, %45 : vector<8x16xf32>
    %cst_20 = arith.constant 0.000000e+00 : f32
    %47 = vector.broadcast %cst_20 : f32 to vector<8x16xf32>
    %48 = arith.minimumf %46, %47 : vector<8x16xf32>
    %c126 = arith.constant 126 : index
    %c0_21 = arith.constant 0 : index
    %49 = vector.load %arg3[%c126, %c0_21] : memref<152x64xf32, #tpu.memory_space<vmem>>, vector<1x16xf32>
    %50 = vector.broadcast %49 : vector<1x16xf32> to vector<8x16xf32>
    %51 = arith.mulf %48, %50 : vector<8x16xf32>
    %cst_22 = arith.constant dense<0.000000e+00> : vector<8xf32>
    %52 = vector.multi_reduction <add>, %51, %cst_22 [1] : vector<8x16xf32> to vector<8xf32>
    %53 = vector.shape_cast %52 : vector<8xf32> to vector<8x1xf32>
    %c127 = arith.constant 127 : index
    %c0_23 = arith.constant 0 : index
    %54 = vector.load %arg3[%c127, %c0_23] : memref<152x64xf32, #tpu.memory_space<vmem>>, vector<1x1xf32>
    %55 = vector.broadcast %54 : vector<1x1xf32> to vector<8x1xf32>
    %56 = arith.addf %53, %55 : vector<8x1xf32>
    %57 = vector.extract_strided_slice %32 {offsets = [0, 2], sizes = [8, 1], strides = [1, 1]} : vector<8x3xf32> to vector<8x1xf32>
    %cst_24 = arith.constant 5.000000e-01 : f32
    %58 = vector.broadcast %cst_24 : f32 to vector<8x1xf32>
    %59 = arith.mulf %58, %57 : vector<8x1xf32>
    %cst_25 = arith.constant 5.000000e-01 : f32
    %60 = vector.broadcast %cst_25 : f32 to vector<8x1xf32>
    %61 = arith.mulf %60, %56 : vector<8x1xf32>
    %62 = arith.addf %59, %61 : vector<8x1xf32>
    %c128 = arith.constant 128 : index
    %c0_26 = arith.constant 0 : index
    %63 = vector.load %arg3[%c128, %c0_26] : memref<152x64xf32, #tpu.memory_space<vmem>>, vector<1x16xf32>
    %64 = vector.broadcast %62 : vector<8x1xf32> to vector<8x16xf32>
    %65 = vector.broadcast %63 : vector<1x16xf32> to vector<8x16xf32>
    %66 = arith.mulf %64, %65 : vector<8x16xf32>
    %c129 = arith.constant 129 : index
    %c0_27 = arith.constant 0 : index
    %67 = vector.load %arg3[%c129, %c0_27] : memref<152x64xf32, #tpu.memory_space<vmem>>, vector<1x16xf32>
    %68 = vector.broadcast %67 : vector<1x16xf32> to vector<8x16xf32>
    %69 = arith.addf %66, %68 : vector<8x16xf32>
    %cst_28 = arith.constant 0.000000e+00 : f32
    %70 = vector.broadcast %cst_28 : f32 to vector<8x16xf32>
    %71 = arith.minimumf %69, %70 : vector<8x16xf32>
    %c130 = arith.constant 130 : index
    %c0_29 = arith.constant 0 : index
    %72 = vector.load %arg3[%c130, %c0_29] : memref<152x64xf32, #tpu.memory_space<vmem>>, vector<1x16xf32>
    %73 = vector.broadcast %72 : vector<1x16xf32> to vector<8x16xf32>
    %74 = arith.mulf %71, %73 : vector<8x16xf32>
    %cst_30 = arith.constant dense<0.000000e+00> : vector<8xf32>
    %75 = vector.multi_reduction <add>, %74, %cst_30 [1] : vector<8x16xf32> to vector<8xf32>
    %76 = vector.shape_cast %75 : vector<8xf32> to vector<8x1xf32>
    %c131 = arith.constant 131 : index
    %c0_31 = arith.constant 0 : index
    %77 = vector.load %arg3[%c131, %c0_31] : memref<152x64xf32, #tpu.memory_space<vmem>>, vector<1x1xf32>
    %78 = vector.broadcast %77 : vector<1x1xf32> to vector<8x1xf32>
    %79 = arith.addf %76, %78 : vector<8x1xf32>
    %c64 = arith.constant 64 : index
    %c0_32 = arith.constant 0 : index
    %80 = vector.load %arg3[%c64, %c0_32] : memref<152x64xf32, #tpu.memory_space<vmem>>, vector<4x34xf32>
    %cst_33 = arith.constant dense<0.000000e+00> : vector<8x34xf32>
    %81 = tpu.matmul %0, %80, %cst_33 {dimension_numbers = #tpu.dot_dimension_numbers<[1], [0], [0], [1], [0, 0, 1, 1], [], []>} : vector<8x4xf32>, vector<4x34xf32>, vector<8x34xf32> -> vector<8x34xf32>
    %82 = vector.extract_strided_slice %81 {offsets = [0, 0], sizes = [8, 1], strides = [1, 1]} : vector<8x34xf32> to vector<8x1xf32>
    %c133 = arith.constant 133 : index
    %c0_34 = arith.constant 0 : index
    %83 = vector.load %arg3[%c133, %c0_34] : memref<152x64xf32, #tpu.memory_space<vmem>>, vector<1x1xf32>
    %84 = vector.broadcast %83 : vector<1x1xf32> to vector<8x1xf32>
    %85 = arith.addf %82, %84 : vector<8x1xf32>
    %cst_35 = arith.constant 0.000000e+00 : f32
    %86 = vector.broadcast %cst_35 : f32 to vector<8x1xf32>
    %87 = arith.maximumf %85, %86 : vector<8x1xf32>
    %88 = vector.extract_strided_slice %81 {offsets = [0, 1], sizes = [8, 1], strides = [1, 1]} : vector<8x34xf32> to vector<8x1xf32>
    %c134 = arith.constant 134 : index
    %c0_36 = arith.constant 0 : index
    %89 = vector.load %arg3[%c134, %c0_36] : memref<152x64xf32, #tpu.memory_space<vmem>>, vector<1x1xf32>
    %90 = vector.broadcast %89 : vector<1x1xf32> to vector<8x1xf32>
    %91 = arith.addf %88, %90 : vector<8x1xf32>
    %92 = vector.extract_strided_slice %81 {offsets = [0, 2], sizes = [8, 16], strides = [1, 1]} : vector<8x34xf32> to vector<8x16xf32>
    %c135 = arith.constant 135 : index
    %c0_37 = arith.constant 0 : index
    %93 = vector.load %arg3[%c135, %c0_37] : memref<152x64xf32, #tpu.memory_space<vmem>>, vector<1x16xf32>
    %94 = vector.broadcast %93 : vector<1x16xf32> to vector<8x16xf32>
    %95 = arith.addf %92, %94 : vector<8x16xf32>
    %96 = arith.mulf %79, %87 : vector<8x1xf32>
    %c137 = arith.constant 137 : index
    %c0_38 = arith.constant 0 : index
    %97 = vector.load %arg3[%c137, %c0_38] : memref<152x64xf32, #tpu.memory_space<vmem>>, vector<1x16xf32>
    %98 = vector.broadcast %96 : vector<8x1xf32> to vector<8x16xf32>
    %99 = vector.broadcast %97 : vector<1x16xf32> to vector<8x16xf32>
    %100 = arith.mulf %98, %99 : vector<8x16xf32>
    %101 = arith.mulf %79, %91 : vector<8x1xf32>
    %c136 = arith.constant 136 : index
    %c0_39 = arith.constant 0 : index
    %102 = vector.load %arg3[%c136, %c0_39] : memref<152x64xf32, #tpu.memory_space<vmem>>, vector<1x16xf32>
    %103 = vector.broadcast %101 : vector<8x1xf32> to vector<8x16xf32>
    %104 = vector.broadcast %102 : vector<1x16xf32> to vector<8x16xf32>
    %105 = arith.mulf %103, %104 : vector<8x16xf32>
    %106 = arith.addf %100, %105 : vector<8x16xf32>
    %107 = arith.addf %106, %95 : vector<8x16xf32>
    %cst_40 = arith.constant 0.000000e+00 : f32
    %108 = vector.broadcast %cst_40 : f32 to vector<8x16xf32>
    %109 = arith.minimumf %107, %108 : vector<8x16xf32>
    %110 = vector.extract_strided_slice %81 {offsets = [0, 18], sizes = [8, 16], strides = [1, 1]} : vector<8x34xf32> to vector<8x16xf32>
    %c132 = arith.constant 132 : index
    %c0_41 = arith.constant 0 : index
    %111 = vector.load %arg3[%c132, %c0_41] : memref<152x64xf32, #tpu.memory_space<vmem>>, vector<1x16xf32>
    %112 = vector.broadcast %111 : vector<1x16xf32> to vector<8x16xf32>
    %113 = arith.addf %110, %112 : vector<8x16xf32>
    %cst_42 = arith.constant 0.000000e+00 : f32
    %114 = vector.broadcast %cst_42 : f32 to vector<8x16xf32>
    %115 = arith.minimumf %113, %114 : vector<8x16xf32>
    %c72 = arith.constant 72 : index
    %c0_43 = arith.constant 0 : index
    %116 = vector.load %arg3[%c72, %c0_43] : memref<152x64xf32, #tpu.memory_space<vmem>>, vector<16x49xf32>
    %cst_44 = arith.constant dense<0.000000e+00> : vector<8x49xf32>
    %117 = tpu.matmul %115, %116, %cst_44 {dimension_numbers = #tpu.dot_dimension_numbers<[1], [0], [0], [1], [0, 0, 1, 1], [], []>} : vector<8x16xf32>, vector<16x49xf32>, vector<8x49xf32> -> vector<8x49xf32>
    %118 = vector.extract_strided_slice %117 {offsets = [0, 0], sizes = [8, 16], strides = [1, 1]} : vector<8x49xf32> to vector<8x16xf32>
    %c139 = arith.constant 139 : index
    %c0_45 = arith.constant 0 : index
    %119 = vector.load %arg3[%c139, %c0_45] : memref<152x64xf32, #tpu.memory_space<vmem>>, vector<1x16xf32>
    %120 = vector.broadcast %119 : vector<1x16xf32> to vector<8x16xf32>
    %121 = arith.addf %118, %120 : vector<8x16xf32>
    %cst_46 = arith.constant 0.000000e+00 : f32
    %122 = vector.broadcast %cst_46 : f32 to vector<8x16xf32>
    %123 = arith.maximumf %121, %122 : vector<8x16xf32>
    %124 = vector.extract_strided_slice %117 {offsets = [0, 16], sizes = [8, 1], strides = [1, 1]} : vector<8x49xf32> to vector<8x1xf32>
    %c140 = arith.constant 140 : index
    %c0_47 = arith.constant 0 : index
    %125 = vector.load %arg3[%c140, %c0_47] : memref<152x64xf32, #tpu.memory_space<vmem>>, vector<1x1xf32>
    %126 = vector.broadcast %125 : vector<1x1xf32> to vector<8x1xf32>
    %127 = arith.addf %124, %126 : vector<8x1xf32>
    %128 = vector.extract_strided_slice %117 {offsets = [0, 17], sizes = [8, 16], strides = [1, 1]} : vector<8x49xf32> to vector<8x16xf32>
    %c141 = arith.constant 141 : index
    %c0_48 = arith.constant 0 : index
    %129 = vector.load %arg3[%c141, %c0_48] : memref<152x64xf32, #tpu.memory_space<vmem>>, vector<1x16xf32>
    %130 = vector.broadcast %129 : vector<1x16xf32> to vector<8x16xf32>
    %131 = arith.addf %128, %130 : vector<8x16xf32>
    %132 = arith.mulf %109, %123 : vector<8x16xf32>
    %c88 = arith.constant 88 : index
    %c0_49 = arith.constant 0 : index
    %133 = vector.load %arg3[%c88, %c0_49] : memref<152x64xf32, #tpu.memory_space<vmem>>, vector<16x16xf32>
    %cst_50 = arith.constant dense<0.000000e+00> : vector<8x16xf32>
    %134 = tpu.matmul %132, %133, %cst_50 {dimension_numbers = #tpu.dot_dimension_numbers<[1], [0], [0], [1], [0, 0, 1, 1], [], []>} : vector<8x16xf32>, vector<16x16xf32>, vector<8x16xf32> -> vector<8x16xf32>
    %135 = arith.mulf %79, %127 : vector<8x1xf32>
    %c142 = arith.constant 142 : index
    %c0_51 = arith.constant 0 : index
    %136 = vector.load %arg3[%c142, %c0_51] : memref<152x64xf32, #tpu.memory_space<vmem>>, vector<1x16xf32>
    %137 = vector.broadcast %135 : vector<8x1xf32> to vector<8x16xf32>
    %138 = vector.broadcast %136 : vector<1x16xf32> to vector<8x16xf32>
    %139 = arith.mulf %137, %138 : vector<8x16xf32>
    %140 = arith.addf %134, %139 : vector<8x16xf32>
    %141 = arith.addf %140, %131 : vector<8x16xf32>
    %cst_52 = arith.constant 0.000000e+00 : f32
    %142 = vector.broadcast %cst_52 : f32 to vector<8x16xf32>
    %143 = arith.minimumf %141, %142 : vector<8x16xf32>
    %144 = vector.extract_strided_slice %117 {offsets = [0, 33], sizes = [8, 16], strides = [1, 1]} : vector<8x49xf32> to vector<8x16xf32>
    %c138 = arith.constant 138 : index
    %c0_53 = arith.constant 0 : index
    %145 = vector.load %arg3[%c138, %c0_53] : memref<152x64xf32, #tpu.memory_space<vmem>>, vector<1x16xf32>
    %146 = vector.broadcast %145 : vector<1x16xf32> to vector<8x16xf32>
    %147 = arith.addf %144, %146 : vector<8x16xf32>
    %cst_54 = arith.constant 0.000000e+00 : f32
    %148 = vector.broadcast %cst_54 : f32 to vector<8x16xf32>
    %149 = arith.minimumf %147, %148 : vector<8x16xf32>
    %c104 = arith.constant 104 : index
    %c0_55 = arith.constant 0 : index
    %150 = vector.load %arg3[%c104, %c0_55] : memref<152x64xf32, #tpu.memory_space<vmem>>, vector<16x18xf32>
    %cst_56 = arith.constant dense<0.000000e+00> : vector<8x18xf32>
    %151 = tpu.matmul %149, %150, %cst_56 {dimension_numbers = #tpu.dot_dimension_numbers<[1], [0], [0], [1], [0, 0, 1, 1], [], []>} : vector<8x16xf32>, vector<16x18xf32>, vector<8x18xf32> -> vector<8x18xf32>
    %152 = vector.extract_strided_slice %151 {offsets = [0, 0], sizes = [8, 16], strides = [1, 1]} : vector<8x18xf32> to vector<8x16xf32>
    %c143 = arith.constant 143 : index
    %c0_57 = arith.constant 0 : index
    %153 = vector.load %arg3[%c143, %c0_57] : memref<152x64xf32, #tpu.memory_space<vmem>>, vector<1x16xf32>
    %154 = vector.broadcast %153 : vector<1x16xf32> to vector<8x16xf32>
    %155 = arith.addf %152, %154 : vector<8x16xf32>
    %cst_58 = arith.constant 0.000000e+00 : f32
    %156 = vector.broadcast %cst_58 : f32 to vector<8x16xf32>
    %157 = arith.maximumf %155, %156 : vector<8x16xf32>
    %158 = vector.extract_strided_slice %151 {offsets = [0, 16], sizes = [8, 1], strides = [1, 1]} : vector<8x18xf32> to vector<8x1xf32>
    %c144 = arith.constant 144 : index
    %c0_59 = arith.constant 0 : index
    %159 = vector.load %arg3[%c144, %c0_59] : memref<152x64xf32, #tpu.memory_space<vmem>>, vector<1x1xf32>
    %160 = vector.broadcast %159 : vector<1x1xf32> to vector<8x1xf32>
    %161 = arith.addf %158, %160 : vector<8x1xf32>
    %162 = vector.extract_strided_slice %151 {offsets = [0, 17], sizes = [8, 1], strides = [1, 1]} : vector<8x18xf32> to vector<8x1xf32>
    %c145 = arith.constant 145 : index
    %c0_60 = arith.constant 0 : index
    %163 = vector.load %arg3[%c145, %c0_60] : memref<152x64xf32, #tpu.memory_space<vmem>>, vector<1x1xf32>
    %164 = vector.broadcast %163 : vector<1x1xf32> to vector<8x1xf32>
    %165 = arith.addf %162, %164 : vector<8x1xf32>
    %166 = arith.mulf %143, %157 : vector<8x16xf32>
    %c147 = arith.constant 147 : index
    %c0_61 = arith.constant 0 : index
    %167 = vector.load %arg3[%c147, %c0_61] : memref<152x64xf32, #tpu.memory_space<vmem>>, vector<1x16xf32>
    %168 = vector.broadcast %167 : vector<1x16xf32> to vector<8x16xf32>
    %169 = arith.mulf %166, %168 : vector<8x16xf32>
    %cst_62 = arith.constant dense<0.000000e+00> : vector<8xf32>
    %170 = vector.multi_reduction <add>, %169, %cst_62 [1] : vector<8x16xf32> to vector<8xf32>
    %171 = vector.shape_cast %170 : vector<8xf32> to vector<8x1xf32>
    %172 = arith.mulf %79, %161 : vector<8x1xf32>
    %c146 = arith.constant 146 : index
    %c0_63 = arith.constant 0 : index
    %173 = vector.load %arg3[%c146, %c0_63] : memref<152x64xf32, #tpu.memory_space<vmem>>, vector<1x1xf32>
    %174 = vector.broadcast %173 : vector<1x1xf32> to vector<8x1xf32>
    %175 = arith.mulf %172, %174 : vector<8x1xf32>
    %176 = arith.addf %171, %175 : vector<8x1xf32>
    %177 = arith.addf %176, %165 : vector<8x1xf32>
    %c0_64 = arith.constant 0 : index
    %c0_65 = arith.constant 0 : index
    %178 = vector.load %arg4[%c0_64, %c0_65] : memref<8x1xf32, #tpu.memory_space<vmem>>, vector<8x1xf32>
    tpu.vector_store %arg4[%c0_64, %c0_65], %177 {strides = array<i32>} : memref<8x1xf32, #tpu.memory_space<vmem>>, vector<8x1xf32>,
    return
  }
  func.func @transform_0(%arg0: i32) -> (i32, i32) {
    %c0_i32 = arith.constant 0 : i32
    %c0_i32_0 = arith.constant 0 : i32
    return %arg0, %c0_i32 : i32, i32
  }
  func.func @transform_1(%arg0: i32) -> (i32, i32) {
    %c0_i32 = arith.constant 0 : i32
    %c0_i32_0 = arith.constant 0 : i32
    return %arg0, %c0_i32 : i32, i32
  }
  func.func @transform_2(%arg0: i32) -> (i32, i32) {
    %c0_i32 = arith.constant 0 : i32
    %c0_i32_0 = arith.constant 0 : i32
    %c0_i32_1 = arith.constant 0 : i32
    return %c0_i32, %c0_i32_0 : i32, i32
  }
  func.func @transform_3(%arg0: i32) -> (i32, i32) {
    %c0_i32 = arith.constant 0 : i32
    %c0_i32_0 = arith.constant 0 : i32
    return %arg0, %c0_i32 : i32, i32
  }
}

</mosaic_0001>

<llo_original>
// kernel: tpu_custom_call.1
$region0: #{tpu_custom_call.1}
  #allocation0 [shape = 'u32[]', space=smem, size = 0x4, offset = 0x4, fixed_abs, tag = 'smem constant byte address 0x4 - core index']
  #allocation1 [shape = 'u32[144,128]{1,0:T(1,128)}', space=vmem, size = 0x12000, scoped, tag = 'internal scratch']
  %s0 = inlined_call_operand.vmem [shape: f32[8,4], index: 0, kind: input, shape index: {}]
  %s1 = inlined_call_operand.vmem [shape: f32[64,1], index: 1, kind: input, shape index: {}]
  %s2 = inlined_call_operand.vmem [shape: f32[152,64], index: 2, kind: input, shape index: {}]
  %s3 = inlined_call_operand.vmem [shape: f32[8,1], index: 3, kind: output, shape index: {}]
  %s4 = sld [smem:[#allocation0]]
  $region22: #{tpu_custom_call.1} parent=0
    _
  %s6 = ssub.s32 1, %s4
  %s7 = scalar_select 0, %s6, %s4
  // Predicated region
  $region2: #{tpu_custom_call.1} parent=0 // pred_check
    _
  $region3: #{tpu_custom_call.1} parent=0 // pred_check_branch
    %9 = sbr.rel (0) target = $region5
  $region4: #{tpu_custom_call.1} parent=0 // pred_region
    _
  $region5: #{tpu_custom_call.1} parent=0 // pred_fallthru
    _
  // Predicated region
  $region6: #{tpu_custom_call.1} parent=0 // pred_check
    _
  $region7: #{tpu_custom_call.1} parent=0 // pred_check_branch
    %11 = sbr.rel (0) target = $region9
  $region8: #{tpu_custom_call.1} parent=0 // pred_region
    _
  $region9: #{tpu_custom_call.1} parent=0 // pred_fallthru
    _
  // Predicated region
  $region10: #{tpu_custom_call.1} parent=0 // pred_check
    _
  $region11: #{tpu_custom_call.1} parent=0 // pred_check_branch
    %13 = sbr.rel (0) target = $region13
  $region12: #{tpu_custom_call.1} parent=0 // pred_region
    _
  $region13: #{tpu_custom_call.1} parent=0 // pred_fallthru
    _
  %v14 = vld [vmem:[%s0] sm:$0xff]
  %v15 = vld [vmem:[%s1] sm:$0xff]
  %v16 = vld [vmem:[%s1 + $0x8] sm:$0xff]
  %v17 = vld [vmem:[%s1 + $0x10] sm:$0xff]
  %v18 = vld [vmem:[%s1 + $0x18] sm:$0xff]
  %v19 = vld [vmem:[%s1 + $0x20] sm:$0xff]
  %v20 = vld [vmem:[%s1 + $0x28] sm:$0xff]
  %v21 = vld [vmem:[%s1 + $0x30] sm:$0xff]
  %v22 = vld [vmem:[%s1 + $0x38] sm:$0xff]
  %v23 = vld [vmem:[%s2 + $0x78] sm:$0x1]
  %25 = vset.pattern.permute.xlu0 0
  %26 = vperm.xlu0 %25, %v15
  %v27 = vpop.permute.xlu0 %26
  %30 = vset.pattern.permute.xlu0 0
  %31 = vperm.xlu0 %30, %v16
  %v32 = vpop.permute.xlu0 %31
  %35 = vset.pattern.permute.xlu0 0
  %36 = vperm.xlu0 %35, %v17
  %v37 = vpop.permute.xlu0 %36
  %40 = vset.pattern.permute.xlu0 0
  %41 = vperm.xlu0 %40, %v18
  %v42 = vpop.permute.xlu0 %41
  %45 = vset.pattern.permute.xlu0 0
  %46 = vperm.xlu0 %45, %v19
  %v47 = vpop.permute.xlu0 %46
  %50 = vset.pattern.permute.xlu0 0
  %51 = vperm.xlu0 %50, %v20
  %v52 = vpop.permute.xlu0 %51
  %55 = vset.pattern.permute.xlu0 0
  %56 = vperm.xlu0 %55, %v21
  %v57 = vpop.permute.xlu0 %56
  %60 = vset.pattern.permute.xlu0 0
  %61 = vperm.xlu0 %60, %v22
  %v62 = vpop.permute.xlu0 %61
  %v64 = vlaneseq
  %v65 = vshrl.u32 %v64, 7
  %v66 = vsub.s32 0, %v65
  %v67 = vrot.slane %v23, %v66
  %v68 = vmul.f32 %v27, %v67
  %v69 = vmul.f32 %v32, %v67
  %v70 = vmul.f32 %v37, %v67
  %v71 = vmul.f32 %v42, %v67
  %v72 = vmul.f32 %v47, %v67
  %v73 = vmul.f32 %v52, %v67
  %v74 = vmul.f32 %v57, %v67
  %v75 = vmul.f32 %v62, %v67
  %v76 = vld [vmem:[%s2 + $0x79] sm:$0x1]
  %v77 = vlaneseq
  %v78 = vshrl.u32 %v77, 7
  %v79 = vsub.s32 0, %v78
  %v80 = vrot.slane %v76, %v79
  %v81 = vadd.f32 %v68, %v80
  %v82 = vadd.f32 %v69, %v80
  %v83 = vadd.f32 %v70, %v80
  %v84 = vadd.f32 %v71, %v80
  %v85 = vadd.f32 %v72, %v80
  %v86 = vadd.f32 %v73, %v80
  %v87 = vadd.f32 %v74, %v80
  %v88 = vadd.f32 %v75, %v80
  %v89 = vmax.f32 %v81, 0.0
  %v90 = vmax.f32 %v82, 0.0
  %v91 = vmax.f32 %v83, 0.0
  %v92 = vmax.f32 %v84, 0.0
  %v93 = vmax.f32 %v85, 0.0
  %v94 = vmax.f32 %v86, 0.0
  %v95 = vmax.f32 %v87, 0.0
  %v96 = vmax.f32 %v88, 0.0
  %v97 = vld [vmem:[%s2] sm:$0xff]
  %v98 = vld [vmem:[%s2 + $0x8] sm:$0xff]
  %v99 = vld [vmem:[%s2 + $0x10] sm:$0xff]
  %v100 = vld [vmem:[%s2 + $0x18] sm:$0xff]
  %v101 = vld [vmem:[%s2 + $0x7a] sm:$0x1]
  %v102 = vlaneseq
  %v103 = vshrl.u32 %v102, 7
  %v104 = vsub.s32 0, %v103
  %v105 = vrot.slane %v101, %v104
  %vm106 = vcmask 261120
  %v108 = vsel %vm106, %v89, 0
  %v111 = vsel %vm106, %v90, 0
  %v114 = vsel %vm106, %v91, 0
  %v117 = vsel %vm106, %v92, 0
  %v120 = vsel %vm106, %v93, 0
  %v123 = vsel %vm106, %v94, 0
  %v126 = vsel %vm106, %v95, 0
  %v129 = vsel %vm106, %v96, 0
  %131 = vmatprep.subr.mxu0 0.0
  %132 = vmatpush1.msra.mxu0 %v97
  %133 = vmatprep.subr.mxu0 0.0
  %134 = vmatpush1.msra.mxu0 %v98
  %135 = vmatprep.subr.mxu0 0.0
  %136 = vmatpush1.msra.mxu0 %v99
  %137 = vmatprep.subr.mxu0 0.0
  %138 = vmatpush1.msra.mxu0 %v100
  %139 = vmatprep.subr.mxu0 0.0
  %140 = vmatpush1.msra.mxu0 0.0
  %141 = vmatprep.subr.mxu0 0.0
  %142 = vmatpush1.msra.mxu0 0.0
  %143 = vmatprep.subr.mxu0 0.0
  %144 = vmatpush1.msra.mxu0 0.0
  %145 = vmatprep.subr.mxu0 0.0
  %146 = vmatpush1.msra.mxu0 0.0
  %147 = vmatprep.subr.mxu0 0.0
  %148 = vmatpush1.msra.mxu0 0.0
  %149 = vmatprep.subr.mxu0 0.0
  %150 = vmatpush1.msra.mxu0 0.0
  %151 = vmatprep.subr.mxu0 0.0
  %152 = vmatpush1.msra.mxu0 0.0
  %153 = vmatprep.subr.mxu0 0.0
  %154 = vmatpush1.msra.mxu0 0.0
  %155 = vmatprep.subr.mxu0 0.0
  %156 = vmatpush1.msra.mxu0 0.0
  %157 = vmatprep.subr.mxu0 0.0
  %158 = vmatpush1.msra.mxu0 0.0
  %159 = vmatprep.subr.mxu0 0.0
  %160 = vmatpush1.msra.mxu0 0.0
  %161 = vmatprep.subr.mxu0 0.0
  %162 = vmatpush1.msra.mxu0 0.0
  %163 = vmatprep.subr.mxu0 0.0
  %164 = vmatpush1.msra.mxu0 0.0
  %165 = vmatprep.subr.mxu0 0.0
  %166 = vmatpush1.msra.mxu0 0.0
  %167 = vmatprep.subr.mxu0 0.0
  %168 = vmatpush1.msra.mxu0 0.0
  %169 = vmatprep.subr.mxu0 0.0
  %170 = vmatpush1.msra.mxu0 0.0
  %171 = vmatprep.subr.mxu0 0.0
  %172 = vmatpush1.msra.mxu0 0.0
  %173 = vmatprep.subr.mxu0 0.0
  %174 = vmatpush1.msra.mxu0 0.0
  %175 = vmatprep.subr.mxu0 0.0
  %176 = vmatpush1.msra.mxu0 0.0
  %177 = vmatprep.subr.mxu0 0.0
  %178 = vmatpush1.msra.mxu0 0.0
  %179 = vmatprep.subr.mxu0 0.0
  %180 = vmatpush1.msra.mxu0 0.0
  %181 = vmatprep.subr.mxu0 0.0
  %182 = vmatpush1.msra.mxu0 0.0
  %183 = vmatprep.subr.mxu0 0.0
  %184 = vmatpush1.msra.mxu0 0.0
  %185 = vmatprep.subr.mxu0 0.0
  %186 = vmatpush1.msra.mxu0 0.0
  %187 = vmatprep.subr.mxu0 0.0
  %188 = vmatpush1.msra.mxu0 0.0
  %189 = vmatprep.subr.mxu0 0.0
  %190 = vmatpush1.msra.mxu0 0.0
  %191 = vmatprep.subr.mxu0 0.0
  %192 = vmatpush1.msra.mxu0 0.0
  %193 = vmatprep.subr.mxu0 0.0
  %194 = vmatpush1.msra.mxu0 0.0
  %195 = vmatprep.mubr.f32.mxu0 0.0
  %196 = vmatmul.mubr.f32.gmra.mrb[0].mxu0 %v108
  %v197 = vpop.f32.mrb[0].mxu0
  %v198 = vadd.f32 %v105, %v197
  %v199 = vpop.f32.mrb[0].mxu0
  %200 = vmatprep.mubr.f32.mxu0 0.0
  %201 = vmatmul.mubr.f32.gmra.mrb[0].mxu0 %v111
  %v202 = vpop.f32.mrb[0].mxu0
  %v203 = vadd.f32 %v105, %v202
  %v204 = vpop.f32.mrb[0].mxu0
  %205 = vmatprep.mubr.f32.mxu0 0.0
  %206 = vmatmul.mubr.f32.gmra.mrb[0].mxu0 %v114
  %v207 = vpop.f32.mrb[0].mxu0
  %v208 = vadd.f32 %v105, %v207
  %v209 = vpop.f32.mrb[0].mxu0
  %210 = vmatprep.mubr.f32.mxu0 0.0
  %211 = vmatmul.mubr.f32.gmra.mrb[0].mxu0 %v117
  %v212 = vpop.f32.mrb[0].mxu0
  %v213 = vadd.f32 %v105, %v212
  %v214 = vpop.f32.mrb[0].mxu0
  %215 = vmatprep.mubr.f32.mxu0 0.0
  %216 = vmatmul.mubr.f32.gmra.mrb[0].mxu0 %v120
  %v217 = vpop.f32.mrb[0].mxu0
  %v218 = vadd.f32 %v105, %v217
  %v219 = vpop.f32.mrb[0].mxu0
  %220 = vmatprep.mubr.f32.mxu0 0.0
  %221 = vmatmul.mubr.f32.gmra.mrb[0].mxu0 %v123
  %v222 = vpop.f32.mrb[0].mxu0
  %v223 = vadd.f32 %v105, %v222
  %v224 = vpop.f32.mrb[0].mxu0
  %225 = vmatprep.mubr.f32.mxu0 0.0
  %226 = vmatmul.mubr.f32.gmra.mrb[0].mxu0 %v126
  %v227 = vpop.f32.mrb[0].mxu0
  %v228 = vadd.f32 %v105, %v227
  %v229 = vpop.f32.mrb[0].mxu0
  %230 = vmatprep.mubr.f32.mxu0 0.0
  %231 = vmatmul.mubr.f32.gmra.mrb[0].mxu0 %v129
  %v232 = vpop.f32.mrb[0].mxu0
  %v233 = vadd.f32 %v105, %v232
  %v234 = vpop.f32.mrb[0].mxu0
  %235 = vdwg.mxu0
  %v236 = vmax.f32 %v198, 0.0
  %v237 = vmax.f32 %v203, 0.0
  %v238 = vmax.f32 %v208, 0.0
  %v239 = vmax.f32 %v213, 0.0
  %v240 = vmax.f32 %v218, 0.0
  %v241 = vmax.f32 %v223, 0.0
  %v242 = vmax.f32 %v228, 0.0
  %v243 = vmax.f32 %v233, 0.0
  %v244 = vld [vmem:[%s2 + $0x20] sm:$0xff]
  %v245 = vld [vmem:[%s2 + $0x28] sm:$0xff]
  %v246 = vld [vmem:[%s2 + $0x30] sm:$0xff]
  %v247 = vld [vmem:[%s2 + $0x38] sm:$0xff]
  %v248 = vld [vmem:[%s2 + $0x7b] sm:$0x1]
  %v249 = vlaneseq
  %v250 = vshrl.u32 %v249, 7
  %v251 = vsub.s32 0, %v250
  %v252 = vrot.slane %v248, %v251
  %v254 = vsel %vm106, %v236, 0
  %v257 = vsel %vm106, %v237, 0
  %v260 = vsel %vm106, %v238, 0
  %v263 = vsel %vm106, %v239, 0
  %v266 = vsel %vm106, %v240, 0
  %v269 = vsel %vm106, %v241, 0
  %v272 = vsel %vm106, %v242, 0
  %v275 = vsel %vm106, %v243, 0
  %277 = vmatprep.subr.mxu0 0.0
  %278 = vmatpush1.msra.mxu0 %v244
  %279 = vmatprep.subr.mxu0 0.0
  %280 = vmatpush1.msra.mxu0 %v245
  %281 = vmatprep.subr.mxu0 0.0
  %282 = vmatpush1.msra.mxu0 %v246
  %283 = vmatprep.subr.mxu0 0.0
  %284 = vmatpush1.msra.mxu0 %v247
  %285 = vmatprep.subr.mxu0 0.0
  %286 = vmatpush1.msra.mxu0 0.0
  %287 = vmatprep.subr.mxu0 0.0
  %288 = vmatpush1.msra.mxu0 0.0
  %289 = vmatprep.subr.mxu0 0.0
  %290 = vmatpush1.msra.mxu0 0.0
  %291 = vmatprep.subr.mxu0 0.0
  %292 = vmatpush1.msra.mxu0 0.0
  %293 = vmatprep.subr.mxu0 0.0
  %294 = vmatpush1.msra.mxu0 0.0
  %295 = vmatprep.subr.mxu0 0.0
  %296 = vmatpush1.msra.mxu0 0.0
  %297 = vmatprep.subr.mxu0 0.0
  %298 = vmatpush1.msra.mxu0 0.0
  %299 = vmatprep.subr.mxu0 0.0
  %300 = vmatpush1.msra.mxu0 0.0
  %301 = vmatprep.subr.mxu0 0.0
  %302 = vmatpush1.msra.mxu0 0.0
  %303 = vmatprep.subr.mxu0 0.0
  %304 = vmatpush1.msra.mxu0 0.0
  %305 = vmatprep.subr.mxu0 0.0
  %306 = vmatpush1.msra.mxu0 0.0
  %307 = vmatprep.subr.mxu0 0.0
  %308 = vmatpush1.msra.mxu0 0.0
  %309 = vmatprep.subr.mxu0 0.0
  %310 = vmatpush1.msra.mxu0 0.0
  %311 = vmatprep.subr.mxu0 0.0
  %312 = vmatpush1.msra.mxu0 0.0
  %313 = vmatprep.subr.mxu0 0.0
  %314 = vmatpush1.msra.mxu0 0.0
  %315 = vmatprep.subr.mxu0 0.0
  %316 = vmatpush1.msra.mxu0 0.0
  %317 = vmatprep.subr.mxu0 0.0
  %318 = vmatpush1.msra.mxu0 0.0
  %319 = vmatprep.subr.mxu0 0.0
  %320 = vmatpush1.msra.mxu0 0.0
  %321 = vmatprep.subr.mxu0 0.0
  %322 = vmatpush1.msra.mxu0 0.0
  %323 = vmatprep.subr.mxu0 0.0
  %324 = vmatpush1.msra.mxu0 0.0
  %325 = vmatprep.subr.mxu0 0.0
  %326 = vmatpush1.msra.mxu0 0.0
  %327 = vmatprep.subr.mxu0 0.0
  %328 = vmatpush1.msra.mxu0 0.0
  %329 = vmatprep.subr.mxu0 0.0
  %330 = vmatpush1.msra.mxu0 0.0
  %331 = vmatprep.subr.mxu0 0.0
  %332 = vmatpush1.msra.mxu0 0.0
  %333 = vmatprep.subr.mxu0 0.0
  %334 = vmatpush1.msra.mxu0 0.0
  %335 = vmatprep.subr.mxu0 0.0
  %336 = vmatpush1.msra.mxu0 0.0
  %337 = vmatprep.subr.mxu0 0.0
  %338 = vmatpush1.msra.mxu0 0.0
  %339 = vmatprep.subr.mxu0 0.0
  %340 = vmatpush1.msra.mxu0 0.0
  %341 = vmatprep.mubr.f32.mxu0 0.0
  %342 = vmatmul.mubr.f32.gmra.mrb[0].mxu0 %v254
  %v343 = vpop.f32.mrb[0].mxu0
  %v344 = vadd.f32 %v252, %v343
  %v345 = vpop.f32.mrb[0].mxu0
  %346 = vmatprep.mubr.f32.mxu0 0.0
  %347 = vmatmul.mubr.f32.gmra.mrb[0].mxu0 %v257
  %v348 = vpop.f32.mrb[0].mxu0
  %v349 = vadd.f32 %v252, %v348
  %v350 = vpop.f32.mrb[0].mxu0
  %351 = vmatprep.mubr.f32.mxu0 0.0
  %352 = vmatmul.mubr.f32.gmra.mrb[0].mxu0 %v260
  %v353 = vpop.f32.mrb[0].mxu0
  %v354 = vadd.f32 %v252, %v353
  %v355 = vpop.f32.mrb[0].mxu0
  %356 = vmatprep.mubr.f32.mxu0 0.0
  %357 = vmatmul.mubr.f32.gmra.mrb[0].mxu0 %v263
  %v358 = vpop.f32.mrb[0].mxu0
  %v359 = vadd.f32 %v252, %v358
  %v360 = vpop.f32.mrb[0].mxu0
  %361 = vmatprep.mubr.f32.mxu0 0.0
  %362 = vmatmul.mubr.f32.gmra.mrb[0].mxu0 %v266
  %v363 = vpop.f32.mrb[0].mxu0
  %v364 = vadd.f32 %v252, %v363
  %v365 = vpop.f32.mrb[0].mxu0
  %366 = vmatprep.mubr.f32.mxu0 0.0
  %367 = vmatmul.mubr.f32.gmra.mrb[0].mxu0 %v269
  %v368 = vpop.f32.mrb[0].mxu0
  %v369 = vadd.f32 %v252, %v368
  %v370 = vpop.f32.mrb[0].mxu0
  %371 = vmatprep.mubr.f32.mxu0 0.0
  %372 = vmatmul.mubr.f32.gmra.mrb[0].mxu0 %v272
  %v373 = vpop.f32.mrb[0].mxu0
  %v374 = vadd.f32 %v252, %v373
  %v375 = vpop.f32.mrb[0].mxu0
  %376 = vmatprep.mubr.f32.mxu0 0.0
  %377 = vmatmul.mubr.f32.gmra.mrb[0].mxu0 %v275
  %v378 = vpop.f32.mrb[0].mxu0
  %v379 = vadd.f32 %v252, %v378
  %v380 = vpop.f32.mrb[0].mxu0
  %381 = vdwg.mxu0
  %v382 = vand.u32 2147483647, %v344
  %v383 = vand.u32 2147483647, %v349
  %v384 = vand.u32 2147483647, %v354
  %v385 = vand.u32 2147483647, %v359
  %v386 = vand.u32 2147483647, %v364
  %v387 = vand.u32 2147483647, %v369
  %v388 = vand.u32 2147483647, %v374
  %v389 = vand.u32 2147483647, %v379
  %v390 = vsub.f32 0.0, %v382
  %v391 = vsub.f32 0.0, %v383
  %v392 = vsub.f32 0.0, %v384
  %v393 = vsub.f32 0.0, %v385
  %v394 = vsub.f32 0.0, %v386
  %v395 = vsub.f32 0.0, %v387
  %v396 = vsub.f32 0.0, %v388
  %v397 = vsub.f32 0.0, %v389
  %v398 = vmul.f32 %v390, 1.442695
  %v399 = vpow.pop %v398
  %v400 = vmul.f32 %v391, 1.442695
  %v401 = vpow.pop %v400
  %v402 = vmul.f32 %v392, 1.442695
  %v403 = vpow.pop %v402
  %v404 = vmul.f32 %v393, 1.442695
  %v405 = vpow.pop %v404
  %v406 = vmul.f32 %v394, 1.442695
  %v407 = vpow.pop %v406
  %v408 = vmul.f32 %v395, 1.442695
  %v409 = vpow.pop %v408
  %v410 = vmul.f32 %v396, 1.442695
  %v411 = vpow.pop %v410
  %v412 = vmul.f32 %v397, 1.442695
  %v413 = vpow.pop %v412
  %v414 = vadd.f32 %v399, 1.0
  %v415 = vlog2.pop %v414
  %v416 = vmul.f32 %v415, 0.6931472
  %v417 = vmul.f32 -0.5, %v399
  %v418 = vadd.f32 %v417, 1.0
  %v419 = vmul.f32 %v418, %v399
  %v420 = vand.u32 2147483647, %v399
  %vm421 = vcmp.lt.f32.partialorder %v420, 0.0004427343
  %v422 = vsel %vm421, %v419, %v416
  %v423 = vadd.f32 %v401, 1.0
  %v424 = vlog2.pop %v423
  %v425 = vmul.f32 %v424, 0.6931472
  %v426 = vmul.f32 -0.5, %v401
  %v427 = vadd.f32 %v426, 1.0
  %v428 = vmul.f32 %v427, %v401
  %v429 = vand.u32 2147483647, %v401
  %vm430 = vcmp.lt.f32.partialorder %v429, 0.0004427343
  %v431 = vsel %vm430, %v428, %v425
  %v432 = vadd.f32 %v403, 1.0
  %v433 = vlog2.pop %v432
  %v434 = vmul.f32 %v433, 0.6931472
  %v435 = vmul.f32 -0.5, %v403
  %v436 = vadd.f32 %v435, 1.0
  %v437 = vmul.f32 %v436, %v403
  %v438 = vand.u32 2147483647, %v403
  %vm439 = vcmp.lt.f32.partialorder %v438, 0.0004427343
  %v440 = vsel %vm439, %v437, %v434
  %v441 = vadd.f32 %v405, 1.0
  %v442 = vlog2.pop %v441
  %v443 = vmul.f32 %v442, 0.6931472
  %v444 = vmul.f32 -0.5, %v405
  %v445 = vadd.f32 %v444, 1.0
  %v446 = vmul.f32 %v445, %v405
  %v447 = vand.u32 2147483647, %v405
  %vm448 = vcmp.lt.f32.partialorder %v447, 0.0004427343
  %v449 = vsel %vm448, %v446, %v443
  %v450 = vadd.f32 %v407, 1.0
  %v451 = vlog2.pop %v450
  %v452 = vmul.f32 %v451, 0.6931472
  %v453 = vmul.f32 -0.5, %v407
  %v454 = vadd.f32 %v453, 1.0
  %v455 = vmul.f32 %v454, %v407
  %v456 = vand.u32 2147483647, %v407
  %vm457 = vcmp.lt.f32.partialorder %v456, 0.0004427343
  %v458 = vsel %vm457, %v455, %v452
  %v459 = vadd.f32 %v409, 1.0
  %v460 = vlog2.pop %v459
  %v461 = vmul.f32 %v460, 0.6931472
  %v462 = vmul.f32 -0.5, %v409
  %v463 = vadd.f32 %v462, 1.0
  %v464 = vmul.f32 %v463, %v409
  %v465 = vand.u32 2147483647, %v409
  %vm466 = vcmp.lt.f32.partialorder %v465, 0.0004427343
  %v467 = vsel %vm466, %v464, %v461
  %v468 = vadd.f32 %v411, 1.0
  %v469 = vlog2.pop %v468
  %v470 = vmul.f32 %v469, 0.6931472
  %v471 = vmul.f32 -0.5, %v411
  %v472 = vadd.f32 %v471, 1.0
  %v473 = vmul.f32 %v472, %v411
  %v474 = vand.u32 2147483647, %v411
  %vm475 = vcmp.lt.f32.partialorder %v474, 0.0004427343
  %v476 = vsel %vm475, %v473, %v470
  %v477 = vadd.f32 %v413, 1.0
  %v478 = vlog2.pop %v477
  %v479 = vmul.f32 %v478, 0.6931472
  %v480 = vmul.f32 -0.5, %v413
  %v481 = vadd.f32 %v480, 1.0
  %v482 = vmul.f32 %v481, %v413
  %v483 = vand.u32 2147483647, %v413
  %vm484 = vcmp.lt.f32.partialorder %v483, 0.0004427343
  %v485 = vsel %vm484, %v482, %v479
  %v486 = vmax.f32 %v344, 0.0
  %v487 = vmax.f32 %v349, 0.0
  %v488 = vmax.f32 %v354, 0.0
  %v489 = vmax.f32 %v359, 0.0
  %v490 = vmax.f32 %v364, 0.0
  %v491 = vmax.f32 %v369, 0.0
  %v492 = vmax.f32 %v374, 0.0
  %v493 = vmax.f32 %v379, 0.0
  %v494 = vadd.f32 %v422, %v486
  %v495 = vadd.f32 %v431, %v487
  %v496 = vadd.f32 %v440, %v488
  %v497 = vadd.f32 %v449, %v489
  %v498 = vadd.f32 %v458, %v490
  %v499 = vadd.f32 %v467, %v491
  %v500 = vadd.f32 %v476, %v492
  %v501 = vadd.f32 %v485, %v493
  %vm502 = vcmask 23552
  %v503 = vsel %vm502, %v494, 0.0
  %v504 = vrot.slane %v503, 4
  %v505 = vadd.f32 %v503, %v504
  %v506 = vrot.slane %v505, 2
  %v507 = vadd.f32 %v505, %v506
  %v508 = vrot.slane %v507, 1
  %v509 = vadd.f32 %v507, %v508
  %v510 = vsel %vm502, %v495, 0.0
  %v511 = vrot.slane %v510, 4
  %v512 = vadd.f32 %v510, %v511
  %v513 = vrot.slane %v512, 2
  %v514 = vadd.f32 %v512, %v513
  %v515 = vrot.slane %v514, 1
  %v516 = vadd.f32 %v514, %v515
  %v517 = vsel %vm502, %v496, 0.0
  %v518 = vrot.slane %v517, 4
  %v519 = vadd.f32 %v517, %v518
  %v520 = vrot.slane %v519, 2
  %v521 = vadd.f32 %v519, %v520
  %v522 = vrot.slane %v521, 1
  %v523 = vadd.f32 %v521, %v522
  %v524 = vsel %vm502, %v497, 0.0
  %v525 = vrot.slane %v524, 4
  %v526 = vadd.f32 %v524, %v525
  %v527 = vrot.slane %v526, 2
  %v528 = vadd.f32 %v526, %v527
  %v529 = vrot.slane %v528, 1
  %v530 = vadd.f32 %v528, %v529
  %v531 = vsel %vm502, %v498, 0.0
  %v532 = vrot.slane %v531, 4
  %v533 = vadd.f32 %v531, %v532
  %v534 = vrot.slane %v533, 2
  %v535 = vadd.f32 %v533, %v534
  %v536 = vrot.slane %v535, 1
  %v537 = vadd.f32 %v535, %v536
  %v538 = vsel %vm502, %v499, 0.0
  %v539 = vrot.slane %v538, 4
  %v540 = vadd.f32 %v538, %v539
  %v541 = vrot.slane %v540, 2
  %v542 = vadd.f32 %v540, %v541
  %v543 = vrot.slane %v542, 1
  %v544 = vadd.f32 %v542, %v543
  %v545 = vsel %vm502, %v500, 0.0
  %v546 = vrot.slane %v545, 4
  %v547 = vadd.f32 %v545, %v546
  %v548 = vrot.slane %v547, 2
  %v549 = vadd.f32 %v547, %v548
  %v550 = vrot.slane %v549, 1
  %v551 = vadd.f32 %v549, %v550
  %v552 = vsel %vm502, %v501, 0.0
  %v553 = vrot.slane %v552, 4
  %v554 = vadd.f32 %v552, %v553
  %v555 = vrot.slane %v554, 2
  %v556 = vadd.f32 %v554, %v555
  %v557 = vrot.slane %v556, 1
  %v558 = vadd.f32 %v556, %v557
  %v559 = vmul.f32 %v509, 0.5
  %v560 = vmul.f32 %v516, 0.5
  %v561 = vmul.f32 %v523, 0.5
  %v562 = vmul.f32 %v530, 0.5
  %v563 = vmul.f32 %v537, 0.5
  %v564 = vmul.f32 %v544, 0.5
  %v565 = vmul.f32 %v551, 0.5
  %v566 = vmul.f32 %v558, 0.5
  %575 = vrot.lane.b32.xlu0 %v559, 1
  %v576 = vpop.permute.xlu0 %575
  %577 = vrot.lane.b32.xlu0 %v560, 1
  %v578 = vpop.permute.xlu0 %577
  %579 = vrot.lane.b32.xlu0 %v561, 1
  %v580 = vpop.permute.xlu0 %579
  %581 = vrot.lane.b32.xlu0 %v562, 1
  %v582 = vpop.permute.xlu0 %581
  %583 = vrot.lane.b32.xlu0 %v563, 1
  %v584 = vpop.permute.xlu0 %583
  %585 = vrot.lane.b32.xlu0 %v564, 1
  %v586 = vpop.permute.xlu0 %585
  %587 = vrot.lane.b32.xlu0 %v565, 1
  %v588 = vpop.permute.xlu0 %587
  %589 = vrot.lane.b32.xlu0 %v566, 1
  %v590 = vpop.permute.xlu0 %589
  %v599 = vadd.f32 %v559, %v576
  %v600 = vadd.f32 %v560, %v578
  %v601 = vadd.f32 %v561, %v580
  %v602 = vadd.f32 %v562, %v582
  %v603 = vadd.f32 %v563, %v584
  %v604 = vadd.f32 %v564, %v586
  %v605 = vadd.f32 %v565, %v588
  %v606 = vadd.f32 %v566, %v590
  %v607 = vld [vmem:[%s2 + $0x7c] sm:$0x1]
  %609 = vset.pattern.permute.xlu0 1
  %610 = vperm.xlu0 %609, %v599
  %v611 = vpop.permute.xlu0 %610
  %614 = vset.pattern.permute.xlu0 1
  %615 = vperm.xlu0 %614, %v600
  %v616 = vpop.permute.xlu0 %615
  %619 = vset.pattern.permute.xlu0 1
  %620 = vperm.xlu0 %619, %v601
  %v621 = vpop.permute.xlu0 %620
  %624 = vset.pattern.permute.xlu0 1
  %625 = vperm.xlu0 %624, %v602
  %v626 = vpop.permute.xlu0 %625
  %629 = vset.pattern.permute.xlu0 1
  %630 = vperm.xlu0 %629, %v603
  %v631 = vpop.permute.xlu0 %630
  %634 = vset.pattern.permute.xlu0 1
  %635 = vperm.xlu0 %634, %v604
  %v636 = vpop.permute.xlu0 %635
  %639 = vset.pattern.permute.xlu0 1
  %640 = vperm.xlu0 %639, %v605
  %v641 = vpop.permute.xlu0 %640
  %644 = vset.pattern.permute.xlu0 1
  %645 = vperm.xlu0 %644, %v606
  %v646 = vpop.permute.xlu0 %645
  %v648 = vlaneseq
  %v649 = vshrl.u32 %v648, 7
  %v650 = vsub.s32 0, %v649
  %v651 = vrot.slane %v607, %v650
  %v652 = vmul.f32 %v611, %v651
  %v653 = vmul.f32 %v616, %v651
  %v654 = vmul.f32 %v621, %v651
  %v655 = vmul.f32 %v626, %v651
  %v656 = vmul.f32 %v631, %v651
  %v657 = vmul.f32 %v636, %v651
  %v658 = vmul.f32 %v641, %v651
  %v659 = vmul.f32 %v646, %v651
  %v660 = vld [vmem:[%s2 + $0x7d] sm:$0x1]
  %v661 = vlaneseq
  %v662 = vshrl.u32 %v661, 7
  %v663 = vsub.s32 0, %v662
  %v664 = vrot.slane %v660, %v663
  %v665 = vadd.f32 %v652, %v664
  %v666 = vadd.f32 %v653, %v664
  %v667 = vadd.f32 %v654, %v664
  %v668 = vadd.f32 %v655, %v664
  %v669 = vadd.f32 %v656, %v664
  %v670 = vadd.f32 %v657, %v664
  %v671 = vadd.f32 %v658, %v664
  %v672 = vadd.f32 %v659, %v664
  %v673 = vmin.f32 %v665, 0.0
  %v674 = vmin.f32 %v666, 0.0
  %v675 = vmin.f32 %v667, 0.0
  %v676 = vmin.f32 %v668, 0.0
  %v677 = vmin.f32 %v669, 0.0
  %v678 = vmin.f32 %v670, 0.0
  %v679 = vmin.f32 %v671, 0.0
  %v680 = vmin.f32 %v672, 0.0
  %v681 = vld [vmem:[%s2 + $0x7e] sm:$0x1]
  %v682 = vlaneseq
  %v683 = vshrl.u32 %v682, 7
  %v684 = vsub.s32 0, %v683
  %v685 = vrot.slane %v681, %v684
  %v686 = vmul.f32 %v673, %v685
  %v687 = vmul.f32 %v674, %v685
  %v688 = vmul.f32 %v675, %v685
  %v689 = vmul.f32 %v676, %v685
  %v690 = vmul.f32 %v677, %v685
  %v691 = vmul.f32 %v678, %v685
  %v692 = vmul.f32 %v679, %v685
  %v693 = vmul.f32 %v680, %v685
  %v702 = vrot.slane %v687, 7
  %vm703 = vcmask 1041409
  %v704 = vsel %vm703, %v702, %v686
  %v705 = vrot.slane %v688, 6
  %vm706 = vcmask 1042434
  %v707 = vsel %vm706, %v705, %v704
  %v708 = vrot.slane %v689, 5
  %vm709 = vcmask 1043459
  %v710 = vsel %vm709, %v708, %v707
  %v711 = vrot.slane %v690, 4
  %vm712 = vcmask 1044484
  %v713 = vsel %vm712, %v711, %v710
  %v714 = vrot.slane %v691, 3
  %vm715 = vcmask 1045509
  %v716 = vsel %vm715, %v714, %v713
  %v717 = vrot.slane %v692, 2
  %vm718 = vcmask 1046534
  %v719 = vsel %vm718, %v717, %v716
  %v720 = vrot.slane %v693, 1
  %vm721 = vcmask 1047559
  %v722 = vsel %vm721, %v720, %v719
  %vm724 = vcmask 130048
  %v725 = vsel %vm724, %v722, 0.0
  %726 = vadd.xlane.f32.xlu0 %v725
  %v727 = vpop.xlane.xlu0 %726
  %v728 = vld [vmem:[%s2 + $0x7f] sm:$0x1]
  %v729 = vlaneseq
  %v730 = vshrl.u32 %v729, 7
  %v731 = vsub.s32 0, %v730
  %v732 = vrot.slane %v728, %v731
  %v733 = vadd.f32 %v727, %v732
  %v734 = vmul.f32 %v733, 0.5
  %v736 = vrot.slane %v734, 1
  %v737 = vrot.slane %v734, 2
  %v738 = vrot.slane %v734, 3
  %v739 = vrot.slane %v734, 4
  %v740 = vrot.slane %v734, 5
  %v741 = vrot.slane %v734, 6
  %v742 = vrot.slane %v734, 7
  %743 = vrot.lane.b32.xlu0 %v734, 2
  %v744 = vpop.permute.xlu0 %743
  %745 = vrot.lane.b32.xlu0 %v736, 2
  %v746 = vpop.permute.xlu0 %745
  %747 = vrot.lane.b32.xlu0 %v737, 2
  %v748 = vpop.permute.xlu0 %747
  %749 = vrot.lane.b32.xlu0 %v738, 2
  %v750 = vpop.permute.xlu0 %749
  %751 = vrot.lane.b32.xlu0 %v739, 2
  %v752 = vpop.permute.xlu0 %751
  %753 = vrot.lane.b32.xlu0 %v740, 2
  %v754 = vpop.permute.xlu0 %753
  %755 = vrot.lane.b32.xlu0 %v741, 2
  %v756 = vpop.permute.xlu0 %755
  %757 = vrot.lane.b32.xlu0 %v742, 2
  %v758 = vpop.permute.xlu0 %757
  %v767 = vadd.f32 %v559, %v744
  %v768 = vadd.f32 %v560, %v746
  %v769 = vadd.f32 %v561, %v748
  %v770 = vadd.f32 %v562, %v750
  %v771 = vadd.f32 %v563, %v752
  %v772 = vadd.f32 %v564, %v754
  %v773 = vadd.f32 %v565, %v756
  %v774 = vadd.f32 %v566, %v758
  %v775 = vld [vmem:[%s2 + $0x80] sm:$0x1]
  %777 = vset.pattern.permute.xlu0 2
  %778 = vperm.xlu0 %777, %v767
  %v779 = vpop.permute.xlu0 %778
  %782 = vset.pattern.permute.xlu0 2
  %783 = vperm.xlu0 %782, %v768
  %v784 = vpop.permute.xlu0 %783
  %787 = vset.pattern.permute.xlu0 2
  %788 = vperm.xlu0 %787, %v769
  %v789 = vpop.permute.xlu0 %788
  %792 = vset.pattern.permute.xlu0 2
  %793 = vperm.xlu0 %792, %v770
  %v794 = vpop.permute.xlu0 %793
  %797 = vset.pattern.permute.xlu0 2
  %798 = vperm.xlu0 %797, %v771
  %v799 = vpop.permute.xlu0 %798
  %802 = vset.pattern.permute.xlu0 2
  %803 = vperm.xlu0 %802, %v772
  %v804 = vpop.permute.xlu0 %803
  %807 = vset.pattern.permute.xlu0 2
  %808 = vperm.xlu0 %807, %v773
  %v809 = vpop.permute.xlu0 %808
  %812 = vset.pattern.permute.xlu0 2
  %813 = vperm.xlu0 %812, %v774
  %v814 = vpop.permute.xlu0 %813
  %v816 = vlaneseq
  %v817 = vshrl.u32 %v816, 7
  %v818 = vsub.s32 0, %v817
  %v819 = vrot.slane %v775, %v818
  %v820 = vmul.f32 %v779, %v819
  %v821 = vmul.f32 %v784, %v819
  %v822 = vmul.f32 %v789, %v819
  %v823 = vmul.f32 %v794, %v819
  %v824 = vmul.f32 %v799, %v819
  %v825 = vmul.f32 %v804, %v819
  %v826 = vmul.f32 %v809, %v819
  %v827 = vmul.f32 %v814, %v819
  %v828 = vld [vmem:[%s2 + $0x81] sm:$0x1]
  %v829 = vlaneseq
  %v830 = vshrl.u32 %v829, 7
  %v831 = vsub.s32 0, %v830
  %v832 = vrot.slane %v828, %v831
  %v833 = vadd.f32 %v820, %v832
  %v834 = vadd.f32 %v821, %v832
  %v835 = vadd.f32 %v822, %v832
  %v836 = vadd.f32 %v823, %v832
  %v837 = vadd.f32 %v824, %v832
  %v838 = vadd.f32 %v825, %v832
  %v839 = vadd.f32 %v826, %v832
  %v840 = vadd.f32 %v827, %v832
  %v841 = vmin.f32 %v833, 0.0
  %v842 = vmin.f32 %v834, 0.0
  %v843 = vmin.f32 %v835, 0.0
  %v844 = vmin.f32 %v836, 0.0
  %v845 = vmin.f32 %v837, 0.0
  %v846 = vmin.f32 %v838, 0.0
  %v847 = vmin.f32 %v839, 0.0
  %v848 = vmin.f32 %v840, 0.0
  %v849 = vld [vmem:[%s2 + $0x82] sm:$0x1]
  %v850 = vlaneseq
  %v851 = vshrl.u32 %v850, 7
  %v852 = vsub.s32 0, %v851
  %v853 = vrot.slane %v849, %v852
  %v854 = vmul.f32 %v841, %v853
  %v855 = vmul.f32 %v842, %v853
  %v856 = vmul.f32 %v843, %v853
  %v857 = vmul.f32 %v844, %v853
  %v858 = vmul.f32 %v845, %v853
  %v859 = vmul.f32 %v846, %v853
  %v860 = vmul.f32 %v847, %v853
  %v861 = vmul.f32 %v848, %v853
  %v870 = vrot.slane %v855, 7
  %v871 = vsel %vm703, %v870, %v854
  %v872 = vrot.slane %v856, 6
  %v873 = vsel %vm706, %v872, %v871
  %v874 = vrot.slane %v857, 5
  %v875 = vsel %vm709, %v874, %v873
  %v876 = vrot.slane %v858, 4
  %v877 = vsel %vm712, %v876, %v875
  %v878 = vrot.slane %v859, 3
  %v879 = vsel %vm715, %v878, %v877
  %v880 = vrot.slane %v860, 2
  %v881 = vsel %vm718, %v880, %v879
  %v882 = vrot.slane %v861, 1
  %v883 = vsel %vm721, %v882, %v881
  %v885 = vsel %vm724, %v883, 0.0
  %886 = vadd.xlane.f32.xlu0 %v885
  %v887 = vpop.xlane.xlu0 %886
  %v888 = vld [vmem:[%s2 + $0x83] sm:$0x1]
  %v889 = vlaneseq
  %v890 = vshrl.u32 %v889, 7
  %v891 = vsub.s32 0, %v890
  %v892 = vrot.slane %v888, %v891
  %v893 = vadd.f32 %v887, %v892
  %v894 = vld [vmem:[%s2 + $0x40] sm:$0xf]
  %vm895 = vcmask 31744
  %v897 = vsel %vm895, %v14, 0
  %vm899 = vcmask 1043456
  %v901 = vsel %vm899, %v894, 0
  %903 = vmatprep.subr.mxu0 0.0
  %904 = vmatpush1.msra.mxu0 %v901
  %905 = vmatprep.subr.mxu0 0.0
  %906 = vmatpush1.msra.mxu0 0.0
  %907 = vmatprep.subr.mxu0 0.0
  %908 = vmatpush1.msra.mxu0 0.0
  %909 = vmatprep.subr.mxu0 0.0
  %910 = vmatpush1.msra.mxu0 0.0
  %911 = vmatprep.subr.mxu0 0.0
  %912 = vmatpush1.msra.mxu0 0.0
  %913 = vmatprep.subr.mxu0 0.0
  %914 = vmatpush1.msra.mxu0 0.0
  %915 = vmatprep.subr.mxu0 0.0
  %916 = vmatpush1.msra.mxu0 0.0
  %917 = vmatprep.subr.mxu0 0.0
  %918 = vmatpush1.msra.mxu0 0.0
  %919 = vmatprep.subr.mxu0 0.0
  %920 = vmatpush1.msra.mxu0 0.0
  %921 = vmatprep.subr.mxu0 0.0
  %922 = vmatpush1.msra.mxu0 0.0
  %923 = vmatprep.subr.mxu0 0.0
  %924 = vmatpush1.msra.mxu0 0.0
  %925 = vmatprep.subr.mxu0 0.0
  %926 = vmatpush1.msra.mxu0 0.0
  %927 = vmatprep.subr.mxu0 0.0
  %928 = vmatpush1.msra.mxu0 0.0
  %929 = vmatprep.subr.mxu0 0.0
  %930 = vmatpush1.msra.mxu0 0.0
  %931 = vmatprep.subr.mxu0 0.0
  %932 = vmatpush1.msra.mxu0 0.0
  %933 = vmatprep.subr.mxu0 0.0
  %934 = vmatpush1.msra.mxu0 0.0
  %935 = vmatprep.subr.mxu0 0.0
  %936 = vmatpush1.msra.mxu0 0.0
  %937 = vmatprep.subr.mxu0 0.0
  %938 = vmatpush1.msra.mxu0 0.0
  %939 = vmatprep.subr.mxu0 0.0
  %940 = vmatpush1.msra.mxu0 0.0
  %941 = vmatprep.subr.mxu0 0.0
  %942 = vmatpush1.msra.mxu0 0.0
  %943 = vmatprep.subr.mxu0 0.0
  %944 = vmatpush1.msra.mxu0 0.0
  %945 = vmatprep.subr.mxu0 0.0
  %946 = vmatpush1.msra.mxu0 0.0
  %947 = vmatprep.subr.mxu0 0.0
  %948 = vmatpush1.msra.mxu0 0.0
  %949 = vmatprep.subr.mxu0 0.0
  %950 = vmatpush1.msra.mxu0 0.0
  %951 = vmatprep.subr.mxu0 0.0
  %952 = vmatpush1.msra.mxu0 0.0
  %953 = vmatprep.subr.mxu0 0.0
  %954 = vmatpush1.msra.mxu0 0.0
  %955 = vmatprep.subr.mxu0 0.0
  %956 = vmatpush1.msra.mxu0 0.0
  %957 = vmatprep.subr.mxu0 0.0
  %958 = vmatpush1.msra.mxu0 0.0
  %959 = vmatprep.subr.mxu0 0.0
  %960 = vmatpush1.msra.mxu0 0.0
  %961 = vmatprep.subr.mxu0 0.0
  %962 = vmatpush1.msra.mxu0 0.0
  %963 = vmatprep.subr.mxu0 0.0
  %964 = vmatpush1.msra.mxu0 0.0
  %965 = vmatprep.subr.mxu0 0.0
  %966 = vmatpush1.msra.mxu0 0.0
  %967 = vmatprep.mubr.f32.mxu0 0.0
  %968 = vmatmul.mubr.f32.gmra.mrb[0].mxu0 %v897
  %v969 = vpop.f32.mrb[0].mxu0
  %v970 = vadd.f32 0.0, %v969
  %v971 = vpop.f32.mrb[0].mxu0
  %972 = vdwg.mxu0
  %v973 = vld [vmem:[%s2 + $0x85] sm:$0x1]
  %v974 = vlaneseq
  %v975 = vshrl.u32 %v974, 7
  %v976 = vsub.s32 0, %v975
  %v977 = vrot.slane %v973, %v976
  %v978 = vadd.f32 %v970, %v977
  %v979 = vmax.f32 %v978, 0.0
  %v980 = vld [vmem:[%s2 + $0x86] sm:$0x1]
  %v981 = vlaneseq
  %v982 = vshrl.u32 %v981, 7
  %v983 = vsub.s32 0, %v982
  %v984 = vrot.slane %v980, %v983
  %986 = vrot.lane.b32.xlu0 %v984, 1
  %v987 = vpop.permute.xlu0 %986
  %v989 = vadd.f32 %v970, %v987
  %v990 = vld [vmem:[%s2 + $0x87] sm:$0x1]
  %v991 = vlaneseq
  %v992 = vshrl.u32 %v991, 7
  %v993 = vsub.s32 0, %v992
  %v994 = vrot.slane %v990, %v993
  %996 = vrot.lane.b32.xlu0 %v994, 2
  %v997 = vpop.permute.xlu0 %996
  %v999 = vadd.f32 %v970, %v997
  %v1000 = vmul.f32 %v893, %v979
  %v1001 = vld [vmem:[%s2 + $0x89] sm:$0x1]
  %1003 = vset.pattern.permute.xlu0 0
  %1004 = vperm.xlu0 %1003, %v1000
  %v1005 = vpop.permute.xlu0 %1004
  %v1007 = vlaneseq
  %v1008 = vshrl.u32 %v1007, 7
  %v1009 = vsub.s32 0, %v1008
  %v1010 = vrot.slane %v1001, %v1009
  %v1011 = vmul.f32 %v1005, %v1010
  %1013 = vrot.lane.b32.xlu0 %v989, 127
  %v1014 = vpop.permute.xlu0 %1013
  %v1016 = vmul.f32 %v893, %v1014
  %v1017 = vld [vmem:[%s2 + $0x88] sm:$0x1]
  %1019 = vset.pattern.permute.xlu0 0
  %1020 = vperm.xlu0 %1019, %v1016
  %v1021 = vpop.permute.xlu0 %1020
  %v1023 = vlaneseq
  %v1024 = vshrl.u32 %v1023, 7
  %v1025 = vsub.s32 0, %v1024
  %v1026 = vrot.slane %v1017, %v1025
  %v1027 = vmul.f32 %v1021, %v1026
  %v1028 = vadd.f32 %v1011, %v1027
  %1030 = vrot.lane.b32.xlu0 %v999, 126
  %v1031 = vpop.permute.xlu0 %1030
  %v1033 = vadd.f32 %v1028, %v1031
  %v1034 = vmin.f32 %v1033, 0.0
  %v1035 = vld [vmem:[%s2 + $0x84] sm:$0x1]
  %v1036 = vlaneseq
  %v1037 = vshrl.u32 %v1036, 7
  %v1038 = vsub.s32 0, %v1037
  %v1039 = vrot.slane %v1035, %v1038
  %1041 = vrot.lane.b32.xlu0 %v1039, 18
  %v1042 = vpop.permute.xlu0 %1041
  %v1044 = vadd.f32 %v970, %v1042
  %v1045 = vmin.f32 %v1044, 0.0
  %v1046 = vld [vmem:[%s2 + $0x48] sm:$0xff]
  %v1047 = vld [vmem:[%s2 + $0x50] sm:$0xff]
  %1049 = vrot.lane.b32.xlu0 %v1045, 110
  %v1050 = vpop.permute.xlu0 %1049
  %v1051 = vsel %vm724, %v1050, 0
  %1053 = vmatprep.subr.mxu0 0.0
  %1054 = vmatpush1.msra.mxu0 %v1046
  %1055 = vmatprep.subr.mxu0 0.0
  %1056 = vmatpush1.msra.mxu0 %v1047
  %1057 = vmatprep.subr.mxu0 0.0
  %1058 = vmatpush1.msra.mxu0 0.0
  %1059 = vmatprep.subr.mxu0 0.0
  %1060 = vmatpush1.msra.mxu0 0.0
  %1061 = vmatprep.subr.mxu0 0.0
  %1062 = vmatpush1.msra.mxu0 0.0
  %1063 = vmatprep.subr.mxu0 0.0
  %1064 = vmatpush1.msra.mxu0 0.0
  %1065 = vmatprep.subr.mxu0 0.0
  %1066 = vmatpush1.msra.mxu0 0.0
  %1067 = vmatprep.subr.mxu0 0.0
  %1068 = vmatpush1.msra.mxu0 0.0
  %1069 = vmatprep.subr.mxu0 0.0
  %1070 = vmatpush1.msra.mxu0 0.0
  %1071 = vmatprep.subr.mxu0 0.0
  %1072 = vmatpush1.msra.mxu0 0.0
  %1073 = vmatprep.subr.mxu0 0.0
  %1074 = vmatpush1.msra.mxu0 0.0
  %1075 = vmatprep.subr.mxu0 0.0
  %1076 = vmatpush1.msra.mxu0 0.0
  %1077 = vmatprep.subr.mxu0 0.0
  %1078 = vmatpush1.msra.mxu0 0.0
  %1079 = vmatprep.subr.mxu0 0.0
  %1080 = vmatpush1.msra.mxu0 0.0
  %1081 = vmatprep.subr.mxu0 0.0
  %1082 = vmatpush1.msra.mxu0 0.0
  %1083 = vmatprep.subr.mxu0 0.0
  %1084 = vmatpush1.msra.mxu0 0.0
  %1085 = vmatprep.subr.mxu0 0.0
  %1086 = vmatpush1.msra.mxu0 0.0
  %1087 = vmatprep.subr.mxu0 0.0
  %1088 = vmatpush1.msra.mxu0 0.0
  %1089 = vmatprep.subr.mxu0 0.0
  %1090 = vmatpush1.msra.mxu0 0.0
  %1091 = vmatprep.subr.mxu0 0.0
  %1092 = vmatpush1.msra.mxu0 0.0
  %1093 = vmatprep.subr.mxu0 0.0
  %1094 = vmatpush1.msra.mxu0 0.0
  %1095 = vmatprep.subr.mxu0 0.0
  %1096 = vmatpush1.msra.mxu0 0.0
  %1097 = vmatprep.subr.mxu0 0.0
  %1098 = vmatpush1.msra.mxu0 0.0
  %1099 = vmatprep.subr.mxu0 0.0
  %1100 = vmatpush1.msra.mxu0 0.0
  %1101 = vmatprep.subr.mxu0 0.0
  %1102 = vmatpush1.msra.mxu0 0.0
  %1103 = vmatprep.subr.mxu0 0.0
  %1104 = vmatpush1.msra.mxu0 0.0
  %1105 = vmatprep.subr.mxu0 0.0
  %1106 = vmatpush1.msra.mxu0 0.0
  %1107 = vmatprep.subr.mxu0 0.0
  %1108 = vmatpush1.msra.mxu0 0.0
  %1109 = vmatprep.subr.mxu0 0.0
  %1110 = vmatpush1.msra.mxu0 0.0
  %1111 = vmatprep.subr.mxu0 0.0
  %1112 = vmatpush1.msra.mxu0 0.0
  %1113 = vmatprep.subr.mxu0 0.0
  %1114 = vmatpush1.msra.mxu0 0.0
  %1115 = vmatprep.subr.mxu0 0.0
  %1116 = vmatpush1.msra.mxu0 0.0
  %1117 = vmatprep.mubr.f32.mxu0 0.0
  %1118 = vmatmul.mubr.f32.gmra.mrb[0].mxu0 %v1051
  %v1119 = vpop.f32.mrb[0].mxu0
  %v1120 = vadd.f32 0.0, %v1119
  %v1121 = vpop.f32.mrb[0].mxu0
  %1122 = vdwg.mxu0
  %v1123 = vld [vmem:[%s2 + $0x8b] sm:$0x1]
  %v1124 = vlaneseq
  %v1125 = vshrl.u32 %v1124, 7
  %v1126 = vsub.s32 0, %v1125
  %v1127 = vrot.slane %v1123, %v1126
  %v1128 = vadd.f32 %v1120, %v1127
  %v1129 = vmax.f32 %v1128, 0.0
  %v1130 = vld [vmem:[%s2 + $0x8c] sm:$0x1]
  %v1131 = vlaneseq
  %v1132 = vshrl.u32 %v1131, 7
  %v1133 = vsub.s32 0, %v1132
  %v1134 = vrot.slane %v1130, %v1133
  %1136 = vrot.lane.b32.xlu0 %v1134, 16
  %v1137 = vpop.permute.xlu0 %1136
  %v1139 = vadd.f32 %v1120, %v1137
  %v1140 = vld [vmem:[%s2 + $0x8d] sm:$0x1]
  %v1141 = vlaneseq
  %v1142 = vshrl.u32 %v1141, 7
  %v1143 = vsub.s32 0, %v1142
  %v1144 = vrot.slane %v1140, %v1143
  %1146 = vrot.lane.b32.xlu0 %v1144, 17
  %v1147 = vpop.permute.xlu0 %1146
  %v1149 = vadd.f32 %v1120, %v1147
  %v1150 = vmul.f32 %v1034, %v1129
  %v1151 = vld [vmem:[%s2 + $0x58] sm:$0xff]
  %v1152 = vld [vmem:[%s2 + $0x60] sm:$0xff]
  %1154 = vrot.lane.b32.xlu0 %v1139, 112
  %v1155 = vpop.permute.xlu0 %1154
  %v1157 = vmul.f32 %v893, %v1155
  %v1158 = vld [vmem:[%s2 + $0x8e] sm:$0x1]
  %1160 = vset.pattern.permute.xlu0 0
  %1161 = vperm.xlu0 %1160, %v1157
  %v1162 = vpop.permute.xlu0 %1161
  %v1164 = vlaneseq
  %v1165 = vshrl.u32 %v1164, 7
  %v1166 = vsub.s32 0, %v1165
  %v1167 = vrot.slane %v1158, %v1166
  %v1168 = vmul.f32 %v1162, %v1167
  %v1170 = vsel %vm724, %v1150, 0
  %1172 = vmatprep.subr.mxu0 0.0
  %1173 = vmatpush1.msra.mxu0 %v1151
  %1174 = vmatprep.subr.mxu0 0.0
  %1175 = vmatpush1.msra.mxu0 %v1152
  %1176 = vmatprep.subr.mxu0 0.0
  %1177 = vmatpush1.msra.mxu0 0.0
  %1178 = vmatprep.subr.mxu0 0.0
  %1179 = vmatpush1.msra.mxu0 0.0
  %1180 = vmatprep.subr.mxu0 0.0
  %1181 = vmatpush1.msra.mxu0 0.0
  %1182 = vmatprep.subr.mxu0 0.0
  %1183 = vmatpush1.msra.mxu0 0.0
  %1184 = vmatprep.subr.mxu0 0.0
  %1185 = vmatpush1.msra.mxu0 0.0
  %1186 = vmatprep.subr.mxu0 0.0
  %1187 = vmatpush1.msra.mxu0 0.0
  %1188 = vmatprep.subr.mxu0 0.0
  %1189 = vmatpush1.msra.mxu0 0.0
  %1190 = vmatprep.subr.mxu0 0.0
  %1191 = vmatpush1.msra.mxu0 0.0
  %1192 = vmatprep.subr.mxu0 0.0
  %1193 = vmatpush1.msra.mxu0 0.0
  %1194 = vmatprep.subr.mxu0 0.0
  %1195 = vmatpush1.msra.mxu0 0.0
  %1196 = vmatprep.subr.mxu0 0.0
  %1197 = vmatpush1.msra.mxu0 0.0
  %1198 = vmatprep.subr.mxu0 0.0
  %1199 = vmatpush1.msra.mxu0 0.0
  %1200 = vmatprep.subr.mxu0 0.0
  %1201 = vmatpush1.msra.mxu0 0.0
  %1202 = vmatprep.subr.mxu0 0.0
  %1203 = vmatpush1.msra.mxu0 0.0
  %1204 = vmatprep.subr.mxu0 0.0
  %1205 = vmatpush1.msra.mxu0 0.0
  %1206 = vmatprep.subr.mxu0 0.0
  %1207 = vmatpush1.msra.mxu0 0.0
  %1208 = vmatprep.subr.mxu0 0.0
  %1209 = vmatpush1.msra.mxu0 0.0
  %1210 = vmatprep.subr.mxu0 0.0
  %1211 = vmatpush1.msra.mxu0 0.0
  %1212 = vmatprep.subr.mxu0 0.0
  %1213 = vmatpush1.msra.mxu0 0.0
  %1214 = vmatprep.subr.mxu0 0.0
  %1215 = vmatpush1.msra.mxu0 0.0
  %1216 = vmatprep.subr.mxu0 0.0
  %1217 = vmatpush1.msra.mxu0 0.0
  %1218 = vmatprep.subr.mxu0 0.0
  %1219 = vmatpush1.msra.mxu0 0.0
  %1220 = vmatprep.subr.mxu0 0.0
  %1221 = vmatpush1.msra.mxu0 0.0
  %1222 = vmatprep.subr.mxu0 0.0
  %1223 = vmatpush1.msra.mxu0 0.0
  %1224 = vmatprep.subr.mxu0 0.0
  %1225 = vmatpush1.msra.mxu0 0.0
  %1226 = vmatprep.subr.mxu0 0.0
  %1227 = vmatpush1.msra.mxu0 0.0
  %1228 = vmatprep.subr.mxu0 0.0
  %1229 = vmatpush1.msra.mxu0 0.0
  %1230 = vmatprep.subr.mxu0 0.0
  %1231 = vmatpush1.msra.mxu0 0.0
  %1232 = vmatprep.subr.mxu0 0.0
  %1233 = vmatpush1.msra.mxu0 0.0
  %1234 = vmatprep.subr.mxu0 0.0
  %1235 = vmatpush1.msra.mxu0 0.0
  %1236 = vmatprep.mubr.f32.mxu0 0.0
  %1237 = vmatmul.mubr.f32.gmra.mrb[0].mxu0 %v1170
  %v1238 = vpop.f32.mrb[0].mxu0
  %v1239 = vadd.f32 %v1168, %v1238
  %v1240 = vpop.f32.mrb[0].mxu0
  %1241 = vdwg.mxu0
  %1243 = vrot.lane.b32.xlu0 %v1149, 111
  %v1244 = vpop.permute.xlu0 %1243
  %v1246 = vadd.f32 %v1239, %v1244
  %v1247 = vmin.f32 %v1246, 0.0
  %v1248 = vld [vmem:[%s2 + $0x8a] sm:$0x1]
  %v1249 = vlaneseq
  %v1250 = vshrl.u32 %v1249, 7
  %v1251 = vsub.s32 0, %v1250
  %v1252 = vrot.slane %v1248, %v1251
  %1254 = vrot.lane.b32.xlu0 %v1252, 33
  %v1255 = vpop.permute.xlu0 %1254
  %v1257 = vadd.f32 %v1120, %v1255
  %v1258 = vmin.f32 %v1257, 0.0
  %v1259 = vld [vmem:[%s2 + $0x68] sm:$0xff]
  %v1260 = vld [vmem:[%s2 + $0x70] sm:$0xff]
  %1262 = vrot.lane.b32.xlu0 %v1258, 95
  %v1263 = vpop.permute.xlu0 %1262
  %v1264 = vsel %vm724, %v1263, 0
  %1266 = vmatprep.subr.mxu0 0.0
  %1267 = vmatpush1.msra.mxu0 %v1259
  %1268 = vmatprep.subr.mxu0 0.0
  %1269 = vmatpush1.msra.mxu0 %v1260
  %1270 = vmatprep.subr.mxu0 0.0
  %1271 = vmatpush1.msra.mxu0 0.0
  %1272 = vmatprep.subr.mxu0 0.0
  %1273 = vmatpush1.msra.mxu0 0.0
  %1274 = vmatprep.subr.mxu0 0.0
  %1275 = vmatpush1.msra.mxu0 0.0
  %1276 = vmatprep.subr.mxu0 0.0
  %1277 = vmatpush1.msra.mxu0 0.0
  %1278 = vmatprep.subr.mxu0 0.0
  %1279 = vmatpush1.msra.mxu0 0.0
  %1280 = vmatprep.subr.mxu0 0.0
  %1281 = vmatpush1.msra.mxu0 0.0
  %1282 = vmatprep.subr.mxu0 0.0
  %1283 = vmatpush1.msra.mxu0 0.0
  %1284 = vmatprep.subr.mxu0 0.0
  %1285 = vmatpush1.msra.mxu0 0.0
  %1286 = vmatprep.subr.mxu0 0.0
  %1287 = vmatpush1.msra.mxu0 0.0
  %1288 = vmatprep.subr.mxu0 0.0
  %1289 = vmatpush1.msra.mxu0 0.0
  %1290 = vmatprep.subr.mxu0 0.0
  %1291 = vmatpush1.msra.mxu0 0.0
  %1292 = vmatprep.subr.mxu0 0.0
  %1293 = vmatpush1.msra.mxu0 0.0
  %1294 = vmatprep.subr.mxu0 0.0
  %1295 = vmatpush1.msra.mxu0 0.0
  %1296 = vmatprep.subr.mxu0 0.0
  %1297 = vmatpush1.msra.mxu0 0.0
  %1298 = vmatprep.subr.mxu0 0.0
  %1299 = vmatpush1.msra.mxu0 0.0
  %1300 = vmatprep.subr.mxu0 0.0
  %1301 = vmatpush1.msra.mxu0 0.0
  %1302 = vmatprep.subr.mxu0 0.0
  %1303 = vmatpush1.msra.mxu0 0.0
  %1304 = vmatprep.subr.mxu0 0.0
  %1305 = vmatpush1.msra.mxu0 0.0
  %1306 = vmatprep.subr.mxu0 0.0
  %1307 = vmatpush1.msra.mxu0 0.0
  %1308 = vmatprep.subr.mxu0 0.0
  %1309 = vmatpush1.msra.mxu0 0.0
  %1310 = vmatprep.subr.mxu0 0.0
  %1311 = vmatpush1.msra.mxu0 0.0
  %1312 = vmatprep.subr.mxu0 0.0
  %1313 = vmatpush1.msra.mxu0 0.0
  %1314 = vmatprep.subr.mxu0 0.0
  %1315 = vmatpush1.msra.mxu0 0.0
  %1316 = vmatprep.subr.mxu0 0.0
  %1317 = vmatpush1.msra.mxu0 0.0
  %1318 = vmatprep.subr.mxu0 0.0
  %1319 = vmatpush1.msra.mxu0 0.0
  %1320 = vmatprep.subr.mxu0 0.0
  %1321 = vmatpush1.msra.mxu0 0.0
  %1322 = vmatprep.subr.mxu0 0.0
  %1323 = vmatpush1.msra.mxu0 0.0
  %1324 = vmatprep.subr.mxu0 0.0
  %1325 = vmatpush1.msra.mxu0 0.0
  %1326 = vmatprep.subr.mxu0 0.0
  %1327 = vmatpush1.msra.mxu0 0.0
  %1328 = vmatprep.subr.mxu0 0.0
  %1329 = vmatpush1.msra.mxu0 0.0
  %1330 = vmatprep.mubr.f32.mxu0 0.0
  %1331 = vmatmul.mubr.f32.gmra.mrb[0].mxu0 %v1264
  %v1332 = vpop.f32.mrb[0].mxu0
  %v1333 = vadd.f32 0.0, %v1332
  %v1334 = vpop.f32.mrb[0].mxu0
  %1335 = vdwg.mxu0
  %v1336 = vld [vmem:[%s2 + $0x8f] sm:$0x1]
  %v1337 = vlaneseq
  %v1338 = vshrl.u32 %v1337, 7
  %v1339 = vsub.s32 0, %v1338
  %v1340 = vrot.slane %v1336, %v1339
  %v1341 = vadd.f32 %v1333, %v1340
  %v1342 = vmax.f32 %v1341, 0.0
  %v1343 = vld [vmem:[%s2 + $0x90] sm:$0x1]
  %v1344 = vlaneseq
  %v1345 = vshrl.u32 %v1344, 7
  %v1346 = vsub.s32 0, %v1345
  %v1347 = vrot.slane %v1343, %v1346
  %1349 = vrot.lane.b32.xlu0 %v1347, 16
  %v1350 = vpop.permute.xlu0 %1349
  %v1352 = vadd.f32 %v1333, %v1350
  %v1353 = vld [vmem:[%s2 + $0x91] sm:$0x1]
  %v1354 = vlaneseq
  %v1355 = vshrl.u32 %v1354, 7
  %v1356 = vsub.s32 0, %v1355
  %v1357 = vrot.slane %v1353, %v1356
  %1359 = vrot.lane.b32.xlu0 %v1357, 17
  %v1360 = vpop.permute.xlu0 %1359
  %v1362 = vadd.f32 %v1333, %v1360
  %v1363 = vmul.f32 %v1247, %v1342
  %v1364 = vld [vmem:[%s2 + $0x93] sm:$0x1]
  %v1365 = vlaneseq
  %v1366 = vshrl.u32 %v1365, 7
  %v1367 = vsub.s32 0, %v1366
  %v1368 = vrot.slane %v1364, %v1367
  %v1369 = vmul.f32 %v1363, %v1368
  %v1370 = vsel %vm724, %v1369, 0.0
  %1371 = vadd.xlane.f32.xlu0 %v1370
  %v1372 = vpop.xlane.xlu0 %1371
  %1374 = vrot.lane.b32.xlu0 %v1352, 112
  %v1375 = vpop.permute.xlu0 %1374
  %v1377 = vmul.f32 %v893, %v1375
  %v1378 = vld [vmem:[%s2 + $0x92] sm:$0x1]
  %v1379 = vlaneseq
  %v1380 = vshrl.u32 %v1379, 7
  %v1381 = vsub.s32 0, %v1380
  %v1382 = vrot.slane %v1378, %v1381
  %v1383 = vmul.f32 %v1377, %v1382
  %v1384 = vadd.f32 %v1372, %v1383
  %1386 = vrot.lane.b32.xlu0 %v1362, 111
  %v1387 = vpop.permute.xlu0 %1386
  %v1389 = vadd.f32 %v1384, %v1387
  %vm1390 = vcmask 7168
  %1391 = vst.msk [vmem:[%s3] sm:$0xff] %vm1390, %v1389
  // Predicated region
  $region14: #{tpu_custom_call.1} parent=0 // pred_check
    _
  $region15: #{tpu_custom_call.1} parent=0 // pred_check_branch
    %1393 = sbr.rel (0) target = $region17
  $region16: #{tpu_custom_call.1} parent=0 // pred_region
    _
  $region17: #{tpu_custom_call.1} parent=0 // pred_fallthru
    _
  // Predicated region
  $region18: #{tpu_custom_call.1} parent=0 // pred_check
    _
  $region19: #{tpu_custom_call.1} parent=0 // pred_check_branch
    %1395 = sbr.rel (0) target = $region21
  $region20: #{tpu_custom_call.1} parent=0 // pred_region
    _
  $region21: #{tpu_custom_call.1} parent=0 // pred_fallthru
    _

// kernel: tpu_custom_call.1
$region0: #{tpu_custom_call.1}
  #allocation0 [shape = 'u32[]', space=smem, size = 0x4, offset = 0x4, fixed_abs, tag = 'smem constant byte address 0x4 - core index']
  #allocation1 [shape = 'u32[144,128]{1,0:T(1,128)}', space=vmem, size = 0x12000, scoped, tag = 'internal scratch']
  %s0 = inlined_call_operand.vmem [shape: f32[8,4], index: 0, kind: input, shape index: {}]
  %s1 = inlined_call_operand.vmem [shape: f32[64,1], index: 1, kind: input, shape index: {}]
  %s2 = inlined_call_operand.vmem [shape: f32[152,64], index: 2, kind: input, shape index: {}]
  %s3 = inlined_call_operand.vmem [shape: f32[8,1], index: 3, kind: output, shape index: {}]
  %s4 = sld [smem:[#allocation0]]
  $region22: #{tpu_custom_call.1} parent=0
    _
  %s6 = ssub.s32 1, %s4
  %s7 = scalar_select 0, %s6, %s4
  // Predicated region
  $region2: #{tpu_custom_call.1} parent=0 // pred_check
    _
  $region3: #{tpu_custom_call.1} parent=0 // pred_check_branch
    %9 = sbr.rel (0) target = $region5
  $region4: #{tpu_custom_call.1} parent=0 // pred_region
    _
  $region5: #{tpu_custom_call.1} parent=0 // pred_fallthru
    _
  // Predicated region
  $region6: #{tpu_custom_call.1} parent=0 // pred_check
    _
  $region7: #{tpu_custom_call.1} parent=0 // pred_check_branch
    %11 = sbr.rel (0) target = $region9
  $region8: #{tpu_custom_call.1} parent=0 // pred_region
    _
  $region9: #{tpu_custom_call.1} parent=0 // pred_fallthru
    _
  // Predicated region
  $region10: #{tpu_custom_call.1} parent=0 // pred_check
    _
  $region11: #{tpu_custom_call.1} parent=0 // pred_check_branch
    %13 = sbr.rel (0) target = $region13
  $region12: #{tpu_custom_call.1} parent=0 // pred_region
    _
  $region13: #{tpu_custom_call.1} parent=0 // pred_fallthru
    _
  %v14 = vld [vmem:[%s0] sm:$0xff]
  %v15 = vld [vmem:[%s1] sm:$0xff]
  %v16 = vld [vmem:[%s1 + $0x8] sm:$0xff]
  %v17 = vld [vmem:[%s1 + $0x10] sm:$0xff]
  %v18 = vld [vmem:[%s1 + $0x18] sm:$0xff]
  %v19 = vld [vmem:[%s1 + $0x20] sm:$0xff]
  %v20 = vld [vmem:[%s1 + $0x28] sm:$0xff]
  %v21 = vld [vmem:[%s1 + $0x30] sm:$0xff]
  %v22 = vld [vmem:[%s1 + $0x38] sm:$0xff]
  %v23 = vld [vmem:[%s2 + $0x78] sm:$0x1]
  %25 = vset.pattern.permute.xlu0 0
  %26 = vperm.xlu0 %25, %v15
  %v27 = vpop.permute.xlu0 %26
  %30 = vset.pattern.permute.xlu0 0
  %31 = vperm.xlu0 %30, %v16
  %v32 = vpop.permute.xlu0 %31
  %35 = vset.pattern.permute.xlu0 0
  %36 = vperm.xlu0 %35, %v17
  %v37 = vpop.permute.xlu0 %36
  %40 = vset.pattern.permute.xlu0 0
  %41 = vperm.xlu0 %40, %v18
  %v42 = vpop.permute.xlu0 %41
  %45 = vset.pattern.permute.xlu0 0
  %46 = vperm.xlu0 %45, %v19
  %v47 = vpop.permute.xlu0 %46
  %50 = vset.pattern.permute.xlu0 0
  %51 = vperm.xlu0 %50, %v20
  %v52 = vpop.permute.xlu0 %51
  %55 = vset.pattern.permute.xlu0 0
  %56 = vperm.xlu0 %55, %v21
  %v57 = vpop.permute.xlu0 %56
  %60 = vset.pattern.permute.xlu0 0
  %61 = vperm.xlu0 %60, %v22
  %v62 = vpop.permute.xlu0 %61
  %v64 = vlaneseq
  %v65 = vshrl.u32 %v64, 7
  %v66 = vsub.s32 0, %v65
  %v67 = vrot.slane %v23, %v66
  %v68 = vmul.f32 %v27, %v67
  %v69 = vmul.f32 %v32, %v67
  %v70 = vmul.f32 %v37, %v67
  %v71 = vmul.f32 %v42, %v67
  %v72 = vmul.f32 %v47, %v67
  %v73 = vmul.f32 %v52, %v67
  %v74 = vmul.f32 %v57, %v67
  %v75 = vmul.f32 %v62, %v67
  %v76 = vld [vmem:[%s2 + $0x79] sm:$0x1]
  %v77 = vlaneseq
  %v78 = vshrl.u32 %v77, 7
  %v79 = vsub.s32 0, %v78
  %v80 = vrot.slane %v76, %v79
  %v81 = vadd.f32 %v68, %v80
  %v82 = vadd.f32 %v69, %v80
  %v83 = vadd.f32 %v70, %v80
  %v84 = vadd.f32 %v71, %v80
  %v85 = vadd.f32 %v72, %v80
  %v86 = vadd.f32 %v73, %v80
  %v87 = vadd.f32 %v74, %v80
  %v88 = vadd.f32 %v75, %v80
  %v89 = vmax.f32 %v81, 0.0
  %v90 = vmax.f32 %v82, 0.0
  %v91 = vmax.f32 %v83, 0.0
  %v92 = vmax.f32 %v84, 0.0
  %v93 = vmax.f32 %v85, 0.0
  %v94 = vmax.f32 %v86, 0.0
  %v95 = vmax.f32 %v87, 0.0
  %v96 = vmax.f32 %v88, 0.0
  %v97 = vld [vmem:[%s2] sm:$0xff]
  %v98 = vld [vmem:[%s2 + $0x8] sm:$0xff]
  %v99 = vld [vmem:[%s2 + $0x10] sm:$0xff]
  %v100 = vld [vmem:[%s2 + $0x18] sm:$0xff]
  %v101 = vld [vmem:[%s2 + $0x7a] sm:$0x1]
  %v102 = vlaneseq
  %v103 = vshrl.u32 %v102, 7
  %v104 = vsub.s32 0, %v103
  %v105 = vrot.slane %v101, %v104
  %vm106 = vcmask 261120
  %v108 = vsel %vm106, %v89, 0
  %v111 = vsel %vm106, %v90, 0
  %v114 = vsel %vm106, %v91, 0
  %v117 = vsel %vm106, %v92, 0
  %v120 = vsel %vm106, %v93, 0
  %v123 = vsel %vm106, %v94, 0
  %v126 = vsel %vm106, %v95, 0
  %v129 = vsel %vm106, %v96, 0
  %131 = vmatprep.subr.mxu0 0.0
  %132 = vmatpush1.msra.mxu0 %v97
  %133 = vmatprep.subr.mxu0 0.0
  %134 = vmatpush1.msra.mxu0 %v98
  %135 = vmatprep.subr.mxu0 0.0
  %136 = vmatpush1.msra.mxu0 %v99
  %137 = vmatprep.subr.mxu0 0.0
  %138 = vmatpush1.msra.mxu0 %v100
  %139 = vmatprep.subr.mxu0 0.0
  %140 = vmatpush1.msra.mxu0 0.0
  %141 = vmatprep.subr.mxu0 0.0
  %142 = vmatpush1.msra.mxu0 0.0
  %143 = vmatprep.subr.mxu0 0.0
  %144 = vmatpush1.msra.mxu0 0.0
  %145 = vmatprep.subr.mxu0 0.0
  %146 = vmatpush1.msra.mxu0 0.0
  %147 = vmatprep.subr.mxu0 0.0
  %148 = vmatpush1.msra.mxu0 0.0
  %149 = vmatprep.subr.mxu0 0.0
  %150 = vmatpush1.msra.mxu0 0.0
  %151 = vmatprep.subr.mxu0 0.0
  %152 = vmatpush1.msra.mxu0 0.0
  %153 = vmatprep.subr.mxu0 0.0
  %154 = vmatpush1.msra.mxu0 0.0
  %155 = vmatprep.subr.mxu0 0.0
  %156 = vmatpush1.msra.mxu0 0.0
  %157 = vmatprep.subr.mxu0 0.0
  %158 = vmatpush1.msra.mxu0 0.0
  %159 = vmatprep.subr.mxu0 0.0
  %160 = vmatpush1.msra.mxu0 0.0
  %161 = vmatprep.subr.mxu0 0.0
  %162 = vmatpush1.msra.mxu0 0.0
  %163 = vmatprep.subr.mxu0 0.0
  %164 = vmatpush1.msra.mxu0 0.0
  %165 = vmatprep.subr.mxu0 0.0
  %166 = vmatpush1.msra.mxu0 0.0
  %167 = vmatprep.subr.mxu0 0.0
  %168 = vmatpush1.msra.mxu0 0.0
  %169 = vmatprep.subr.mxu0 0.0
  %170 = vmatpush1.msra.mxu0 0.0
  %171 = vmatprep.subr.mxu0 0.0
  %172 = vmatpush1.msra.mxu0 0.0
  %173 = vmatprep.subr.mxu0 0.0
  %174 = vmatpush1.msra.mxu0 0.0
  %175 = vmatprep.subr.mxu0 0.0
  %176 = vmatpush1.msra.mxu0 0.0
  %177 = vmatprep.subr.mxu0 0.0
  %178 = vmatpush1.msra.mxu0 0.0
  %179 = vmatprep.subr.mxu0 0.0
  %180 = vmatpush1.msra.mxu0 0.0
  %181 = vmatprep.subr.mxu0 0.0
  %182 = vmatpush1.msra.mxu0 0.0
  %183 = vmatprep.subr.mxu0 0.0
  %184 = vmatpush1.msra.mxu0 0.0
  %185 = vmatprep.subr.mxu0 0.0
  %186 = vmatpush1.msra.mxu0 0.0
  %187 = vmatprep.subr.mxu0 0.0
  %188 = vmatpush1.msra.mxu0 0.0
  %189 = vmatprep.subr.mxu0 0.0
  %190 = vmatpush1.msra.mxu0 0.0
  %191 = vmatprep.subr.mxu0 0.0
  %192 = vmatpush1.msra.mxu0 0.0
  %193 = vmatprep.subr.mxu0 0.0
  %194 = vmatpush1.msra.mxu0 0.0
  %195 = vmatprep.mubr.f32.mxu0 0.0
  %196 = vmatmul.mubr.f32.gmra.mrb[0].mxu0 %v108
  %v197 = vpop.f32.mrb[0].mxu0
  %v198 = vadd.f32 %v105, %v197
  %v199 = vpop.f32.mrb[0].mxu0
  %200 = vmatprep.mubr.f32.mxu0 0.0
  %201 = vmatmul.mubr.f32.gmra.mrb[0].mxu0 %v111
  %v202 = vpop.f32.mrb[0].mxu0
  %v203 = vadd.f32 %v105, %v202
  %v204 = vpop.f32.mrb[0].mxu0
  %205 = vmatprep.mubr.f32.mxu0 0.0
  %206 = vmatmul.mubr.f32.gmra.mrb[0].mxu0 %v114
  %v207 = vpop.f32.mrb[0].mxu0
  %v208 = vadd.f32 %v105, %v207
  %v209 = vpop.f32.mrb[0].mxu0
  %210 = vmatprep.mubr.f32.mxu0 0.0
  %211 = vmatmul.mubr.f32.gmra.mrb[0].mxu0 %v117
  %v212 = vpop.f32.mrb[0].mxu0
  %v213 = vadd.f32 %v105, %v212
  %v214 = vpop.f32.mrb[0].mxu0
  %215 = vmatprep.mubr.f32.mxu0 0.0
  %216 = vmatmul.mubr.f32.gmra.mrb[0].mxu0 %v120
  %v217 = vpop.f32.mrb[0].mxu0
  %v218 = vadd.f32 %v105, %v217
  %v219 = vpop.f32.mrb[0].mxu0
  %220 = vmatprep.mubr.f32.mxu0 0.0
  %221 = vmatmul.mubr.f32.gmra.mrb[0].mxu0 %v123
  %v222 = vpop.f32.mrb[0].mxu0
  %v223 = vadd.f32 %v105, %v222
  %v224 = vpop.f32.mrb[0].mxu0
  %225 = vmatprep.mubr.f32.mxu0 0.0
  %226 = vmatmul.mubr.f32.gmra.mrb[0].mxu0 %v126
  %v227 = vpop.f32.mrb[0].mxu0
  %v228 = vadd.f32 %v105, %v227
  %v229 = vpop.f32.mrb[0].mxu0
  %230 = vmatprep.mubr.f32.mxu0 0.0
  %231 = vmatmul.mubr.f32.gmra.mrb[0].mxu0 %v129
  %v232 = vpop.f32.mrb[0].mxu0
  %v233 = vadd.f32 %v105, %v232
  %v234 = vpop.f32.mrb[0].mxu0
  %235 = vdwg.mxu0
  %v236 = vmax.f32 %v198, 0.0
  %v237 = vmax.f32 %v203, 0.0
  %v238 = vmax.f32 %v208, 0.0
  %v239 = vmax.f32 %v213, 0.0
  %v240 = vmax.f32 %v218, 0.0
  %v241 = vmax.f32 %v223, 0.0
  %v242 = vmax.f32 %v228, 0.0
  %v243 = vmax.f32 %v233, 0.0
  %v244 = vld [vmem:[%s2 + $0x20] sm:$0xff]
  %v245 = vld [vmem:[%s2 + $0x28] sm:$0xff]
  %v246 = vld [vmem:[%s2 + $0x30] sm:$0xff]
  %v247 = vld [vmem:[%s2 + $0x38] sm:$0xff]
  %v248 = vld [vmem:[%s2 + $0x7b] sm:$0x1]
  %v249 = vlaneseq
  %v250 = vshrl.u32 %v249, 7
  %v251 = vsub.s32 0, %v250
  %v252 = vrot.slane %v248, %v251
  %v254 = vsel %vm106, %v236, 0
  %v257 = vsel %vm106, %v237, 0
  %v260 = vsel %vm106, %v238, 0
  %v263 = vsel %vm106, %v239, 0
  %v266 = vsel %vm106, %v240, 0
  %v269 = vsel %vm106, %v241, 0
  %v272 = vsel %vm106, %v242, 0
  %v275 = vsel %vm106, %v243, 0
  %277 = vmatprep.subr.mxu0 0.0
  %278 = vmatpush1.msra.mxu0 %v244
  %279 = vmatprep.subr.mxu0 0.0
  %280 = vmatpush1.msra.mxu0 %v245
  %281 = vmatprep.subr.mxu0 0.0
  %282 = vmatpush1.msra.mxu0 %v246
  %283 = vmatprep.subr.mxu0 0.0
  %284 = vmatpush1.msra.mxu0 %v247
  %285 = vmatprep.subr.mxu0 0.0
  %286 = vmatpush1.msra.mxu0 0.0
  %287 = vmatprep.subr.mxu0 0.0
  %288 = vmatpush1.msra.mxu0 0.0
  %289 = vmatprep.subr.mxu0 0.0
  %290 = vmatpush1.msra.mxu0 0.0
  %291 = vmatprep.subr.mxu0 0.0
  %292 = vmatpush1.msra.mxu0 0.0
  %293 = vmatprep.subr.mxu0 0.0
  %294 = vmatpush1.msra.mxu0 0.0
  %295 = vmatprep.subr.mxu0 0.0
  %296 = vmatpush1.msra.mxu0 0.0
  %297 = vmatprep.subr.mxu0 0.0
  %298 = vmatpush1.msra.mxu0 0.0
  %299 = vmatprep.subr.mxu0 0.0
  %300 = vmatpush1.msra.mxu0 0.0
  %301 = vmatprep.subr.mxu0 0.0
  %302 = vmatpush1.msra.mxu0 0.0
  %303 = vmatprep.subr.mxu0 0.0
  %304 = vmatpush1.msra.mxu0 0.0
  %305 = vmatprep.subr.mxu0 0.0
  %306 = vmatpush1.msra.mxu0 0.0
  %307 = vmatprep.subr.mxu0 0.0
  %308 = vmatpush1.msra.mxu0 0.0
  %309 = vmatprep.subr.mxu0 0.0
  %310 = vmatpush1.msra.mxu0 0.0
  %311 = vmatprep.subr.mxu0 0.0
  %312 = vmatpush1.msra.mxu0 0.0
  %313 = vmatprep.subr.mxu0 0.0
  %314 = vmatpush1.msra.mxu0 0.0
  %315 = vmatprep.subr.mxu0 0.0
  %316 = vmatpush1.msra.mxu0 0.0
  %317 = vmatprep.subr.mxu0 0.0
  %318 = vmatpush1.msra.mxu0 0.0
  %319 = vmatprep.subr.mxu0 0.0
  %320 = vmatpush1.msra.mxu0 0.0
  %321 = vmatprep.subr.mxu0 0.0
  %322 = vmatpush1.msra.mxu0 0.0
  %323 = vmatprep.subr.mxu0 0.0
  %324 = vmatpush1.msra.mxu0 0.0
  %325 = vmatprep.subr.mxu0 0.0
  %326 = vmatpush1.msra.mxu0 0.0
  %327 = vmatprep.subr.mxu0 0.0
  %328 = vmatpush1.msra.mxu0 0.0
  %329 = vmatprep.subr.mxu0 0.0
  %330 = vmatpush1.msra.mxu0 0.0
  %331 = vmatprep.subr.mxu0 0.0
  %332 = vmatpush1.msra.mxu0 0.0
  %333 = vmatprep.subr.mxu0 0.0
  %334 = vmatpush1.msra.mxu0 0.0
  %335 = vmatprep.subr.mxu0 0.0
  %336 = vmatpush1.msra.mxu0 0.0
  %337 = vmatprep.subr.mxu0 0.0
  %338 = vmatpush1.msra.mxu0 0.0
  %339 = vmatprep.subr.mxu0 0.0
  %340 = vmatpush1.msra.mxu0 0.0
  %341 = vmatprep.mubr.f32.mxu0 0.0
  %342 = vmatmul.mubr.f32.gmra.mrb[0].mxu0 %v254
  %v343 = vpop.f32.mrb[0].mxu0
  %v344 = vadd.f32 %v252, %v343
  %v345 = vpop.f32.mrb[0].mxu0
  %346 = vmatprep.mubr.f32.mxu0 0.0
  %347 = vmatmul.mubr.f32.gmra.mrb[0].mxu0 %v257
  %v348 = vpop.f32.mrb[0].mxu0
  %v349 = vadd.f32 %v252, %v348
  %v350 = vpop.f32.mrb[0].mxu0
  %351 = vmatprep.mubr.f32.mxu0 0.0
  %352 = vmatmul.mubr.f32.gmra.mrb[0].mxu0 %v260
  %v353 = vpop.f32.mrb[0].mxu0
  %v354 = vadd.f32 %v252, %v353
  %v355 = vpop.f32.mrb[0].mxu0
  %356 = vmatprep.mubr.f32.mxu0 0.0
  %357 = vmatmul.mubr.f32.gmra.mrb[0].mxu0 %v263
  %v358 = vpop.f32.mrb[0].mxu0
  %v359 = vadd.f32 %v252, %v358
  %v360 = vpop.f32.mrb[0].mxu0
  %361 = vmatprep.mubr.f32.mxu0 0.0
  %362 = vmatmul.mubr.f32.gmra.mrb[0].mxu0 %v266
  %v363 = vpop.f32.mrb[0].mxu0
  %v364 = vadd.f32 %v252, %v363
  %v365 = vpop.f32.mrb[0].mxu0
  %366 = vmatprep.mubr.f32.mxu0 0.0
  %367 = vmatmul.mubr.f32.gmra.mrb[0].mxu0 %v269
  %v368 = vpop.f32.mrb[0].mxu0
  %v369 = vadd.f32 %v252, %v368
  %v370 = vpop.f32.mrb[0].mxu0
  %371 = vmatprep.mubr.f32.mxu0 0.0
  %372 = vmatmul.mubr.f32.gmra.mrb[0].mxu0 %v272
  %v373 = vpop.f32.mrb[0].mxu0
  %v374 = vadd.f32 %v252, %v373
  %v375 = vpop.f32.mrb[0].mxu0
  %376 = vmatprep.mubr.f32.mxu0 0.0
  %377 = vmatmul.mubr.f32.gmra.mrb[0].mxu0 %v275
  %v378 = vpop.f32.mrb[0].mxu0
  %v379 = vadd.f32 %v252, %v378
  %v380 = vpop.f32.mrb[0].mxu0
  %381 = vdwg.mxu0
  %v382 = vand.u32 2147483647, %v344
  %v383 = vand.u32 2147483647, %v349
  %v384 = vand.u32 2147483647, %v354
  %v385 = vand.u32 2147483647, %v359
  %v386 = vand.u32 2147483647, %v364
  %v387 = vand.u32 2147483647, %v369
  %v388 = vand.u32 2147483647, %v374
  %v389 = vand.u32 2147483647, %v379
  %v390 = vsub.f32 0.0, %v382
  %v391 = vsub.f32 0.0, %v383
  %v392 = vsub.f32 0.0, %v384
  %v393 = vsub.f32 0.0, %v385
  %v394 = vsub.f32 0.0, %v386
  %v395 = vsub.f32 0.0, %v387
  %v396 = vsub.f32 0.0, %v388
  %v397 = vsub.f32 0.0, %v389
  %v398 = vmul.f32 %v390, 1.442695
  %v399 = vpow.pop %v398
  %v400 = vmul.f32 %v391, 1.442695
  %v401 = vpow.pop %v400
  %v402 = vmul.f32 %v392, 1.442695
  %v403 = vpow.pop %v402
  %v404 = vmul.f32 %v393, 1.442695
  %v405 = vpow.pop %v404
  %v406 = vmul.f32 %v394, 1.442695
  %v407 = vpow.pop %v406
  %v408 = vmul.f32 %v395, 1.442695
  %v409 = vpow.pop %v408
  %v410 = vmul.f32 %v396, 1.442695
  %v411 = vpow.pop %v410
  %v412 = vmul.f32 %v397, 1.442695
  %v413 = vpow.pop %v412
  %v414 = vadd.f32 %v399, 1.0
  %v415 = vlog2.pop %v414
  %v416 = vmul.f32 %v415, 0.6931472
  %v417 = vmul.f32 -0.5, %v399
  %v418 = vadd.f32 %v417, 1.0
  %v419 = vmul.f32 %v418, %v399
  %v420 = vand.u32 2147483647, %v399
  %vm421 = vcmp.lt.f32.partialorder %v420, 0.0004427343
  %v422 = vsel %vm421, %v419, %v416
  %v423 = vadd.f32 %v401, 1.0
  %v424 = vlog2.pop %v423
  %v425 = vmul.f32 %v424, 0.6931472
  %v426 = vmul.f32 -0.5, %v401
  %v427 = vadd.f32 %v426, 1.0
  %v428 = vmul.f32 %v427, %v401
  %v429 = vand.u32 2147483647, %v401
  %vm430 = vcmp.lt.f32.partialorder %v429, 0.0004427343
  %v431 = vsel %vm430, %v428, %v425
  %v432 = vadd.f32 %v403, 1.0
  %v433 = vlog2.pop %v432
  %v434 = vmul.f32 %v433, 0.6931472
  %v435 = vmul.f32 -0.5, %v403
  %v436 = vadd.f32 %v435, 1.0
  %v437 = vmul.f32 %v436, %v403
  %v438 = vand.u32 2147483647, %v403
  %vm439 = vcmp.lt.f32.partialorder %v438, 0.0004427343
  %v440 = vsel %vm439, %v437, %v434
  %v441 = vadd.f32 %v405, 1.0
  %v442 = vlog2.pop %v441
  %v443 = vmul.f32 %v442, 0.6931472
  %v444 = vmul.f32 -0.5, %v405
  %v445 = vadd.f32 %v444, 1.0
  %v446 = vmul.f32 %v445, %v405
  %v447 = vand.u32 2147483647, %v405
  %vm448 = vcmp.lt.f32.partialorder %v447, 0.0004427343
  %v449 = vsel %vm448, %v446, %v443
  %v450 = vadd.f32 %v407, 1.0
  %v451 = vlog2.pop %v450
  %v452 = vmul.f32 %v451, 0.6931472
  %v453 = vmul.f32 -0.5, %v407
  %v454 = vadd.f32 %v453, 1.0
  %v455 = vmul.f32 %v454, %v407
  %v456 = vand.u32 2147483647, %v407
  %vm457 = vcmp.lt.f32.partialorder %v456, 0.0004427343
  %v458 = vsel %vm457, %v455, %v452
  %v459 = vadd.f32 %v409, 1.0
  %v460 = vlog2.pop %v459
  %v461 = vmul.f32 %v460, 0.6931472
  %v462 = vmul.f32 -0.5, %v409
  %v463 = vadd.f32 %v462, 1.0
  %v464 = vmul.f32 %v463, %v409
  %v465 = vand.u32 2147483647, %v409
  %vm466 = vcmp.lt.f32.partialorder %v465, 0.0004427343
  %v467 = vsel %vm466, %v464, %v461
  %v468 = vadd.f32 %v411, 1.0
  %v469 = vlog2.pop %v468
  %v470 = vmul.f32 %v469, 0.6931472
  %v471 = vmul.f32 -0.5, %v411
  %v472 = vadd.f32 %v471, 1.0
  %v473 = vmul.f32 %v472, %v411
  %v474 = vand.u32 2147483647, %v411
  %vm475 = vcmp.lt.f32.partialorder %v474, 0.0004427343
  %v476 = vsel %vm475, %v473, %v470
  %v477 = vadd.f32 %v413, 1.0
  %v478 = vlog2.pop %v477
  %v479 = vmul.f32 %v478, 0.6931472
  %v480 = vmul.f32 -0.5, %v413
  %v481 = vadd.f32 %v480, 1.0
  %v482 = vmul.f32 %v481, %v413
  %v483 = vand.u32 2147483647, %v413
  %vm484 = vcmp.lt.f32.partialorder %v483, 0.0004427343
  %v485 = vsel %vm484, %v482, %v479
  %v486 = vmax.f32 %v344, 0.0
  %v487 = vmax.f32 %v349, 0.0
  %v488 = vmax.f32 %v354, 0.0
  %v489 = vmax.f32 %v359, 0.0
  %v490 = vmax.f32 %v364, 0.0
  %v491 = vmax.f32 %v369, 0.0
  %v492 = vmax.f32 %v374, 0.0
  %v493 = vmax.f32 %v379, 0.0
  %v494 = vadd.f32 %v422, %v486
  %v495 = vadd.f32 %v431, %v487
  %v496 = vadd.f32 %v440, %v488
  %v497 = vadd.f32 %v449, %v489
  %v498 = vadd.f32 %v458, %v490
  %v499 = vadd.f32 %v467, %v491
  %v500 = vadd.f32 %v476, %v492
  %v501 = vadd.f32 %v485, %v493
  %vm502 = vcmask 23552
  %v503 = vsel %vm502, %v494, 0.0
  %v504 = vrot.slane %v503, 4
  %v505 = vadd.f32 %v503, %v504
  %v506 = vrot.slane %v505, 2
  %v507 = vadd.f32 %v505, %v506
  %v508 = vrot.slane %v507, 1
  %v509 = vadd.f32 %v507, %v508
  %v510 = vsel %vm502, %v495, 0.0
  %v511 = vrot.slane %v510, 4
  %v512 = vadd.f32 %v510, %v511
  %v513 = vrot.slane %v512, 2
  %v514 = vadd.f32 %v512, %v513
  %v515 = vrot.slane %v514, 1
  %v516 = vadd.f32 %v514, %v515
  %v517 = vsel %vm502, %v496, 0.0
  %v518 = vrot.slane %v517, 4
  %v519 = vadd.f32 %v517, %v518
  %v520 = vrot.slane %v519, 2
  %v521 = vadd.f32 %v519, %v520
  %v522 = vrot.slane %v521, 1
  %v523 = vadd.f32 %v521, %v522
  %v524 = vsel %vm502, %v497, 0.0
  %v525 = vrot.slane %v524, 4
  %v526 = vadd.f32 %v524, %v525
  %v527 = vrot.slane %v526, 2
  %v528 = vadd.f32 %v526, %v527
  %v529 = vrot.slane %v528, 1
  %v530 = vadd.f32 %v528, %v529
  %v531 = vsel %vm502, %v498, 0.0
  %v532 = vrot.slane %v531, 4
  %v533 = vadd.f32 %v531, %v532
  %v534 = vrot.slane %v533, 2
  %v535 = vadd.f32 %v533, %v534
  %v536 = vrot.slane %v535, 1
  %v537 = vadd.f32 %v535, %v536
  %v538 = vsel %vm502, %v499, 0.0
  %v539 = vrot.slane %v538, 4
  %v540 = vadd.f32 %v538, %v539
  %v541 = vrot.slane %v540, 2
  %v542 = vadd.f32 %v540, %v541
  %v543 = vrot.slane %v542, 1
  %v544 = vadd.f32 %v542, %v543
  %v545 = vsel %vm502, %v500, 0.0
  %v546 = vrot.slane %v545, 4
  %v547 = vadd.f32 %v545, %v546
  %v548 = vrot.slane %v547, 2
  %v549 = vadd.f32 %v547, %v548
  %v550 = vrot.slane %v549, 1
  %v551 = vadd.f32 %v549, %v550
  %v552 = vsel %vm502, %v501, 0.0
  %v553 = vrot.slane %v552, 4
  %v554 = vadd.f32 %v552, %v553
  %v555 = vrot.slane %v554, 2
  %v556 = vadd.f32 %v554, %v555
  %v557 = vrot.slane %v556, 1
  %v558 = vadd.f32 %v556, %v557
  %v559 = vmul.f32 %v509, 0.5
  %v560 = vmul.f32 %v516, 0.5
  %v561 = vmul.f32 %v523, 0.5
  %v562 = vmul.f32 %v530, 0.5
  %v563 = vmul.f32 %v537, 0.5
  %v564 = vmul.f32 %v544, 0.5
  %v565 = vmul.f32 %v551, 0.5
  %v566 = vmul.f32 %v558, 0.5
  %575 = vrot.lane.b32.xlu0 %v559, 1
  %v576 = vpop.permute.xlu0 %575
  %577 = vrot.lane.b32.xlu0 %v560, 1
  %v578 = vpop.permute.xlu0 %577
  %579 = vrot.lane.b32.xlu0 %v561, 1
  %v580 = vpop.permute.xlu0 %579
  %581 = vrot.lane.b32.xlu0 %v562, 1
  %v582 = vpop.permute.xlu0 %581
  %583 = vrot.lane.b32.xlu0 %v563, 1
  %v584 = vpop.permute.xlu0 %583
  %585 = vrot.lane.b32.xlu0 %v564, 1
  %v586 = vpop.permute.xlu0 %585
  %587 = vrot.lane.b32.xlu0 %v565, 1
  %v588 = vpop.permute.xlu0 %587
  %589 = vrot.lane.b32.xlu0 %v566, 1
  %v590 = vpop.permute.xlu0 %589
  %v599 = vadd.f32 %v559, %v576
  %v600 = vadd.f32 %v560, %v578
  %v601 = vadd.f32 %v561, %v580
  %v602 = vadd.f32 %v562, %v582
  %v603 = vadd.f32 %v563, %v584
  %v604 = vadd.f32 %v564, %v586
  %v605 = vadd.f32 %v565, %v588
  %v606 = vadd.f32 %v566, %v590
  %v607 = vld [vmem:[%s2 + $0x7c] sm:$0x1]
  %609 = vset.pattern.permute.xlu0 1
  %610 = vperm.xlu0 %609, %v599
  %v611 = vpop.permute.xlu0 %610
  %614 = vset.pattern.permute.xlu0 1
  %615 = vperm.xlu0 %614, %v600
  %v616 = vpop.permute.xlu0 %615
  %619 = vset.pattern.permute.xlu0 1
  %620 = vperm.xlu0 %619, %v601
  %v621 = vpop.permute.xlu0 %620
  %624 = vset.pattern.permute.xlu0 1
  %625 = vperm.xlu0 %624, %v602
  %v626 = vpop.permute.xlu0 %625
  %629 = vset.pattern.permute.xlu0 1
  %630 = vperm.xlu0 %629, %v603
  %v631 = vpop.permute.xlu0 %630
  %634 = vset.pattern.permute.xlu0 1
  %635 = vperm.xlu0 %634, %v604
  %v636 = vpop.permute.xlu0 %635
  %639 = vset.pattern.permute.xlu0 1
  %640 = vperm.xlu0 %639, %v605
  %v641 = vpop.permute.xlu0 %640
  %644 = vset.pattern.permute.xlu0 1
  %645 = vperm.xlu0 %644, %v606
  %v646 = vpop.permute.xlu0 %645
  %v648 = vlaneseq
  %v649 = vshrl.u32 %v648, 7
  %v650 = vsub.s32 0, %v649
  %v651 = vrot.slane %v607, %v650
  %v652 = vmul.f32 %v611, %v651
  %v653 = vmul.f32 %v616, %v651
  %v654 = vmul.f32 %v621, %v651
  %v655 = vmul.f32 %v626, %v651
  %v656 = vmul.f32 %v631, %v651
  %v657 = vmul.f32 %v636, %v651
  %v658 = vmul.f32 %v641, %v651
  %v659 = vmul.f32 %v646, %v651
  %v660 = vld [vmem:[%s2 + $0x7d] sm:$0x1]
  %v661 = vlaneseq
  %v662 = vshrl.u32 %v661, 7
  %v663 = vsub.s32 0, %v662
  %v664 = vrot.slane %v660, %v663
  %v665 = vadd.f32 %v652, %v664
  %v666 = vadd.f32 %v653, %v664
  %v667 = vadd.f32 %v654, %v664
  %v668 = vadd.f32 %v655, %v664
  %v669 = vadd.f32 %v656, %v664
  %v670 = vadd.f32 %v657, %v664
  %v671 = vadd.f32 %v658, %v664
  %v672 = vadd.f32 %v659, %v664
  %v673 = vmin.f32 %v665, 0.0
  %v674 = vmin.f32 %v666, 0.0
  %v675 = vmin.f32 %v667, 0.0
  %v676 = vmin.f32 %v668, 0.0
  %v677 = vmin.f32 %v669, 0.0
  %v678 = vmin.f32 %v670, 0.0
  %v679 = vmin.f32 %v671, 0.0
  %v680 = vmin.f32 %v672, 0.0
  %v681 = vld [vmem:[%s2 + $0x7e] sm:$0x1]
  %v682 = vlaneseq
  %v683 = vshrl.u32 %v682, 7
  %v684 = vsub.s32 0, %v683
  %v685 = vrot.slane %v681, %v684
  %v686 = vmul.f32 %v673, %v685
  %v687 = vmul.f32 %v674, %v685
  %v688 = vmul.f32 %v675, %v685
  %v689 = vmul.f32 %v676, %v685
  %v690 = vmul.f32 %v677, %v685
  %v691 = vmul.f32 %v678, %v685
  %v692 = vmul.f32 %v679, %v685
  %v693 = vmul.f32 %v680, %v685
  %v702 = vrot.slane %v687, 7
  %vm703 = vcmask 1041409
  %v704 = vsel %vm703, %v702, %v686
  %v705 = vrot.slane %v688, 6
  %vm706 = vcmask 1042434
  %v707 = vsel %vm706, %v705, %v704
  %v708 = vrot.slane %v689, 5
  %vm709 = vcmask 1043459
  %v710 = vsel %vm709, %v708, %v707
  %v711 = vrot.slane %v690, 4
  %vm712 = vcmask 1044484
  %v713 = vsel %vm712, %v711, %v710
  %v714 = vrot.slane %v691, 3
  %vm715 = vcmask 1045509
  %v716 = vsel %vm715, %v714, %v713
  %v717 = vrot.slane %v692, 2
  %vm718 = vcmask 1046534
  %v719 = vsel %vm718, %v717, %v716
  %v720 = vrot.slane %v693, 1
  %vm721 = vcmask 1047559
  %v722 = vsel %vm721, %v720, %v719
  %vm724 = vcmask 130048
  %v725 = vsel %vm724, %v722, 0.0
  %726 = vadd.xlane.f32.xlu0 %v725
  %v727 = vpop.xlane.xlu0 %726
  %v728 = vld [vmem:[%s2 + $0x7f] sm:$0x1]
  %v729 = vlaneseq
  %v730 = vshrl.u32 %v729, 7
  %v731 = vsub.s32 0, %v730
  %v732 = vrot.slane %v728, %v731
  %v733 = vadd.f32 %v727, %v732
  %v734 = vmul.f32 %v733, 0.5
  %v736 = vrot.slane %v734, 1
  %v737 = vrot.slane %v734, 2
  %v738 = vrot.slane %v734, 3
  %v739 = vrot.slane %v734, 4
  %v740 = vrot.slane %v734, 5
  %v741 = vrot.slane %v734, 6
  %v742 = vrot.slane %v734, 7
  %743 = vrot.lane.b32.xlu0 %v734, 2
  %v744 = vpop.permute.xlu0 %743
  %745 = vrot.lane.b32.xlu0 %v736, 2
  %v746 = vpop.permute.xlu0 %745
  %747 = vrot.lane.b32.xlu0 %v737, 2
  %v748 = vpop.permute.xlu0 %747
  %749 = vrot.lane.b32.xlu0 %v738, 2
  %v750 = vpop.permute.xlu0 %749
  %751 = vrot.lane.b32.xlu0 %v739, 2
  %v752 = vpop.permute.xlu0 %751
  %753 = vrot.lane.b32.xlu0 %v740, 2
  %v754 = vpop.permute.xlu0 %753
  %755 = vrot.lane.b32.xlu0 %v741, 2
  %v756 = vpop.permute.xlu0 %755
  %757 = vrot.lane.b32.xlu0 %v742, 2
  %v758 = vpop.permute.xlu0 %757
  %v767 = vadd.f32 %v559, %v744
  %v768 = vadd.f32 %v560, %v746
  %v769 = vadd.f32 %v561, %v748
  %v770 = vadd.f32 %v562, %v750
  %v771 = vadd.f32 %v563, %v752
  %v772 = vadd.f32 %v564, %v754
  %v773 = vadd.f32 %v565, %v756
  %v774 = vadd.f32 %v566, %v758
  %v775 = vld [vmem:[%s2 + $0x80] sm:$0x1]
  %777 = vset.pattern.permute.xlu0 2
  %778 = vperm.xlu0 %777, %v767
  %v779 = vpop.permute.xlu0 %778
  %782 = vset.pattern.permute.xlu0 2
  %783 = vperm.xlu0 %782, %v768
  %v784 = vpop.permute.xlu0 %783
  %787 = vset.pattern.permute.xlu0 2
  %788 = vperm.xlu0 %787, %v769
  %v789 = vpop.permute.xlu0 %788
  %792 = vset.pattern.permute.xlu0 2
  %793 = vperm.xlu0 %792, %v770
  %v794 = vpop.permute.xlu0 %793
  %797 = vset.pattern.permute.xlu0 2
  %798 = vperm.xlu0 %797, %v771
  %v799 = vpop.permute.xlu0 %798
  %802 = vset.pattern.permute.xlu0 2
  %803 = vperm.xlu0 %802, %v772
  %v804 = vpop.permute.xlu0 %803
  %807 = vset.pattern.permute.xlu0 2
  %808 = vperm.xlu0 %807, %v773
  %v809 = vpop.permute.xlu0 %808
  %812 = vset.pattern.permute.xlu0 2
  %813 = vperm.xlu0 %812, %v774
  %v814 = vpop.permute.xlu0 %813
  %v816 = vlaneseq
  %v817 = vshrl.u32 %v816, 7
  %v818 = vsub.s32 0, %v817
  %v819 = vrot.slane %v775, %v818
  %v820 = vmul.f32 %v779, %v819
  %v821 = vmul.f32 %v784, %v819
  %v822 = vmul.f32 %v789, %v819
  %v823 = vmul.f32 %v794, %v819
  %v824 = vmul.f32 %v799, %v819
  %v825 = vmul.f32 %v804, %v819
  %v826 = vmul.f32 %v809, %v819
  %v827 = vmul.f32 %v814, %v819
  %v828 = vld [vmem:[%s2 + $0x81] sm:$0x1]
  %v829 = vlaneseq
  %v830 = vshrl.u32 %v829, 7
  %v831 = vsub.s32 0, %v830
  %v832 = vrot.slane %v828, %v831
  %v833 = vadd.f32 %v820, %v832
  %v834 = vadd.f32 %v821, %v832
  %v835 = vadd.f32 %v822, %v832
  %v836 = vadd.f32 %v823, %v832
  %v837 = vadd.f32 %v824, %v832
  %v838 = vadd.f32 %v825, %v832
  %v839 = vadd.f32 %v826, %v832
  %v840 = vadd.f32 %v827, %v832
  %v841 = vmin.f32 %v833, 0.0
  %v842 = vmin.f32 %v834, 0.0
  %v843 = vmin.f32 %v835, 0.0
  %v844 = vmin.f32 %v836, 0.0
  %v845 = vmin.f32 %v837, 0.0
  %v846 = vmin.f32 %v838, 0.0
  %v847 = vmin.f32 %v839, 0.0
  %v848 = vmin.f32 %v840, 0.0
  %v849 = vld [vmem:[%s2 + $0x82] sm:$0x1]
  %v850 = vlaneseq
  %v851 = vshrl.u32 %v850, 7
  %v852 = vsub.s32 0, %v851
  %v853 = vrot.slane %v849, %v852
  %v854 = vmul.f32 %v841, %v853
  %v855 = vmul.f32 %v842, %v853
  %v856 = vmul.f32 %v843, %v853
  %v857 = vmul.f32 %v844, %v853
  %v858 = vmul.f32 %v845, %v853
  %v859 = vmul.f32 %v846, %v853
  %v860 = vmul.f32 %v847, %v853
  %v861 = vmul.f32 %v848, %v853
  %v870 = vrot.slane %v855, 7
  %v871 = vsel %vm703, %v870, %v854
  %v872 = vrot.slane %v856, 6
  %v873 = vsel %vm706, %v872, %v871
  %v874 = vrot.slane %v857, 5
  %v875 = vsel %vm709, %v874, %v873
  %v876 = vrot.slane %v858, 4
  %v877 = vsel %vm712, %v876, %v875
  %v878 = vrot.slane %v859, 3
  %v879 = vsel %vm715, %v878, %v877
  %v880 = vrot.slane %v860, 2
  %v881 = vsel %vm718, %v880, %v879
  %v882 = vrot.slane %v861, 1
  %v883 = vsel %vm721, %v882, %v881
  %v885 = vsel %vm724, %v883, 0.0
  %886 = vadd.xlane.f32.xlu0 %v885
  %v887 = vpop.xlane.xlu0 %886
  %v888 = vld [vmem:[%s2 + $0x83] sm:$0x1]
  %v889 = vlaneseq
  %v890 = vshrl.u32 %v889, 7
  %v891 = vsub.s32 0, %v890
  %v892 = vrot.slane %v888, %v891
  %v893 = vadd.f32 %v887, %v892
  %v894 = vld [vmem:[%s2 + $0x40] sm:$0xf]
  %vm895 = vcmask 31744
  %v897 = vsel %vm895, %v14, 0
  %vm899 = vcmask 1043456
  %v901 = vsel %vm899, %v894, 0
  %903 = vmatprep.subr.mxu0 0.0
  %904 = vmatpush1.msra.mxu0 %v901
  %905 = vmatprep.subr.mxu0 0.0
  %906 = vmatpush1.msra.mxu0 0.0
  %907 = vmatprep.subr.mxu0 0.0
  %908 = vmatpush1.msra.mxu0 0.0
  %909 = vmatprep.subr.mxu0 0.0
  %910 = vmatpush1.msra.mxu0 0.0
  %911 = vmatprep.subr.mxu0 0.0
  %912 = vmatpush1.msra.mxu0 0.0
  %913 = vmatprep.subr.mxu0 0.0
  %914 = vmatpush1.msra.mxu0 0.0
  %915 = vmatprep.subr.mxu0 0.0
  %916 = vmatpush1.msra.mxu0 0.0
  %917 = vmatprep.subr.mxu0 0.0
  %918 = vmatpush1.msra.mxu0 0.0
  %919 = vmatprep.subr.mxu0 0.0
  %920 = vmatpush1.msra.mxu0 0.0
  %921 = vmatprep.subr.mxu0 0.0
  %922 = vmatpush1.msra.mxu0 0.0
  %923 = vmatprep.subr.mxu0 0.0
  %924 = vmatpush1.msra.mxu0 0.0
  %925 = vmatprep.subr.mxu0 0.0
  %926 = vmatpush1.msra.mxu0 0.0
  %927 = vmatprep.subr.mxu0 0.0
  %928 = vmatpush1.msra.mxu0 0.0
  %929 = vmatprep.subr.mxu0 0.0
  %930 = vmatpush1.msra.mxu0 0.0
  %931 = vmatprep.subr.mxu0 0.0
  %932 = vmatpush1.msra.mxu0 0.0
  %933 = vmatprep.subr.mxu0 0.0
  %934 = vmatpush1.msra.mxu0 0.0
  %935 = vmatprep.subr.mxu0 0.0
  %936 = vmatpush1.msra.mxu0 0.0
  %937 = vmatprep.subr.mxu0 0.0
  %938 = vmatpush1.msra.mxu0 0.0
  %939 = vmatprep.subr.mxu0 0.0
  %940 = vmatpush1.msra.mxu0 0.0
  %941 = vmatprep.subr.mxu0 0.0
  %942 = vmatpush1.msra.mxu0 0.0
  %943 = vmatprep.subr.mxu0 0.0
  %944 = vmatpush1.msra.mxu0 0.0
  %945 = vmatprep.subr.mxu0 0.0
  %946 = vmatpush1.msra.mxu0 0.0
  %947 = vmatprep.subr.mxu0 0.0
  %948 = vmatpush1.msra.mxu0 0.0
  %949 = vmatprep.subr.mxu0 0.0
  %950 = vmatpush1.msra.mxu0 0.0
  %951 = vmatprep.subr.mxu0 0.0
  %952 = vmatpush1.msra.mxu0 0.0
  %953 = vmatprep.subr.mxu0 0.0
  %954 = vmatpush1.msra.mxu0 0.0
  %955 = vmatprep.subr.mxu0 0.0
  %956 = vmatpush1.msra.mxu0 0.0
  %957 = vmatprep.subr.mxu0 0.0
  %958 = vmatpush1.msra.mxu0 0.0
  %959 = vmatprep.subr.mxu0 0.0
  %960 = vmatpush1.msra.mxu0 0.0
  %961 = vmatprep.subr.mxu0 0.0
  %962 = vmatpush1.msra.mxu0 0.0
  %963 = vmatprep.subr.mxu0 0.0
  %964 = vmatpush1.msra.mxu0 0.0
  %965 = vmatprep.subr.mxu0 0.0
  %966 = vmatpush1.msra.mxu0 0.0
  %967 = vmatprep.mubr.f32.mxu0 0.0
  %968 = vmatmul.mubr.f32.gmra.mrb[0].mxu0 %v897
  %v969 = vpop.f32.mrb[0].mxu0
  %v970 = vadd.f32 0.0, %v969
  %v971 = vpop.f32.mrb[0].mxu0
  %972 = vdwg.mxu0
  %v973 = vld [vmem:[%s2 + $0x85] sm:$0x1]
  %v974 = vlaneseq
  %v975 = vshrl.u32 %v974, 7
  %v976 = vsub.s32 0, %v975
  %v977 = vrot.slane %v973, %v976
  %v978 = vadd.f32 %v970, %v977
  %v979 = vmax.f32 %v978, 0.0
  %v980 = vld [vmem:[%s2 + $0x86] sm:$0x1]
  %v981 = vlaneseq
  %v982 = vshrl.u32 %v981, 7
  %v983 = vsub.s32 0, %v982
  %v984 = vrot.slane %v980, %v983
  %986 = vrot.lane.b32.xlu0 %v984, 1
  %v987 = vpop.permute.xlu0 %986
  %v989 = vadd.f32 %v970, %v987
  %v990 = vld [vmem:[%s2 + $0x87] sm:$0x1]
  %v991 = vlaneseq
  %v992 = vshrl.u32 %v991, 7
  %v993 = vsub.s32 0, %v992
  %v994 = vrot.slane %v990, %v993
  %996 = vrot.lane.b32.xlu0 %v994, 2
  %v997 = vpop.permute.xlu0 %996
  %v999 = vadd.f32 %v970, %v997
  %v1000 = vmul.f32 %v893, %v979
  %v1001 = vld [vmem:[%s2 + $0x89] sm:$0x1]
  %1003 = vset.pattern.permute.xlu0 0
  %1004 = vperm.xlu0 %1003, %v1000
  %v1005 = vpop.permute.xlu0 %1004
  %v1007 = vlaneseq
  %v1008 = vshrl.u32 %v1007, 7
  %v1009 = vsub.s32 0, %v1008
  %v1010 = vrot.slane %v1001, %v1009
  %v1011 = vmul.f32 %v1005, %v1010
  %1013 = vrot.lane.b32.xlu0 %v989, 127
  %v1014 = vpop.permute.xlu0 %1013
  %v1016 = vmul.f32 %v893, %v1014
  %v1017 = vld [vmem:[%s2 + $0x88] sm:$0x1]
  %1019 = vset.pattern.permute.xlu0 0
  %1020 = vperm.xlu0 %1019, %v1016
  %v1021 = vpop.permute.xlu0 %1020
  %v1023 = vlaneseq
  %v1024 = vshrl.u32 %v1023, 7
  %v1025 = vsub.s32 0, %v1024
  %v1026 = vrot.slane %v1017, %v1025
  %v1027 = vmul.f32 %v1021, %v1026
  %v1028 = vadd.f32 %v1011, %v1027
  %1030 = vrot.lane.b32.xlu0 %v999, 126
  %v1031 = vpop.permute.xlu0 %1030
  %v1033 = vadd.f32 %v1028, %v1031
  %v1034 = vmin.f32 %v1033, 0.0
  %v1035 = vld [vmem:[%s2 + $0x84] sm:$0x1]
  %v1036 = vlaneseq
  %v1037 = vshrl.u32 %v1036, 7
  %v1038 = vsub.s32 0, %v1037
  %v1039 = vrot.slane %v1035, %v1038
  %1041 = vrot.lane.b32.xlu0 %v1039, 18
  %v1042 = vpop.permute.xlu0 %1041
  %v1044 = vadd.f32 %v970, %v1042
  %v1045 = vmin.f32 %v1044, 0.0
  %v1046 = vld [vmem:[%s2 + $0x48] sm:$0xff]
  %v1047 = vld [vmem:[%s2 + $0x50] sm:$0xff]
  %1049 = vrot.lane.b32.xlu0 %v1045, 110
  %v1050 = vpop.permute.xlu0 %1049
  %v1051 = vsel %vm724, %v1050, 0
  %1053 = vmatprep.subr.mxu0 0.0
  %1054 = vmatpush1.msra.mxu0 %v1046
  %1055 = vmatprep.subr.mxu0 0.0
  %1056 = vmatpush1.msra.mxu0 %v1047
  %1057 = vmatprep.subr.mxu0 0.0
  %1058 = vmatpush1.msra.mxu0 0.0
  %1059 = vmatprep.subr.mxu0 0.0
  %1060 = vmatpush1.msra.mxu0 0.0
  %1061 = vmatprep.subr.mxu0 0.0
  %1062 = vmatpush1.msra.mxu0 0.0
  %1063 = vmatprep.subr.mxu0 0.0
  %1064 = vmatpush1.msra.mxu0 0.0
  %1065 = vmatprep.subr.mxu0 0.0
  %1066 = vmatpush1.msra.mxu0 0.0
  %1067 = vmatprep.subr.mxu0 0.0
  %1068 = vmatpush1.msra.mxu0 0.0
  %1069 = vmatprep.subr.mxu0 0.0
  %1070 = vmatpush1.msra.mxu0 0.0
  %1071 = vmatprep.subr.mxu0 0.0
  %1072 = vmatpush1.msra.mxu0 0.0
  %1073 = vmatprep.subr.mxu0 0.0
  %1074 = vmatpush1.msra.mxu0 0.0
  %1075 = vmatprep.subr.mxu0 0.0
  %1076 = vmatpush1.msra.mxu0 0.0
  %1077 = vmatprep.subr.mxu0 0.0
  %1078 = vmatpush1.msra.mxu0 0.0
  %1079 = vmatprep.subr.mxu0 0.0
  %1080 = vmatpush1.msra.mxu0 0.0
  %1081 = vmatprep.subr.mxu0 0.0
  %1082 = vmatpush1.msra.mxu0 0.0
  %1083 = vmatprep.subr.mxu0 0.0
  %1084 = vmatpush1.msra.mxu0 0.0
  %1085 = vmatprep.subr.mxu0 0.0
  %1086 = vmatpush1.msra.mxu0 0.0
  %1087 = vmatprep.subr.mxu0 0.0
  %1088 = vmatpush1.msra.mxu0 0.0
  %1089 = vmatprep.subr.mxu0 0.0
  %1090 = vmatpush1.msra.mxu0 0.0
  %1091 = vmatprep.subr.mxu0 0.0
  %1092 = vmatpush1.msra.mxu0 0.0
  %1093 = vmatprep.subr.mxu0 0.0
  %1094 = vmatpush1.msra.mxu0 0.0
  %1095 = vmatprep.subr.mxu0 0.0
  %1096 = vmatpush1.msra.mxu0 0.0
  %1097 = vmatprep.subr.mxu0 0.0
  %1098 = vmatpush1.msra.mxu0 0.0
  %1099 = vmatprep.subr.mxu0 0.0
  %1100 = vmatpush1.msra.mxu0 0.0
  %1101 = vmatprep.subr.mxu0 0.0
  %1102 = vmatpush1.msra.mxu0 0.0
  %1103 = vmatprep.subr.mxu0 0.0
  %1104 = vmatpush1.msra.mxu0 0.0
  %1105 = vmatprep.subr.mxu0 0.0
  %1106 = vmatpush1.msra.mxu0 0.0
  %1107 = vmatprep.subr.mxu0 0.0
  %1108 = vmatpush1.msra.mxu0 0.0
  %1109 = vmatprep.subr.mxu0 0.0
  %1110 = vmatpush1.msra.mxu0 0.0
  %1111 = vmatprep.subr.mxu0 0.0
  %1112 = vmatpush1.msra.mxu0 0.0
  %1113 = vmatprep.subr.mxu0 0.0
  %1114 = vmatpush1.msra.mxu0 0.0
  %1115 = vmatprep.subr.mxu0 0.0
  %1116 = vmatpush1.msra.mxu0 0.0
  %1117 = vmatprep.mubr.f32.mxu0 0.0
  %1118 = vmatmul.mubr.f32.gmra.mrb[0].mxu0 %v1051
  %v1119 = vpop.f32.mrb[0].mxu0
  %v1120 = vadd.f32 0.0, %v1119
  %v1121 = vpop.f32.mrb[0].mxu0
  %1122 = vdwg.mxu0
  %v1123 = vld [vmem:[%s2 + $0x8b] sm:$0x1]
  %v1124 = vlaneseq
  %v1125 = vshrl.u32 %v1124, 7
  %v1126 = vsub.s32 0, %v1125
  %v1127 = vrot.slane %v1123, %v1126
  %v1128 = vadd.f32 %v1120, %v1127
  %v1129 = vmax.f32 %v1128, 0.0
  %v1130 = vld [vmem:[%s2 + $0x8c] sm:$0x1]
  %v1131 = vlaneseq
  %v1132 = vshrl.u32 %v1131, 7
  %v1133 = vsub.s32 0, %v1132
  %v1134 = vrot.slane %v1130, %v1133
  %1136 = vrot.lane.b32.xlu0 %v1134, 16
  %v1137 = vpop.permute.xlu0 %1136
  %v1139 = vadd.f32 %v1120, %v1137
  %v1140 = vld [vmem:[%s2 + $0x8d] sm:$0x1]
  %v1141 = vlaneseq
  %v1142 = vshrl.u32 %v1141, 7
  %v1143 = vsub.s32 0, %v1142
  %v1144 = vrot.slane %v1140, %v1143
  %1146 = vrot.lane.b32.xlu0 %v1144, 17
  %v1147 = vpop.permute.xlu0 %1146
  %v1149 = vadd.f32 %v1120, %v1147
  %v1150 = vmul.f32 %v1034, %v1129
  %v1151 = vld [vmem:[%s2 + $0x58] sm:$0xff]
  %v1152 = vld [vmem:[%s2 + $0x60] sm:$0xff]
  %1154 = vrot.lane.b32.xlu0 %v1139, 112
  %v1155 = vpop.permute.xlu0 %1154
  %v1157 = vmul.f32 %v893, %v1155
  %v1158 = vld [vmem:[%s2 + $0x8e] sm:$0x1]
  %1160 = vset.pattern.permute.xlu0 0
  %1161 = vperm.xlu0 %1160, %v1157
  %v1162 = vpop.permute.xlu0 %1161
  %v1164 = vlaneseq
  %v1165 = vshrl.u32 %v1164, 7
  %v1166 = vsub.s32 0, %v1165
  %v1167 = vrot.slane %v1158, %v1166
  %v1168 = vmul.f32 %v1162, %v1167
  %v1170 = vsel %vm724, %v1150, 0
  %1172 = vmatprep.subr.mxu0 0.0
  %1173 = vmatpush1.msra.mxu0 %v1151
  %1174 = vmatprep.subr.mxu0 0.0
  %1175 = vmatpush1.msra.mxu0 %v1152
  %1176 = vmatprep.subr.mxu0 0.0
  %1177 = vmatpush1.msra.mxu0 0.0
  %1178 = vmatprep.subr.mxu0 0.0
  %1179 = vmatpush1.msra.mxu0 0.0
  %1180 = vmatprep.subr.mxu0 0.0
  %1181 = vmatpush1.msra.mxu0 0.0
  %1182 = vmatprep.subr.mxu0 0.0
  %1183 = vmatpush1.msra.mxu0 0.0
  %1184 = vmatprep.subr.mxu0 0.0
  %1185 = vmatpush1.msra.mxu0 0.0
  %1186 = vmatprep.subr.mxu0 0.0
  %1187 = vmatpush1.msra.mxu0 0.0
  %1188 = vmatprep.subr.mxu0 0.0
  %1189 = vmatpush1.msra.mxu0 0.0
  %1190 = vmatprep.subr.mxu0 0.0
  %1191 = vmatpush1.msra.mxu0 0.0
  %1192 = vmatprep.subr.mxu0 0.0
  %1193 = vmatpush1.msra.mxu0 0.0
  %1194 = vmatprep.subr.mxu0 0.0
  %1195 = vmatpush1.msra.mxu0 0.0
  %1196 = vmatprep.subr.mxu0 0.0
  %1197 = vmatpush1.msra.mxu0 0.0
  %1198 = vmatprep.subr.mxu0 0.0
  %1199 = vmatpush1.msra.mxu0 0.0
  %1200 = vmatprep.subr.mxu0 0.0
  %1201 = vmatpush1.msra.mxu0 0.0
  %1202 = vmatprep.subr.mxu0 0.0
  %1203 = vmatpush1.msra.mxu0 0.0
  %1204 = vmatprep.subr.mxu0 0.0
  %1205 = vmatpush1.msra.mxu0 0.0
  %1206 = vmatprep.subr.mxu0 0.0
  %1207 = vmatpush1.msra.mxu0 0.0
  %1208 = vmatprep.subr.mxu0 0.0
  %1209 = vmatpush1.msra.mxu0 0.0
  %1210 = vmatprep.subr.mxu0 0.0
  %1211 = vmatpush1.msra.mxu0 0.0
  %1212 = vmatprep.subr.mxu0 0.0
  %1213 = vmatpush1.msra.mxu0 0.0
  %1214 = vmatprep.subr.mxu0 0.0
  %1215 = vmatpush1.msra.mxu0 0.0
  %1216 = vmatprep.subr.mxu0 0.0
  %1217 = vmatpush1.msra.mxu0 0.0
  %1218 = vmatprep.subr.mxu0 0.0
  %1219 = vmatpush1.msra.mxu0 0.0
  %1220 = vmatprep.subr.mxu0 0.0
  %1221 = vmatpush1.msra.mxu0 0.0
  %1222 = vmatprep.subr.mxu0 0.0
  %1223 = vmatpush1.msra.mxu0 0.0
  %1224 = vmatprep.subr.mxu0 0.0
  %1225 = vmatpush1.msra.mxu0 0.0
  %1226 = vmatprep.subr.mxu0 0.0
  %1227 = vmatpush1.msra.mxu0 0.0
  %1228 = vmatprep.subr.mxu0 0.0
  %1229 = vmatpush1.msra.mxu0 0.0
  %1230 = vmatprep.subr.mxu0 0.0
  %1231 = vmatpush1.msra.mxu0 0.0
  %1232 = vmatprep.subr.mxu0 0.0
  %1233 = vmatpush1.msra.mxu0 0.0
  %1234 = vmatprep.subr.mxu0 0.0
  %1235 = vmatpush1.msra.mxu0 0.0
  %1236 = vmatprep.mubr.f32.mxu0 0.0
  %1237 = vmatmul.mubr.f32.gmra.mrb[0].mxu0 %v1170
  %v1238 = vpop.f32.mrb[0].mxu0
  %v1239 = vadd.f32 %v1168, %v1238
  %v1240 = vpop.f32.mrb[0].mxu0
  %1241 = vdwg.mxu0
  %1243 = vrot.lane.b32.xlu0 %v1149, 111
  %v1244 = vpop.permute.xlu0 %1243
  %v1246 = vadd.f32 %v1239, %v1244
  %v1247 = vmin.f32 %v1246, 0.0
  %v1248 = vld [vmem:[%s2 + $0x8a] sm:$0x1]
  %v1249 = vlaneseq
  %v1250 = vshrl.u32 %v1249, 7
  %v1251 = vsub.s32 0, %v1250
  %v1252 = vrot.slane %v1248, %v1251
  %1254 = vrot.lane.b32.xlu0 %v1252, 33
  %v1255 = vpop.permute.xlu0 %1254
  %v1257 = vadd.f32 %v1120, %v1255
  %v1258 = vmin.f32 %v1257, 0.0
  %v1259 = vld [vmem:[%s2 + $0x68] sm:$0xff]
  %v1260 = vld [vmem:[%s2 + $0x70] sm:$0xff]
  %1262 = vrot.lane.b32.xlu0 %v1258, 95
  %v1263 = vpop.permute.xlu0 %1262
  %v1264 = vsel %vm724, %v1263, 0
  %1266 = vmatprep.subr.mxu0 0.0
  %1267 = vmatpush1.msra.mxu0 %v1259
  %1268 = vmatprep.subr.mxu0 0.0
  %1269 = vmatpush1.msra.mxu0 %v1260
  %1270 = vmatprep.subr.mxu0 0.0
  %1271 = vmatpush1.msra.mxu0 0.0
  %1272 = vmatprep.subr.mxu0 0.0
  %1273 = vmatpush1.msra.mxu0 0.0
  %1274 = vmatprep.subr.mxu0 0.0
  %1275 = vmatpush1.msra.mxu0 0.0
  %1276 = vmatprep.subr.mxu0 0.0
  %1277 = vmatpush1.msra.mxu0 0.0
  %1278 = vmatprep.subr.mxu0 0.0
  %1279 = vmatpush1.msra.mxu0 0.0
  %1280 = vmatprep.subr.mxu0 0.0
  %1281 = vmatpush1.msra.mxu0 0.0
  %1282 = vmatprep.subr.mxu0 0.0
  %1283 = vmatpush1.msra.mxu0 0.0
  %1284 = vmatprep.subr.mxu0 0.0
  %1285 = vmatpush1.msra.mxu0 0.0
  %1286 = vmatprep.subr.mxu0 0.0
  %1287 = vmatpush1.msra.mxu0 0.0
  %1288 = vmatprep.subr.mxu0 0.0
  %1289 = vmatpush1.msra.mxu0 0.0
  %1290 = vmatprep.subr.mxu0 0.0
  %1291 = vmatpush1.msra.mxu0 0.0
  %1292 = vmatprep.subr.mxu0 0.0
  %1293 = vmatpush1.msra.mxu0 0.0
  %1294 = vmatprep.subr.mxu0 0.0
  %1295 = vmatpush1.msra.mxu0 0.0
  %1296 = vmatprep.subr.mxu0 0.0
  %1297 = vmatpush1.msra.mxu0 0.0
  %1298 = vmatprep.subr.mxu0 0.0
  %1299 = vmatpush1.msra.mxu0 0.0
  %1300 = vmatprep.subr.mxu0 0.0
  %1301 = vmatpush1.msra.mxu0 0.0
  %1302 = vmatprep.subr.mxu0 0.0
  %1303 = vmatpush1.msra.mxu0 0.0
  %1304 = vmatprep.subr.mxu0 0.0
  %1305 = vmatpush1.msra.mxu0 0.0
  %1306 = vmatprep.subr.mxu0 0.0
  %1307 = vmatpush1.msra.mxu0 0.0
  %1308 = vmatprep.subr.mxu0 0.0
  %1309 = vmatpush1.msra.mxu0 0.0
  %1310 = vmatprep.subr.mxu0 0.0
  %1311 = vmatpush1.msra.mxu0 0.0
  %1312 = vmatprep.subr.mxu0 0.0
  %1313 = vmatpush1.msra.mxu0 0.0
  %1314 = vmatprep.subr.mxu0 0.0
  %1315 = vmatpush1.msra.mxu0 0.0
  %1316 = vmatprep.subr.mxu0 0.0
  %1317 = vmatpush1.msra.mxu0 0.0
  %1318 = vmatprep.subr.mxu0 0.0
  %1319 = vmatpush1.msra.mxu0 0.0
  %1320 = vmatprep.subr.mxu0 0.0
  %1321 = vmatpush1.msra.mxu0 0.0
  %1322 = vmatprep.subr.mxu0 0.0
  %1323 = vmatpush1.msra.mxu0 0.0
  %1324 = vmatprep.subr.mxu0 0.0
  %1325 = vmatpush1.msra.mxu0 0.0
  %1326 = vmatprep.subr.mxu0 0.0
  %1327 = vmatpush1.msra.mxu0 0.0
  %1328 = vmatprep.subr.mxu0 0.0
  %1329 = vmatpush1.msra.mxu0 0.0
  %1330 = vmatprep.mubr.f32.mxu0 0.0
  %1331 = vmatmul.mubr.f32.gmra.mrb[0].mxu0 %v1264
  %v1332 = vpop.f32.mrb[0].mxu0
  %v1333 = vadd.f32 0.0, %v1332
  %v1334 = vpop.f32.mrb[0].mxu0
  %1335 = vdwg.mxu0
  %v1336 = vld [vmem:[%s2 + $0x8f] sm:$0x1]
  %v1337 = vlaneseq
  %v1338 = vshrl.u32 %v1337, 7
  %v1339 = vsub.s32 0, %v1338
  %v1340 = vrot.slane %v1336, %v1339
  %v1341 = vadd.f32 %v1333, %v1340
  %v1342 = vmax.f32 %v1341, 0.0
  %v1343 = vld [vmem:[%s2 + $0x90] sm:$0x1]
  %v1344 = vlaneseq
  %v1345 = vshrl.u32 %v1344, 7
  %v1346 = vsub.s32 0, %v1345
  %v1347 = vrot.slane %v1343, %v1346
  %1349 = vrot.lane.b32.xlu0 %v1347, 16
  %v1350 = vpop.permute.xlu0 %1349
  %v1352 = vadd.f32 %v1333, %v1350
  %v1353 = vld [vmem:[%s2 + $0x91] sm:$0x1]
  %v1354 = vlaneseq
  %v1355 = vshrl.u32 %v1354, 7
  %v1356 = vsub.s32 0, %v1355
  %v1357 = vrot.slane %v1353, %v1356
  %1359 = vrot.lane.b32.xlu0 %v1357, 17
  %v1360 = vpop.permute.xlu0 %1359
  %v1362 = vadd.f32 %v1333, %v1360
  %v1363 = vmul.f32 %v1247, %v1342
  %v1364 = vld [vmem:[%s2 + $0x93] sm:$0x1]
  %v1365 = vlaneseq
  %v1366 = vshrl.u32 %v1365, 7
  %v1367 = vsub.s32 0, %v1366
  %v1368 = vrot.slane %v1364, %v1367
  %v1369 = vmul.f32 %v1363, %v1368
  %v1370 = vsel %vm724, %v1369, 0.0
  %1371 = vadd.xlane.f32.xlu0 %v1370
  %v1372 = vpop.xlane.xlu0 %1371
  %1374 = vrot.lane.b32.xlu0 %v1352, 112
  %v1375 = vpop.permute.xlu0 %1374
  %v1377 = vmul.f32 %v893, %v1375
  %v1378 = vld [vmem:[%s2 + $0x92] sm:$0x1]
  %v1379 = vlaneseq
  %v1380 = vshrl.u32 %v1379, 7
  %v1381 = vsub.s32 0, %v1380
  %v1382 = vrot.slane %v1378, %v1381
  %v1383 = vmul.f32 %v1377, %v1382
  %v1384 = vadd.f32 %v1372, %v1383
  %1386 = vrot.lane.b32.xlu0 %v1362, 111
  %v1387 = vpop.permute.xlu0 %1386
  %v1389 = vadd.f32 %v1384, %v1387
  %vm1390 = vcmask 7168
  %1391 = vst.msk [vmem:[%s3] sm:$0xff] %vm1390, %v1389
  // Predicated region
  $region14: #{tpu_custom_call.1} parent=0 // pred_check
    _
  $region15: #{tpu_custom_call.1} parent=0 // pred_check_branch
    %1393 = sbr.rel (0) target = $region17
  $region16: #{tpu_custom_call.1} parent=0 // pred_region
    _
  $region17: #{tpu_custom_call.1} parent=0 // pred_fallthru
    _
  // Predicated region
  $region18: #{tpu_custom_call.1} parent=0 // pred_check
    _
  $region19: #{tpu_custom_call.1} parent=0 // pred_check_branch
    %1395 = sbr.rel (0) target = $region21
  $region20: #{tpu_custom_call.1} parent=0 // pred_region
    _
  $region21: #{tpu_custom_call.1} parent=0 // pred_fallthru
    _

</llo_original>
